<compile_context>
chip_gen: v7x
topology: tpu7x:2x2x1
jax: 0.10.0
libtpu: 0.0.40
codegen_flags: <defaults>
</compile_context>

<pallas_src>
import jax
import jax.numpy as jnp
from jax import lax
from jax.experimental import pallas as pl
from jax.experimental.pallas import tpu as pltpu


OUT_LANES = 128   # packed, lane-dense output slab width
PRED_REP = 8      # node_pred replicated over 8 lanes (keeps the final matmul >= 8 wide)


# ----------------------------------------------------------------------------- helpers
def _full_spec(shape):
    nd = len(shape)
    return pl.BlockSpec(tuple(shape), lambda *_: (0,) * nd)


# ----------------------------------------------------------------------------- fused forward kernel
def make_fused_kernel(num_layers, num_heads, embed_dim, seq_len):
    E, S = embed_dim, seq_len
    hd = E // num_heads
    scale = 1.0 / float(hd) ** 0.5

    def kernel(*refs):
        it = iter(refs)
        a_ref = next(it)          # (N, N)   pre-normalized adjacency  D^-1/2 A^T D^-1/2
        x_ref = next(it)          # (N, IN_F)
        seq_ref = next(it)        # (S, E)
        gcn_refs = [next(it) for _ in range(3 * num_layers)]   # per layer: wmsg_t, wskip_t, bias
        (wq_ref, bq_ref, wk_ref, bk_ref, wv_ref, bv_ref,
         wo_ref, bo_ref, lnw_ref, lnb_ref) = (next(it) for _ in range(10))
        w1_ref = next(it)         # (E, HID)
        w2_ref = next(it)         # (HID, PRED_REP)   weight2 tiled along lanes
        p_emb_ref = next(it)      # (E, OUT_LANES)    0/1 placement matrices
        p_attn_ref = next(it)     # (S, OUT_LANES)
        p_pred_ref = next(it)     # (PRED_REP, OUT_LANES)
        out_ref = next(it)        # (N, OUT_LANES)

        a = a_ref[...]
        x = x_ref[...]
        L = x.shape[0]

        # ---- GCN stack (x stays resident in VMEM/vregs across layers) ----
        for l in range(num_layers):
            wmsg = gcn_refs[3 * l][...]
            wskip = gcn_refs[3 * l + 1][...]
            bias = gcn_refs[3 * l + 2][...]           # bmsg + bskip (pre-summed on host)
            rst = jnp.dot(a, x, preferred_element_type=jnp.float32)
            x = (jnp.dot(rst, wmsg, preferred_element_type=jnp.float32)
                 + jnp.dot(x, wskip, preferred_element_type=jnp.float32)
                 + bias)

        # ---- CrossAttention (num_cross_att == 1): MHA(q=x, k=v=seq) + residual LayerNorm ----
        # TODO(synk): num_cross_att > 1 branch (second attention + learned blend) not exercised.
        seq = seq_ref[...]
        q = jnp.dot(x, wq_ref[...], preferred_element_type=jnp.float32) + bq_ref[...]
        k = jnp.dot(seq, wk_ref[...], preferred_element_type=jnp.float32) + bk_ref[...]
        v = jnp.dot(seq, wv_ref[...], preferred_element_type=jnp.float32) + bv_ref[...]

        lane = lax.broadcasted_iota(jnp.int32, (1, E), 1)
        w_acc = jnp.zeros((L, S), jnp.float32)
        o = jnp.zeros((L, E), jnp.float32)
        for h in range(num_heads):
            lo, hi = h * hd, (h + 1) * hd
            mask = ((lane >= lo) & (lane < hi)).astype(jnp.float32)     # (1, E) head-lane mask
            s = lax.dot_general(q * mask, k, (((1,), (1,)), ((), ())),
                                preferred_element_type=jnp.float32) * scale
            s = s - jnp.max(s, axis=-1, keepdims=True)
            p = jnp.exp(s)
            p = p * pl.reciprocal(jnp.sum(p, axis=-1, keepdims=True), approx=True)
            w_acc = w_acc + p
            # masked V: this head's contribution lands exactly in its lanes of the concat output
            o = o + jnp.dot(p, v * mask, preferred_element_type=jnp.float32)

        attn_out = jnp.dot(o, wo_ref[...], preferred_element_type=jnp.float32) + bo_ref[...]
        attn_w = w_acc * (1.0 / num_heads)            # average_attn_weights=True

        y = attn_out + x                              # dropout == identity (inference)
        mean = jnp.mean(y, axis=-1, keepdims=True)
        var = jnp.mean((y - mean) ** 2, axis=-1, keepdims=True)
        xln = ((y - mean) * lax.rsqrt(var + 1e-5)) * lnw_ref[...] + lnb_ref[...]

        # ---- prediction head ----
        nrm = jnp.sqrt(jnp.sum(xln * xln, axis=-1, keepdims=True))
        xn = xln * pl.reciprocal(jnp.maximum(nrm, 1e-12), approx=True)  # F.normalize(p=2, dim=-1)
        h1 = jnp.maximum(jnp.dot(xn, w1_ref[...], preferred_element_type=jnp.float32), 0.0)
        # TODO(synk): F.dropout(pred, p) is stochastic (training=True default); identity here.
        node_pred = jax.nn.sigmoid(
            jnp.dot(h1, w2_ref[...], preferred_element_type=jnp.float32))  # (L, PRED_REP)

        # ---- pack everything into one lane-dense (N, 128) slab via 0/1 placement matmuls ----
        slab = (jnp.dot(xn, p_emb_ref[...], preferred_element_type=jnp.float32)
                + jnp.dot(attn_w, p_attn_ref[...], preferred_element_type=jnp.float32)
                + jnp.dot(node_pred, p_pred_ref[...], preferred_element_type=jnp.float32))
        out_ref[...] = slab

    return kernel


# ----------------------------------------------------------------------------- full model forward
def model_forward(adj, x, gcn_params, mha_params, head_params, seq_emb,
                  edge_label_index, num_heads):
    N = adj.shape[0]
    S, E = seq_emb.shape
    num_layers = len(gcn_params)

    # normalized adjacency (once): A_norm[d, s] = dinv[d] * adj[s, d] * dinv[s]
    deg = jnp.sum(adj, axis=1)
    dinv = jnp.where(deg > 0, lax.rsqrt(deg), 0.0).astype(jnp.float32)
    a_norm = (dinv[:, None] * adj.T) * dinv[None, :]

    gcn_flat = []
    for (wmsg_t, bmsg, wskip_t, bskip) in gcn_params:
        gcn_flat += [wmsg_t, wskip_t, bmsg + bskip]

    w1_t, w2_t = head_params
    w2_rep = jnp.tile(w2_t, (1, PRED_REP))

    # 0/1 placement matrices for the packed output slab
    p_emb = jnp.eye(E, OUT_LANES, k=0, dtype=jnp.float32)
    p_attn = jnp.eye(S, OUT_LANES, k=E, dtype=jnp.float32)
    p_pred = jnp.eye(PRED_REP, OUT_LANES, k=E + S, dtype=jnp.float32)

    inputs = ([a_norm, x, seq_emb] + gcn_flat + list(mha_params)
              + [w1_t, w2_rep, p_emb, p_attn, p_pred])

    kernel = make_fused_kernel(num_layers, num_heads, E, S)
    out = pl.pallas_call(
        kernel,
        grid=(1,),
        in_specs=[_full_spec(tuple(a.shape)) for a in inputs],
        out_specs=_full_spec((N, OUT_LANES)),
        out_shape=jax.ShapeDtypeStruct((N, OUT_LANES), jnp.float32),
        compiler_params=pltpu.CompilerParams(
            dimension_semantics=("arbitrary",),
            vmem_limit_bytes=64 * 1024 * 1024),
    )(*inputs)

    x_norm = out[:, :E]
    attn_w = out[:, E:E + S]
    node_pred = out[:, E + S]                         # all PRED_REP columns are identical
    # edge decoding ('dot'): node_pred feature dim is 1, so the dot is a scalar product
    pred = node_pred[edge_label_index[0]] * node_pred[edge_label_index[1]]
    return pred, x_norm, attn_w


# ----------------------------------------------------------------------------- pure-JAX reference
def ref_forward(adj, x, gcn_params, mha_full_params, head_params, seq_emb,
                edge_label_index, num_heads):
    N = adj.shape[0]
    deg = jnp.sum(adj, axis=1)
    dinv = jnp.where(deg > 0, lax.rsqrt(deg), 0.0).reshape(N, 1)
    for (wmsg_t, bmsg, wskip_t, bskip) in gcn_params:
        feat_src = x * dinv
        rst = (adj.T @ feat_src) * dinv
        x = rst @ wmsg_t + bmsg + x @ wskip_t + bskip

    wq_t, bq, wk_t, bk, wv_t, bv, wo_t, bo, lnw, lnb = mha_full_params
    L, E = x.shape
    S = seq_emb.shape[0]
    hd = E // num_heads
    Q = (x @ wq_t + bq).reshape(L, num_heads, hd)
    K = (seq_emb @ wk_t + bk).reshape(S, num_heads, hd)
    V = (seq_emb @ wv_t + bv).reshape(S, num_heads, hd)
    s = jnp.einsum('lhd,shd->hls', Q, K) / jnp.sqrt(hd)
    p = jax.nn.softmax(s, axis=-1)
    o = jnp.einsum('hls,shd->lhd', p, V).reshape(L, E)
    attn_out = o @ wo_t + bo
    y = attn_out + x
    mean = jnp.mean(y, axis=-1, keepdims=True)
    var = jnp.mean((y - mean) ** 2, axis=-1, keepdims=True)
    x = ((y - mean) * lax.rsqrt(var + 1e-5)) * lnw + lnb

    xn = x / jnp.maximum(jnp.sqrt(jnp.sum(x * x, axis=-1, keepdims=True)), 1e-12)
    w1_t, w2_t = head_params
    h = jnp.maximum(xn @ w1_t, 0.0)
    node_pred = jax.nn.sigmoid(h @ w2_t)
    pred = jnp.sum(node_pred[edge_label_index[0]] * node_pred[edge_label_index[1]], axis=-1)
    return pred, xn


# ----------------------------------------------------------------------------- main
if __name__ == "__main__":
    N, S = 16, 8                 # nodes, sequence length
    IN_F, OUT_F, HID = 32, 32, 64
    NUM_HEADS = 4
    NUM_LAYERS = 2
    N_LBL = 10                   # number of labeled edges to decode
    EMB = OUT_F                  # embed_dim must equal GCN output dim

    key = jax.random.PRNGKey(0)
    ks = jax.random.split(key, 32)

    x = jax.random.normal(ks[0], (N, IN_F), jnp.float32)
    seq_emb = jax.random.normal(ks[1], (S, EMB), jnp.float32)
    adj = (jax.random.uniform(ks[2], (N, N)) < 0.3).astype(jnp.float32)
    adj = jnp.maximum(adj, jnp.eye(N, dtype=jnp.float32))          # self loops
    edge_label_index = jax.random.randint(ks[3], (2, N_LBL), 0, N)

    # --- GCN params (affine skip connection), weights stored transposed (din, dout) ---
    gcn_params = []
    for i in range(NUM_LAYERS):
        din = IN_F if i == 0 else OUT_F
        kk = jax.random.split(ks[4 + i], 2)
        wmsg_t = 0.2 * jax.random.normal(kk[0], (din, OUT_F), jnp.float32)
        wskip_t = 0.2 * jax.random.normal(kk[1], (din, OUT_F), jnp.float32)
        gcn_params.append((wmsg_t, jnp.zeros((1, OUT_F), jnp.float32),
                           wskip_t, jnp.zeros((1, OUT_F), jnp.float32)))

    # --- MultiheadAttention params (full width, transposed to (in, out)) ---
    wq_t = 0.2 * jax.random.normal(ks[8], (EMB, EMB), jnp.float32)
    wk_t = 0.2 * jax.random.normal(ks[9], (EMB, EMB), jnp.float32)
    wv_t = 0.2 * jax.random.normal(ks[10], (EMB, EMB), jnp.float32)
    wo_t = 0.2 * jax.random.normal(ks[11], (EMB, EMB), jnp.float32)
    bq = 0.05 * jax.random.normal(ks[12], (EMB,), jnp.float32)
    bk = 0.05 * jax.random.normal(ks[13], (EMB,), jnp.float32)
    bv = 0.05 * jax.random.normal(ks[14], (EMB,), jnp.float32)
    bo = 0.05 * jax.random.normal(ks[15], (EMB,), jnp.float32)
    lnw = jnp.ones((1, EMB), jnp.float32)      # LayerNorm default init
    lnb = jnp.zeros((1, EMB), jnp.float32)

    mha_params = [wq_t, bq.reshape(1, EMB), wk_t, bk.reshape(1, EMB),
                  wv_t, bv.reshape(1, EMB), wo_t, bo.reshape(1, EMB), lnw, lnb]
    mha_full_params = [wq_t, bq, wk_t, bk, wv_t, bv, wo_t, bo, lnw, lnb]

    # --- head params: weight1 (hidden, out_feat), weight2 (1, hidden); transposed ---
    w1_t = 0.2 * jax.random.normal(ks[16], (OUT_F, HID), jnp.float32)
    w2_t = 0.2 * jax.random.normal(ks[17], (HID, 1), jnp.float32)
    head_params = (w1_t, w2_t)

    pred, node_emb, attn_w = model_forward(adj, x, gcn_params, mha_params,
                                           head_params, seq_emb,
                                           edge_label_index, NUM_HEADS)
    jax.block_until_ready((pred, node_emb, attn_w))

    # sanity check against pure-JAX reference
    pred_ref, node_emb_ref = ref_forward(adj, x, gcn_params, mha_full_params,
                                         head_params, seq_emb,
                                         edge_label_index, NUM_HEADS)
    assert jnp.allclose(pred, pred_ref, atol=5e-2, rtol=5e-2)
    assert jnp.allclose(node_emb, node_emb_ref, atol=5e-2, rtol=5e-2)

    print("KERNEL_OK")
</pallas_src>

<mosaic_0001>
module attributes {stable_mosaic.version = 11 : i64} {
  func.func @kernel(%arg0: i32, %arg1: memref<16x16xf32, #tpu.memory_space<vmem>>, %arg2: memref<16x32xf32, #tpu.memory_space<vmem>>, %arg3: memref<8x32xf32, #tpu.memory_space<vmem>>, %arg4: memref<32x32xf32, #tpu.memory_space<vmem>>, %arg5: memref<32x32xf32, #tpu.memory_space<vmem>>, %arg6: memref<1x32xf32, #tpu.memory_space<vmem>>, %arg7: memref<32x32xf32, #tpu.memory_space<vmem>>, %arg8: memref<32x32xf32, #tpu.memory_space<vmem>>, %arg9: memref<1x32xf32, #tpu.memory_space<vmem>>, %arg10: memref<32x32xf32, #tpu.memory_space<vmem>>, %arg11: memref<1x32xf32, #tpu.memory_space<vmem>>, %arg12: memref<32x32xf32, #tpu.memory_space<vmem>>, %arg13: memref<1x32xf32, #tpu.memory_space<vmem>>, %arg14: memref<32x32xf32, #tpu.memory_space<vmem>>, %arg15: memref<1x32xf32, #tpu.memory_space<vmem>>, %arg16: memref<32x32xf32, #tpu.memory_space<vmem>>, %arg17: memref<1x32xf32, #tpu.memory_space<vmem>>, %arg18: memref<1x32xf32, #tpu.memory_space<vmem>>, %arg19: memref<1x32xf32, #tpu.memory_space<vmem>>, %arg20: memref<32x64xf32, #tpu.memory_space<vmem>>, %arg21: memref<64x8xf32, #tpu.memory_space<vmem>>, %arg22: memref<32x128xf32, #tpu.memory_space<vmem>>, %arg23: memref<8x128xf32, #tpu.memory_space<vmem>>, %arg24: memref<8x128xf32, #tpu.memory_space<vmem>>, %arg25: memref<16x128xf32, #tpu.memory_space<vmem>>) attributes {dimension_semantics = [#tpu.dimension_semantics<arbitrary>], iteration_bounds = array<i64: 1>, scalar_prefetch = 0 : i64, scratch_operands = 0 : i64, tpu.core_type = #tpu.core_type<tc>, window_params = [{pipeline_mode = #tpu.pipeline_mode<synchronous>, transform_indices = @transform_0, window_bounds = array<i64: 16, 16>}, {pipeline_mode = #tpu.pipeline_mode<synchronous>, transform_indices = @transform_1, window_bounds = array<i64: 16, 32>}, {pipeline_mode = #tpu.pipeline_mode<synchronous>, transform_indices = @transform_2, window_bounds = array<i64: 8, 32>}, {pipeline_mode = #tpu.pipeline_mode<synchronous>, transform_indices = @transform_3, window_bounds = array<i64: 32, 32>}, {pipeline_mode = #tpu.pipeline_mode<synchronous>, transform_indices = @transform_4, window_bounds = array<i64: 32, 32>}, {pipeline_mode = #tpu.pipeline_mode<synchronous>, transform_indices = @transform_5, window_bounds = array<i64: 1, 32>}, {pipeline_mode = #tpu.pipeline_mode<synchronous>, transform_indices = @transform_6, window_bounds = array<i64: 32, 32>}, {pipeline_mode = #tpu.pipeline_mode<synchronous>, transform_indices = @transform_7, window_bounds = array<i64: 32, 32>}, {pipeline_mode = #tpu.pipeline_mode<synchronous>, transform_indices = @transform_8, window_bounds = array<i64: 1, 32>}, {pipeline_mode = #tpu.pipeline_mode<synchronous>, transform_indices = @transform_9, window_bounds = array<i64: 32, 32>}, {pipeline_mode = #tpu.pipeline_mode<synchronous>, transform_indices = @transform_10, window_bounds = array<i64: 1, 32>}, {pipeline_mode = #tpu.pipeline_mode<synchronous>, transform_indices = @transform_11, window_bounds = array<i64: 32, 32>}, {pipeline_mode = #tpu.pipeline_mode<synchronous>, transform_indices = @transform_12, window_bounds = array<i64: 1, 32>}, {pipeline_mode = #tpu.pipeline_mode<synchronous>, transform_indices = @transform_13, window_bounds = array<i64: 32, 32>}, {pipeline_mode = #tpu.pipeline_mode<synchronous>, transform_indices = @transform_14, window_bounds = array<i64: 1, 32>}, {pipeline_mode = #tpu.pipeline_mode<synchronous>, transform_indices = @transform_15, window_bounds = array<i64: 32, 32>}, {pipeline_mode = #tpu.pipeline_mode<synchronous>, transform_indices = @transform_16, window_bounds = array<i64: 1, 32>}, {pipeline_mode = #tpu.pipeline_mode<synchronous>, transform_indices = @transform_17, window_bounds = array<i64: 1, 32>}, {pipeline_mode = #tpu.pipeline_mode<synchronous>, transform_indices = @transform_18, window_bounds = array<i64: 1, 32>}, {pipeline_mode = #tpu.pipeline_mode<synchronous>, transform_indices = @transform_19, window_bounds = array<i64: 32, 64>}, {pipeline_mode = #tpu.pipeline_mode<synchronous>, transform_indices = @transform_20, window_bounds = array<i64: 64, 8>}, {pipeline_mode = #tpu.pipeline_mode<synchronous>, transform_indices = @transform_21, window_bounds = array<i64: 32, 128>}, {pipeline_mode = #tpu.pipeline_mode<synchronous>, transform_indices = @transform_22, window_bounds = array<i64: 8, 128>}, {pipeline_mode = #tpu.pipeline_mode<synchronous>, transform_indices = @transform_23, window_bounds = array<i64: 8, 128>}, {pipeline_mode = #tpu.pipeline_mode<synchronous>, transform_indices = @transform_24, window_bounds = array<i64: 16, 128>}]} {
    %c0 = arith.constant 0 : index
    %c0_0 = arith.constant 0 : index
    %0 = vector.load %arg1[%c0, %c0_0] : memref<16x16xf32, #tpu.memory_space<vmem>>, vector<16x16xf32>
    %c0_1 = arith.constant 0 : index
    %c0_2 = arith.constant 0 : index
    %1 = vector.load %arg2[%c0_1, %c0_2] : memref<16x32xf32, #tpu.memory_space<vmem>>, vector<16x32xf32>
    %c0_3 = arith.constant 0 : index
    %c0_4 = arith.constant 0 : index
    %2 = vector.load %arg4[%c0_3, %c0_4] : memref<32x32xf32, #tpu.memory_space<vmem>>, vector<32x32xf32>
    %c0_5 = arith.constant 0 : index
    %c0_6 = arith.constant 0 : index
    %3 = vector.load %arg5[%c0_5, %c0_6] : memref<32x32xf32, #tpu.memory_space<vmem>>, vector<32x32xf32>
    %c0_7 = arith.constant 0 : index
    %c0_8 = arith.constant 0 : index
    %4 = vector.load %arg6[%c0_7, %c0_8] : memref<1x32xf32, #tpu.memory_space<vmem>>, vector<1x32xf32>
    %cst = arith.constant dense<0.000000e+00> : vector<16x32xf32>
    %5 = tpu.matmul %0, %1, %cst {dimension_numbers = #tpu.dot_dimension_numbers<[1], [0], [0], [1], [0, 0, 1, 1], [], []>} : vector<16x16xf32>, vector<16x32xf32>, vector<16x32xf32> -> vector<16x32xf32>
    %cst_9 = arith.constant dense<0.000000e+00> : vector<16x32xf32>
    %6 = tpu.matmul %5, %2, %cst_9 {dimension_numbers = #tpu.dot_dimension_numbers<[1], [0], [0], [1], [0, 0, 1, 1], [], []>} : vector<16x32xf32>, vector<32x32xf32>, vector<16x32xf32> -> vector<16x32xf32>
    %cst_10 = arith.constant dense<0.000000e+00> : vector<16x32xf32>
    %7 = tpu.matmul %1, %3, %cst_10 {dimension_numbers = #tpu.dot_dimension_numbers<[1], [0], [0], [1], [0, 0, 1, 1], [], []>} : vector<16x32xf32>, vector<32x32xf32>, vector<16x32xf32> -> vector<16x32xf32>
    %8 = arith.addf %6, %7 : vector<16x32xf32>
    %9 = vector.broadcast %4 : vector<1x32xf32> to vector<16x32xf32>
    %10 = arith.addf %8, %9 : vector<16x32xf32>
    %c0_11 = arith.constant 0 : index
    %c0_12 = arith.constant 0 : index
    %11 = vector.load %arg7[%c0_11, %c0_12] : memref<32x32xf32, #tpu.memory_space<vmem>>, vector<32x32xf32>
    %c0_13 = arith.constant 0 : index
    %c0_14 = arith.constant 0 : index
    %12 = vector.load %arg8[%c0_13, %c0_14] : memref<32x32xf32, #tpu.memory_space<vmem>>, vector<32x32xf32>
    %c0_15 = arith.constant 0 : index
    %c0_16 = arith.constant 0 : index
    %13 = vector.load %arg9[%c0_15, %c0_16] : memref<1x32xf32, #tpu.memory_space<vmem>>, vector<1x32xf32>
    %cst_17 = arith.constant dense<0.000000e+00> : vector<16x32xf32>
    %14 = tpu.matmul %0, %10, %cst_17 {dimension_numbers = #tpu.dot_dimension_numbers<[1], [0], [0], [1], [0, 0, 1, 1], [], []>} : vector<16x16xf32>, vector<16x32xf32>, vector<16x32xf32> -> vector<16x32xf32>
    %cst_18 = arith.constant dense<0.000000e+00> : vector<16x32xf32>
    %15 = tpu.matmul %14, %11, %cst_18 {dimension_numbers = #tpu.dot_dimension_numbers<[1], [0], [0], [1], [0, 0, 1, 1], [], []>} : vector<16x32xf32>, vector<32x32xf32>, vector<16x32xf32> -> vector<16x32xf32>
    %cst_19 = arith.constant dense<0.000000e+00> : vector<16x32xf32>
    %16 = tpu.matmul %10, %12, %cst_19 {dimension_numbers = #tpu.dot_dimension_numbers<[1], [0], [0], [1], [0, 0, 1, 1], [], []>} : vector<16x32xf32>, vector<32x32xf32>, vector<16x32xf32> -> vector<16x32xf32>
    %17 = arith.addf %15, %16 : vector<16x32xf32>
    %18 = vector.broadcast %13 : vector<1x32xf32> to vector<16x32xf32>
    %19 = arith.addf %17, %18 : vector<16x32xf32>
    %c0_20 = arith.constant 0 : index
    %c0_21 = arith.constant 0 : index
    %20 = vector.load %arg3[%c0_20, %c0_21] : memref<8x32xf32, #tpu.memory_space<vmem>>, vector<8x32xf32>
    %c0_22 = arith.constant 0 : index
    %c0_23 = arith.constant 0 : index
    %21 = vector.load %arg10[%c0_22, %c0_23] : memref<32x32xf32, #tpu.memory_space<vmem>>, vector<32x32xf32>
    %cst_24 = arith.constant dense<0.000000e+00> : vector<16x32xf32>
    %22 = tpu.matmul %19, %21, %cst_24 {dimension_numbers = #tpu.dot_dimension_numbers<[1], [0], [0], [1], [0, 0, 1, 1], [], []>} : vector<16x32xf32>, vector<32x32xf32>, vector<16x32xf32> -> vector<16x32xf32>
    %c0_25 = arith.constant 0 : index
    %c0_26 = arith.constant 0 : index
    %23 = vector.load %arg11[%c0_25, %c0_26] : memref<1x32xf32, #tpu.memory_space<vmem>>, vector<1x32xf32>
    %24 = vector.broadcast %23 : vector<1x32xf32> to vector<16x32xf32>
    %25 = arith.addf %22, %24 : vector<16x32xf32>
    %c0_27 = arith.constant 0 : index
    %c0_28 = arith.constant 0 : index
    %26 = vector.load %arg12[%c0_27, %c0_28] : memref<32x32xf32, #tpu.memory_space<vmem>>, vector<32x32xf32>
    %cst_29 = arith.constant dense<0.000000e+00> : vector<8x32xf32>
    %27 = tpu.matmul %20, %26, %cst_29 {dimension_numbers = #tpu.dot_dimension_numbers<[1], [0], [0], [1], [0, 0, 1, 1], [], []>} : vector<8x32xf32>, vector<32x32xf32>, vector<8x32xf32> -> vector<8x32xf32>
    %c0_30 = arith.constant 0 : index
    %c0_31 = arith.constant 0 : index
    %28 = vector.load %arg13[%c0_30, %c0_31] : memref<1x32xf32, #tpu.memory_space<vmem>>, vector<1x32xf32>
    %29 = vector.broadcast %28 : vector<1x32xf32> to vector<8x32xf32>
    %30 = arith.addf %27, %29 : vector<8x32xf32>
    %c0_32 = arith.constant 0 : index
    %c0_33 = arith.constant 0 : index
    %31 = vector.load %arg14[%c0_32, %c0_33] : memref<32x32xf32, #tpu.memory_space<vmem>>, vector<32x32xf32>
    %cst_34 = arith.constant dense<0.000000e+00> : vector<8x32xf32>
    %32 = tpu.matmul %20, %31, %cst_34 {dimension_numbers = #tpu.dot_dimension_numbers<[1], [0], [0], [1], [0, 0, 1, 1], [], []>} : vector<8x32xf32>, vector<32x32xf32>, vector<8x32xf32> -> vector<8x32xf32>
    %c0_35 = arith.constant 0 : index
    %c0_36 = arith.constant 0 : index
    %33 = vector.load %arg15[%c0_35, %c0_36] : memref<1x32xf32, #tpu.memory_space<vmem>>, vector<1x32xf32>
    %34 = vector.broadcast %33 : vector<1x32xf32> to vector<8x32xf32>
    %35 = arith.addf %32, %34 : vector<8x32xf32>
    %36 = tpu.iota {dimensions = array<i32: 1>} : vector<1x32xi32>
    %cst_37 = arith.constant 0.000000e+00 : f32
    %37 = vector.broadcast %cst_37 : f32 to vector<16x8xf32>
    %cst_38 = arith.constant 0.000000e+00 : f32
    %38 = vector.broadcast %cst_38 : f32 to vector<16x32xf32>
    %c0_i32 = arith.constant 0 : i32
    %39 = vector.broadcast %c0_i32 : i32 to vector<1x32xi32>
    %40 = arith.cmpi sge, %36, %39 : vector<1x32xi32>
    %c8_i32 = arith.constant 8 : i32
    %41 = vector.broadcast %c8_i32 : i32 to vector<1x32xi32>
    %42 = arith.cmpi slt, %36, %41 : vector<1x32xi32>
    %43 = arith.andi %40, %42 : vector<1x32xi1>
    %44 = arith.extui %43 : vector<1x32xi1> to vector<1x32xi32>
    %45 = arith.sitofp %44 : vector<1x32xi32> to vector<1x32xf32>
    %46 = vector.broadcast %45 : vector<1x32xf32> to vector<16x32xf32>
    %47 = arith.mulf %25, %46 : vector<16x32xf32>
    %cst_39 = arith.constant dense<0.000000e+00> : vector<16x8xf32>
    %48 = tpu.matmul %47, %30, %cst_39 {dimension_numbers = #tpu.dot_dimension_numbers<[1], [1], [0], [0], [0, 0, 1, 0], [], []>} : vector<16x32xf32>, vector<8x32xf32>, vector<16x8xf32> -> vector<16x8xf32>
    %cst_40 = arith.constant 0.353553385 : f32
    %49 = vector.broadcast %cst_40 : f32 to vector<16x8xf32>
    %50 = arith.mulf %48, %49 : vector<16x8xf32>
    %cst_41 = arith.constant dense<0xFF800000> : vector<16xf32>
    %51 = vector.multi_reduction <maximumf>, %50, %cst_41 [1] : vector<16x8xf32> to vector<16xf32>
    %52 = vector.shape_cast %51 : vector<16xf32> to vector<16x1xf32>
    %53 = vector.broadcast %52 : vector<16x1xf32> to vector<16x8xf32>
    %54 = arith.subf %50, %53 : vector<16x8xf32>
    %55 = math.exp %54 : vector<16x8xf32>
    %cst_42 = arith.constant dense<0.000000e+00> : vector<16xf32>
    %56 = vector.multi_reduction <add>, %55, %cst_42 [1] : vector<16x8xf32> to vector<16xf32>
    %57 = vector.shape_cast %56 : vector<16xf32> to vector<16x1xf32>
    %58 = tpu.reciprocal %57 {approx = true} : vector<16x1xf32> -> vector<16x1xf32>
    %59 = vector.broadcast %58 : vector<16x1xf32> to vector<16x8xf32>
    %60 = arith.mulf %55, %59 : vector<16x8xf32>
    %61 = arith.addf %37, %60 : vector<16x8xf32>
    %62 = vector.broadcast %45 : vector<1x32xf32> to vector<8x32xf32>
    %63 = arith.mulf %35, %62 : vector<8x32xf32>
    %cst_43 = arith.constant dense<0.000000e+00> : vector<16x32xf32>
    %64 = tpu.matmul %60, %63, %cst_43 {dimension_numbers = #tpu.dot_dimension_numbers<[1], [0], [0], [1], [0, 0, 1, 1], [], []>} : vector<16x8xf32>, vector<8x32xf32>, vector<16x32xf32> -> vector<16x32xf32>
    %65 = arith.addf %38, %64 : vector<16x32xf32>
    %c8_i32_44 = arith.constant 8 : i32
    %66 = vector.broadcast %c8_i32_44 : i32 to vector<1x32xi32>
    %67 = arith.cmpi sge, %36, %66 : vector<1x32xi32>
    %c16_i32 = arith.constant 16 : i32
    %68 = vector.broadcast %c16_i32 : i32 to vector<1x32xi32>
    %69 = arith.cmpi slt, %36, %68 : vector<1x32xi32>
    %70 = arith.andi %67, %69 : vector<1x32xi1>
    %71 = arith.extui %70 : vector<1x32xi1> to vector<1x32xi32>
    %72 = arith.sitofp %71 : vector<1x32xi32> to vector<1x32xf32>
    %73 = vector.broadcast %72 : vector<1x32xf32> to vector<16x32xf32>
    %74 = arith.mulf %25, %73 : vector<16x32xf32>
    %cst_45 = arith.constant dense<0.000000e+00> : vector<16x8xf32>
    %75 = tpu.matmul %74, %30, %cst_45 {dimension_numbers = #tpu.dot_dimension_numbers<[1], [1], [0], [0], [0, 0, 1, 0], [], []>} : vector<16x32xf32>, vector<8x32xf32>, vector<16x8xf32> -> vector<16x8xf32>
    %cst_46 = arith.constant 0.353553385 : f32
    %76 = vector.broadcast %cst_46 : f32 to vector<16x8xf32>
    %77 = arith.mulf %75, %76 : vector<16x8xf32>
    %cst_47 = arith.constant dense<0xFF800000> : vector<16xf32>
    %78 = vector.multi_reduction <maximumf>, %77, %cst_47 [1] : vector<16x8xf32> to vector<16xf32>
    %79 = vector.shape_cast %78 : vector<16xf32> to vector<16x1xf32>
    %80 = vector.broadcast %79 : vector<16x1xf32> to vector<16x8xf32>
    %81 = arith.subf %77, %80 : vector<16x8xf32>
    %82 = math.exp %81 : vector<16x8xf32>
    %cst_48 = arith.constant dense<0.000000e+00> : vector<16xf32>
    %83 = vector.multi_reduction <add>, %82, %cst_48 [1] : vector<16x8xf32> to vector<16xf32>
    %84 = vector.shape_cast %83 : vector<16xf32> to vector<16x1xf32>
    %85 = tpu.reciprocal %84 {approx = true} : vector<16x1xf32> -> vector<16x1xf32>
    %86 = vector.broadcast %85 : vector<16x1xf32> to vector<16x8xf32>
    %87 = arith.mulf %82, %86 : vector<16x8xf32>
    %88 = arith.addf %61, %87 : vector<16x8xf32>
    %89 = vector.broadcast %72 : vector<1x32xf32> to vector<8x32xf32>
    %90 = arith.mulf %35, %89 : vector<8x32xf32>
    %cst_49 = arith.constant dense<0.000000e+00> : vector<16x32xf32>
    %91 = tpu.matmul %87, %90, %cst_49 {dimension_numbers = #tpu.dot_dimension_numbers<[1], [0], [0], [1], [0, 0, 1, 1], [], []>} : vector<16x8xf32>, vector<8x32xf32>, vector<16x32xf32> -> vector<16x32xf32>
    %92 = arith.addf %65, %91 : vector<16x32xf32>
    %c16_i32_50 = arith.constant 16 : i32
    %93 = vector.broadcast %c16_i32_50 : i32 to vector<1x32xi32>
    %94 = arith.cmpi sge, %36, %93 : vector<1x32xi32>
    %c24_i32 = arith.constant 24 : i32
    %95 = vector.broadcast %c24_i32 : i32 to vector<1x32xi32>
    %96 = arith.cmpi slt, %36, %95 : vector<1x32xi32>
    %97 = arith.andi %94, %96 : vector<1x32xi1>
    %98 = arith.extui %97 : vector<1x32xi1> to vector<1x32xi32>
    %99 = arith.sitofp %98 : vector<1x32xi32> to vector<1x32xf32>
    %100 = vector.broadcast %99 : vector<1x32xf32> to vector<16x32xf32>
    %101 = arith.mulf %25, %100 : vector<16x32xf32>
    %cst_51 = arith.constant dense<0.000000e+00> : vector<16x8xf32>
    %102 = tpu.matmul %101, %30, %cst_51 {dimension_numbers = #tpu.dot_dimension_numbers<[1], [1], [0], [0], [0, 0, 1, 0], [], []>} : vector<16x32xf32>, vector<8x32xf32>, vector<16x8xf32> -> vector<16x8xf32>
    %cst_52 = arith.constant 0.353553385 : f32
    %103 = vector.broadcast %cst_52 : f32 to vector<16x8xf32>
    %104 = arith.mulf %102, %103 : vector<16x8xf32>
    %cst_53 = arith.constant dense<0xFF800000> : vector<16xf32>
    %105 = vector.multi_reduction <maximumf>, %104, %cst_53 [1] : vector<16x8xf32> to vector<16xf32>
    %106 = vector.shape_cast %105 : vector<16xf32> to vector<16x1xf32>
    %107 = vector.broadcast %106 : vector<16x1xf32> to vector<16x8xf32>
    %108 = arith.subf %104, %107 : vector<16x8xf32>
    %109 = math.exp %108 : vector<16x8xf32>
    %cst_54 = arith.constant dense<0.000000e+00> : vector<16xf32>
    %110 = vector.multi_reduction <add>, %109, %cst_54 [1] : vector<16x8xf32> to vector<16xf32>
    %111 = vector.shape_cast %110 : vector<16xf32> to vector<16x1xf32>
    %112 = tpu.reciprocal %111 {approx = true} : vector<16x1xf32> -> vector<16x1xf32>
    %113 = vector.broadcast %112 : vector<16x1xf32> to vector<16x8xf32>
    %114 = arith.mulf %109, %113 : vector<16x8xf32>
    %115 = arith.addf %88, %114 : vector<16x8xf32>
    %116 = vector.broadcast %99 : vector<1x32xf32> to vector<8x32xf32>
    %117 = arith.mulf %35, %116 : vector<8x32xf32>
    %cst_55 = arith.constant dense<0.000000e+00> : vector<16x32xf32>
    %118 = tpu.matmul %114, %117, %cst_55 {dimension_numbers = #tpu.dot_dimension_numbers<[1], [0], [0], [1], [0, 0, 1, 1], [], []>} : vector<16x8xf32>, vector<8x32xf32>, vector<16x32xf32> -> vector<16x32xf32>
    %119 = arith.addf %92, %118 : vector<16x32xf32>
    %c24_i32_56 = arith.constant 24 : i32
    %120 = vector.broadcast %c24_i32_56 : i32 to vector<1x32xi32>
    %121 = arith.cmpi sge, %36, %120 : vector<1x32xi32>
    %c32_i32 = arith.constant 32 : i32
    %122 = vector.broadcast %c32_i32 : i32 to vector<1x32xi32>
    %123 = arith.cmpi slt, %36, %122 : vector<1x32xi32>
    %124 = arith.andi %121, %123 : vector<1x32xi1>
    %125 = arith.extui %124 : vector<1x32xi1> to vector<1x32xi32>
    %126 = arith.sitofp %125 : vector<1x32xi32> to vector<1x32xf32>
    %127 = vector.broadcast %126 : vector<1x32xf32> to vector<16x32xf32>
    %128 = arith.mulf %25, %127 : vector<16x32xf32>
    %cst_57 = arith.constant dense<0.000000e+00> : vector<16x8xf32>
    %129 = tpu.matmul %128, %30, %cst_57 {dimension_numbers = #tpu.dot_dimension_numbers<[1], [1], [0], [0], [0, 0, 1, 0], [], []>} : vector<16x32xf32>, vector<8x32xf32>, vector<16x8xf32> -> vector<16x8xf32>
    %cst_58 = arith.constant 0.353553385 : f32
    %130 = vector.broadcast %cst_58 : f32 to vector<16x8xf32>
    %131 = arith.mulf %129, %130 : vector<16x8xf32>
    %cst_59 = arith.constant dense<0xFF800000> : vector<16xf32>
    %132 = vector.multi_reduction <maximumf>, %131, %cst_59 [1] : vector<16x8xf32> to vector<16xf32>
    %133 = vector.shape_cast %132 : vector<16xf32> to vector<16x1xf32>
    %134 = vector.broadcast %133 : vector<16x1xf32> to vector<16x8xf32>
    %135 = arith.subf %131, %134 : vector<16x8xf32>
    %136 = math.exp %135 : vector<16x8xf32>
    %cst_60 = arith.constant dense<0.000000e+00> : vector<16xf32>
    %137 = vector.multi_reduction <add>, %136, %cst_60 [1] : vector<16x8xf32> to vector<16xf32>
    %138 = vector.shape_cast %137 : vector<16xf32> to vector<16x1xf32>
    %139 = tpu.reciprocal %138 {approx = true} : vector<16x1xf32> -> vector<16x1xf32>
    %140 = vector.broadcast %139 : vector<16x1xf32> to vector<16x8xf32>
    %141 = arith.mulf %136, %140 : vector<16x8xf32>
    %142 = arith.addf %115, %141 : vector<16x8xf32>
    %143 = vector.broadcast %126 : vector<1x32xf32> to vector<8x32xf32>
    %144 = arith.mulf %35, %143 : vector<8x32xf32>
    %cst_61 = arith.constant dense<0.000000e+00> : vector<16x32xf32>
    %145 = tpu.matmul %141, %144, %cst_61 {dimension_numbers = #tpu.dot_dimension_numbers<[1], [0], [0], [1], [0, 0, 1, 1], [], []>} : vector<16x8xf32>, vector<8x32xf32>, vector<16x32xf32> -> vector<16x32xf32>
    %146 = arith.addf %119, %145 : vector<16x32xf32>
    %c0_62 = arith.constant 0 : index
    %c0_63 = arith.constant 0 : index
    %147 = vector.load %arg16[%c0_62, %c0_63] : memref<32x32xf32, #tpu.memory_space<vmem>>, vector<32x32xf32>
    %cst_64 = arith.constant dense<0.000000e+00> : vector<16x32xf32>
    %148 = tpu.matmul %146, %147, %cst_64 {dimension_numbers = #tpu.dot_dimension_numbers<[1], [0], [0], [1], [0, 0, 1, 1], [], []>} : vector<16x32xf32>, vector<32x32xf32>, vector<16x32xf32> -> vector<16x32xf32>
    %c0_65 = arith.constant 0 : index
    %c0_66 = arith.constant 0 : index
    %149 = vector.load %arg17[%c0_65, %c0_66] : memref<1x32xf32, #tpu.memory_space<vmem>>, vector<1x32xf32>
    %150 = vector.broadcast %149 : vector<1x32xf32> to vector<16x32xf32>
    %151 = arith.addf %148, %150 : vector<16x32xf32>
    %cst_67 = arith.constant 2.500000e-01 : f32
    %152 = vector.broadcast %cst_67 : f32 to vector<16x8xf32>
    %153 = arith.mulf %142, %152 : vector<16x8xf32>
    %154 = arith.addf %151, %19 : vector<16x32xf32>
    %cst_68 = arith.constant dense<0.000000e+00> : vector<16xf32>
    %155 = vector.multi_reduction <add>, %154, %cst_68 [1] : vector<16x32xf32> to vector<16xf32>
    %156 = vector.shape_cast %155 : vector<16xf32> to vector<16x1xf32>
    %cst_69 = arith.constant 3.200000e+01 : f32
    %157 = vector.broadcast %cst_69 : f32 to vector<16x1xf32>
    %158 = arith.divf %156, %157 : vector<16x1xf32>
    %159 = vector.broadcast %158 : vector<16x1xf32> to vector<16x32xf32>
    %160 = arith.subf %154, %159 : vector<16x32xf32>
    %161 = arith.mulf %160, %160 : vector<16x32xf32>
    %cst_70 = arith.constant dense<0.000000e+00> : vector<16xf32>
    %162 = vector.multi_reduction <add>, %161, %cst_70 [1] : vector<16x32xf32> to vector<16xf32>
    %163 = vector.shape_cast %162 : vector<16xf32> to vector<16x1xf32>
    %cst_71 = arith.constant 3.200000e+01 : f32
    %164 = vector.broadcast %cst_71 : f32 to vector<16x1xf32>
    %165 = arith.divf %163, %164 : vector<16x1xf32>
    %166 = vector.broadcast %158 : vector<16x1xf32> to vector<16x32xf32>
    %167 = arith.subf %154, %166 : vector<16x32xf32>
    %cst_72 = arith.constant 9.99999974E-6 : f32
    %168 = vector.broadcast %cst_72 : f32 to vector<16x1xf32>
    %169 = arith.addf %165, %168 : vector<16x1xf32>
    %170 = math.rsqrt %169 : vector<16x1xf32>
    %171 = vector.broadcast %170 : vector<16x1xf32> to vector<16x32xf32>
    %172 = arith.mulf %167, %171 : vector<16x32xf32>
    %c0_73 = arith.constant 0 : index
    %c0_74 = arith.constant 0 : index
    %173 = vector.load %arg18[%c0_73, %c0_74] : memref<1x32xf32, #tpu.memory_space<vmem>>, vector<1x32xf32>
    %174 = vector.broadcast %173 : vector<1x32xf32> to vector<16x32xf32>
    %175 = arith.mulf %172, %174 : vector<16x32xf32>
    %c0_75 = arith.constant 0 : index
    %c0_76 = arith.constant 0 : index
    %176 = vector.load %arg19[%c0_75, %c0_76] : memref<1x32xf32, #tpu.memory_space<vmem>>, vector<1x32xf32>
    %177 = vector.broadcast %176 : vector<1x32xf32> to vector<16x32xf32>
    %178 = arith.addf %175, %177 : vector<16x32xf32>
    %179 = arith.mulf %178, %178 : vector<16x32xf32>
    %cst_77 = arith.constant dense<0.000000e+00> : vector<16xf32>
    %180 = vector.multi_reduction <add>, %179, %cst_77 [1] : vector<16x32xf32> to vector<16xf32>
    %181 = vector.shape_cast %180 : vector<16xf32> to vector<16x1xf32>
    %182 = math.sqrt %181 : vector<16x1xf32>
    %cst_78 = arith.constant 9.99999996E-13 : f32
    %183 = vector.broadcast %cst_78 : f32 to vector<16x1xf32>
    %184 = arith.maximumf %182, %183 : vector<16x1xf32>
    %185 = tpu.reciprocal %184 {approx = true} : vector<16x1xf32> -> vector<16x1xf32>
    %186 = vector.broadcast %185 : vector<16x1xf32> to vector<16x32xf32>
    %187 = arith.mulf %178, %186 : vector<16x32xf32>
    %c0_79 = arith.constant 0 : index
    %c0_80 = arith.constant 0 : index
    %188 = vector.load %arg20[%c0_79, %c0_80] : memref<32x64xf32, #tpu.memory_space<vmem>>, vector<32x64xf32>
    %cst_81 = arith.constant dense<0.000000e+00> : vector<16x64xf32>
    %189 = tpu.matmul %187, %188, %cst_81 {dimension_numbers = #tpu.dot_dimension_numbers<[1], [0], [0], [1], [0, 0, 1, 1], [], []>} : vector<16x32xf32>, vector<32x64xf32>, vector<16x64xf32> -> vector<16x64xf32>
    %cst_82 = arith.constant 0.000000e+00 : f32
    %190 = vector.broadcast %cst_82 : f32 to vector<16x64xf32>
    %191 = arith.maximumf %189, %190 : vector<16x64xf32>
    %c0_83 = arith.constant 0 : index
    %c0_84 = arith.constant 0 : index
    %192 = vector.load %arg21[%c0_83, %c0_84] : memref<64x8xf32, #tpu.memory_space<vmem>>, vector<64x8xf32>
    %cst_85 = arith.constant dense<0.000000e+00> : vector<16x8xf32>
    %193 = tpu.matmul %191, %192, %cst_85 {dimension_numbers = #tpu.dot_dimension_numbers<[1], [0], [0], [1], [0, 0, 1, 1], [], []>} : vector<16x64xf32>, vector<64x8xf32>, vector<16x8xf32> -> vector<16x8xf32>
    %194 = arith.negf %193 : vector<16x8xf32>
    %195 = math.exp %194 : vector<16x8xf32>
    %cst_86 = arith.constant 1.000000e+00 : f32
    %196 = vector.broadcast %cst_86 : f32 to vector<16x8xf32>
    %197 = arith.addf %196, %195 : vector<16x8xf32>
    %198 = arith.divf %196, %197 : vector<16x8xf32>
    %c0_87 = arith.constant 0 : index
    %c0_88 = arith.constant 0 : index
    %199 = vector.load %arg22[%c0_87, %c0_88] : memref<32x128xf32, #tpu.memory_space<vmem>>, vector<32x128xf32>
    %cst_89 = arith.constant dense<0.000000e+00> : vector<16x128xf32>
    %200 = tpu.matmul %187, %199, %cst_89 {dimension_numbers = #tpu.dot_dimension_numbers<[1], [0], [0], [1], [0, 0, 1, 1], [], []>} : vector<16x32xf32>, vector<32x128xf32>, vector<16x128xf32> -> vector<16x128xf32>
    %c0_90 = arith.constant 0 : index
    %c0_91 = arith.constant 0 : index
    %201 = vector.load %arg23[%c0_90, %c0_91] : memref<8x128xf32, #tpu.memory_space<vmem>>, vector<8x128xf32>
    %cst_92 = arith.constant dense<0.000000e+00> : vector<16x128xf32>
    %202 = tpu.matmul %153, %201, %cst_92 {dimension_numbers = #tpu.dot_dimension_numbers<[1], [0], [0], [1], [0, 0, 1, 1], [], []>} : vector<16x8xf32>, vector<8x128xf32>, vector<16x128xf32> -> vector<16x128xf32>
    %203 = arith.addf %200, %202 : vector<16x128xf32>
    %c0_93 = arith.constant 0 : index
    %c0_94 = arith.constant 0 : index
    %204 = vector.load %arg24[%c0_93, %c0_94] : memref<8x128xf32, #tpu.memory_space<vmem>>, vector<8x128xf32>
    %cst_95 = arith.constant dense<0.000000e+00> : vector<16x128xf32>
    %205 = tpu.matmul %198, %204, %cst_95 {dimension_numbers = #tpu.dot_dimension_numbers<[1], [0], [0], [1], [0, 0, 1, 1], [], []>} : vector<16x8xf32>, vector<8x128xf32>, vector<16x128xf32> -> vector<16x128xf32>
    %206 = arith.addf %203, %205 : vector<16x128xf32>
    %c0_96 = arith.constant 0 : index
    %c0_97 = arith.constant 0 : index
    %207 = vector.load %arg25[%c0_96, %c0_97] : memref<16x128xf32, #tpu.memory_space<vmem>>, vector<16x128xf32>
    tpu.vector_store %arg25[%c0_96, %c0_97], %206 {strides = array<i32>} : memref<16x128xf32, #tpu.memory_space<vmem>>, vector<16x128xf32>,
    return
  }
  func.func @transform_0(%arg0: i32) -> (i32, i32) {
    %c0_i32 = arith.constant 0 : i32
    %c0_i32_0 = arith.constant 0 : i32
    %c0_i32_1 = arith.constant 0 : i32
    return %c0_i32, %c0_i32_0 : i32, i32
  }
  func.func @transform_1(%arg0: i32) -> (i32, i32) {
    %c0_i32 = arith.constant 0 : i32
    %c0_i32_0 = arith.constant 0 : i32
    %c0_i32_1 = arith.constant 0 : i32
    return %c0_i32, %c0_i32_0 : i32, i32
  }
  func.func @transform_2(%arg0: i32) -> (i32, i32) {
    %c0_i32 = arith.constant 0 : i32
    %c0_i32_0 = arith.constant 0 : i32
    %c0_i32_1 = arith.constant 0 : i32
    return %c0_i32, %c0_i32_0 : i32, i32
  }
  func.func @transform_3(%arg0: i32) -> (i32, i32) {
    %c0_i32 = arith.constant 0 : i32
    %c0_i32_0 = arith.constant 0 : i32
    %c0_i32_1 = arith.constant 0 : i32
    return %c0_i32, %c0_i32_0 : i32, i32
  }
  func.func @transform_4(%arg0: i32) -> (i32, i32) {
    %c0_i32 = arith.constant 0 : i32
    %c0_i32_0 = arith.constant 0 : i32
    %c0_i32_1 = arith.constant 0 : i32
    return %c0_i32, %c0_i32_0 : i32, i32
  }
  func.func @transform_5(%arg0: i32) -> (i32, i32) {
    %c0_i32 = arith.constant 0 : i32
    %c0_i32_0 = arith.constant 0 : i32
    %c0_i32_1 = arith.constant 0 : i32
    return %c0_i32, %c0_i32_0 : i32, i32
  }
  func.func @transform_6(%arg0: i32) -> (i32, i32) {
    %c0_i32 = arith.constant 0 : i32
    %c0_i32_0 = arith.constant 0 : i32
    %c0_i32_1 = arith.constant 0 : i32
    return %c0_i32, %c0_i32_0 : i32, i32
  }
  func.func @transform_7(%arg0: i32) -> (i32, i32) {
    %c0_i32 = arith.constant 0 : i32
    %c0_i32_0 = arith.constant 0 : i32
    %c0_i32_1 = arith.constant 0 : i32
    return %c0_i32, %c0_i32_0 : i32, i32
  }
  func.func @transform_8(%arg0: i32) -> (i32, i32) {
    %c0_i32 = arith.constant 0 : i32
    %c0_i32_0 = arith.constant 0 : i32
    %c0_i32_1 = arith.constant 0 : i32
    return %c0_i32, %c0_i32_0 : i32, i32
  }
  func.func @transform_9(%arg0: i32) -> (i32, i32) {
    %c0_i32 = arith.constant 0 : i32
    %c0_i32_0 = arith.constant 0 : i32
    %c0_i32_1 = arith.constant 0 : i32
    return %c0_i32, %c0_i32_0 : i32, i32
  }
  func.func @transform_10(%arg0: i32) -> (i32, i32) {
    %c0_i32 = arith.constant 0 : i32
    %c0_i32_0 = arith.constant 0 : i32
    %c0_i32_1 = arith.constant 0 : i32
    return %c0_i32, %c0_i32_0 : i32, i32
  }
  func.func @transform_11(%arg0: i32) -> (i32, i32) {
    %c0_i32 = arith.constant 0 : i32
    %c0_i32_0 = arith.constant 0 : i32
    %c0_i32_1 = arith.constant 0 : i32
    return %c0_i32, %c0_i32_0 : i32, i32
  }
  func.func @transform_12(%arg0: i32) -> (i32, i32) {
    %c0_i32 = arith.constant 0 : i32
    %c0_i32_0 = arith.constant 0 : i32
    %c0_i32_1 = arith.constant 0 : i32
    return %c0_i32, %c0_i32_0 : i32, i32
  }
  func.func @transform_13(%arg0: i32) -> (i32, i32) {
    %c0_i32 = arith.constant 0 : i32
    %c0_i32_0 = arith.constant 0 : i32
    %c0_i32_1 = arith.constant 0 : i32
    return %c0_i32, %c0_i32_0 : i32, i32
  }
  func.func @transform_14(%arg0: i32) -> (i32, i32) {
    %c0_i32 = arith.constant 0 : i32
    %c0_i32_0 = arith.constant 0 : i32
    %c0_i32_1 = arith.constant 0 : i32
    return %c0_i32, %c0_i32_0 : i32, i32
  }
  func.func @transform_15(%arg0: i32) -> (i32, i32) {
    %c0_i32 = arith.constant 0 : i32
    %c0_i32_0 = arith.constant 0 : i32
    %c0_i32_1 = arith.constant 0 : i32
    return %c0_i32, %c0_i32_0 : i32, i32
  }
  func.func @transform_16(%arg0: i32) -> (i32, i32) {
    %c0_i32 = arith.constant 0 : i32
    %c0_i32_0 = arith.constant 0 : i32
    %c0_i32_1 = arith.constant 0 : i32
    return %c0_i32, %c0_i32_0 : i32, i32
  }
  func.func @transform_17(%arg0: i32) -> (i32, i32) {
    %c0_i32 = arith.constant 0 : i32
    %c0_i32_0 = arith.constant 0 : i32
    %c0_i32_1 = arith.constant 0 : i32
    return %c0_i32, %c0_i32_0 : i32, i32
  }
  func.func @transform_18(%arg0: i32) -> (i32, i32) {
    %c0_i32 = arith.constant 0 : i32
    %c0_i32_0 = arith.constant 0 : i32
    %c0_i32_1 = arith.constant 0 : i32
    return %c0_i32, %c0_i32_0 : i32, i32
  }
  func.func @transform_19(%arg0: i32) -> (i32, i32) {
    %c0_i32 = arith.constant 0 : i32
    %c0_i32_0 = arith.constant 0 : i32
    %c0_i32_1 = arith.constant 0 : i32
    return %c0_i32, %c0_i32_0 : i32, i32
  }
  func.func @transform_20(%arg0: i32) -> (i32, i32) {
    %c0_i32 = arith.constant 0 : i32
    %c0_i32_0 = arith.constant 0 : i32
    %c0_i32_1 = arith.constant 0 : i32
    return %c0_i32, %c0_i32_0 : i32, i32
  }
  func.func @transform_21(%arg0: i32) -> (i32, i32) {
    %c0_i32 = arith.constant 0 : i32
    %c0_i32_0 = arith.constant 0 : i32
    %c0_i32_1 = arith.constant 0 : i32
    return %c0_i32, %c0_i32_0 : i32, i32
  }
  func.func @transform_22(%arg0: i32) -> (i32, i32) {
    %c0_i32 = arith.constant 0 : i32
    %c0_i32_0 = arith.constant 0 : i32
    %c0_i32_1 = arith.constant 0 : i32
    return %c0_i32, %c0_i32_0 : i32, i32
  }
  func.func @transform_23(%arg0: i32) -> (i32, i32) {
    %c0_i32 = arith.constant 0 : i32
    %c0_i32_0 = arith.constant 0 : i32
    %c0_i32_1 = arith.constant 0 : i32
    return %c0_i32, %c0_i32_0 : i32, i32
  }
  func.func @transform_24(%arg0: i32) -> (i32, i32) {
    %c0_i32 = arith.constant 0 : i32
    %c0_i32_0 = arith.constant 0 : i32
    %c0_i32_1 = arith.constant 0 : i32
    return %c0_i32, %c0_i32_0 : i32, i32
  }
}

</mosaic_0001>

<llo_original>
// kernel: tpu_custom_call.1
$region0: #{tpu_custom_call.1}
  #allocation0 [shape = 'u32[]', space=smem, size = 0x4, offset = 0x4, fixed_abs, tag = 'smem constant byte address 0x4 - core index']
  #allocation1 [shape = 'u32[144,128]{1,0:T(1,128)}', space=vmem, size = 0x12000, scoped, tag = 'internal scratch']
  %s0 = inlined_call_operand.hbm [shape: f32[16,16], index: 0, kind: input, shape index: {}]
  %s1 = inlined_call_operand.hbm [shape: f32[16,32], index: 1, kind: input, shape index: {}]
  %s2 = inlined_call_operand.hbm [shape: f32[8,32], index: 2, kind: input, shape index: {}]
  %s3 = inlined_call_operand.hbm [shape: f32[32,32], index: 3, kind: input, shape index: {}]
  %s4 = inlined_call_operand.hbm [shape: f32[32,32], index: 4, kind: input, shape index: {}]
  %s5 = inlined_call_operand.hbm [shape: f32[1,32], index: 5, kind: input, shape index: {}]
  %s6 = inlined_call_operand.hbm [shape: f32[32,32], index: 6, kind: input, shape index: {}]
  %s7 = inlined_call_operand.hbm [shape: f32[32,32], index: 7, kind: input, shape index: {}]
  %s8 = inlined_call_operand.hbm [shape: f32[1,32], index: 8, kind: input, shape index: {}]
  %s9 = inlined_call_operand.hbm [shape: f32[32,32], index: 9, kind: input, shape index: {}]
  %s10 = inlined_call_operand.hbm [shape: f32[1,32], index: 10, kind: input, shape index: {}]
  %s11 = inlined_call_operand.hbm [shape: f32[32,32], index: 11, kind: input, shape index: {}]
  %s12 = inlined_call_operand.hbm [shape: f32[1,32], index: 12, kind: input, shape index: {}]
  %s13 = inlined_call_operand.hbm [shape: f32[32,32], index: 13, kind: input, shape index: {}]
  %s14 = inlined_call_operand.hbm [shape: f32[1,32], index: 14, kind: input, shape index: {}]
  %s15 = inlined_call_operand.hbm [shape: f32[32,32], index: 15, kind: input, shape index: {}]
  %s16 = inlined_call_operand.hbm [shape: f32[1,32], index: 16, kind: input, shape index: {}]
  %s17 = inlined_call_operand.hbm [shape: f32[1,32], index: 17, kind: input, shape index: {}]
  %s18 = inlined_call_operand.hbm [shape: f32[1,32], index: 18, kind: input, shape index: {}]
  %s19 = inlined_call_operand.hbm [shape: f32[32,64], index: 19, kind: input, shape index: {}]
  %s20 = inlined_call_operand.hbm [shape: f32[64,8], index: 20, kind: input, shape index: {}]
  %s21 = inlined_call_operand.hbm [shape: f32[32,128], index: 21, kind: input, shape index: {}]
  %s22 = inlined_call_operand.hbm [shape: f32[8,128], index: 22, kind: input, shape index: {}]
  %s23 = inlined_call_operand.hbm [shape: f32[8,128], index: 23, kind: input, shape index: {}]
  %s24 = inlined_call_operand.hbm [shape: f32[16,128], index: 24, kind: output, shape index: {}]
  %s25 = sld [smem:[#allocation0]]
  $region202: #{tpu_custom_call.1} parent=0
    _
  %s27 = ssub.s32 1, %s25
  %s28 = scalar_select 0, %s27, %s25
  $region1: #{tpu_custom_call.1} parent=0
    #allocation2 [shape = 'u8[8192]{0}', space=vmem, size = 0x2000, scoped, tag = 'input window, operand 0, single buffered']
    #allocation3 [shape = 's32[1]{0}', space=sflag, size = 0x4, scoped, tag = 'scoped memory for tpu_custom_call.1']
    #allocation4 [shape = 's32[1]{0}', space=sflag, size = 0x4, scoped, tag = 'scoped memory for tpu_custom_call.1']
    #allocation5 [shape = 'u8[8192]{0}', space=vmem, size = 0x2000, scoped, tag = 'input window, operand 1, single buffered']
    #allocation6 [shape = 's32[1]{0}', space=sflag, size = 0x4, scoped, tag = 'scoped memory for tpu_custom_call.1']
    #allocation7 [shape = 'u8[4096]{0}', space=vmem, size = 0x1000, scoped, tag = 'input window, operand 2, single buffered']
    #allocation8 [shape = 'u8[16384]{0}', space=vmem, size = 0x4000, scoped, tag = 'input window, operand 3, single buffered']
    #allocation9 [shape = 's32[1]{0}', space=sflag, size = 0x4, scoped, tag = 'scoped memory for tpu_custom_call.1']
    #allocation10 [shape = 'u8[16384]{0}', space=vmem, size = 0x4000, scoped, tag = 'input window, operand 4, single buffered']
    #allocation11 [shape = 'u8[512]{0}', space=vmem, size = 0x400, scoped, tag = 'input window, operand 5, single buffered']
    #allocation12 [shape = 's32[1]{0}', space=sflag, size = 0x4, scoped, tag = 'scoped memory for tpu_custom_call.1']
    #allocation13 [shape = 'u8[16384]{0}', space=vmem, size = 0x4000, scoped, tag = 'input window, operand 6, single buffered']
    #allocation14 [shape = 'u8[16384]{0}', space=vmem, size = 0x4000, scoped, tag = 'input window, operand 7, single buffered']
    #allocation15 [shape = 's32[1]{0}', space=sflag, size = 0x4, scoped, tag = 'scoped memory for tpu_custom_call.1']
    #allocation16 [shape = 'u8[512]{0}', space=vmem, size = 0x400, scoped, tag = 'input window, operand 8, single buffered']
    #allocation17 [shape = 'u8[16384]{0}', space=vmem, size = 0x4000, scoped, tag = 'input window, operand 9, single buffered']
    #allocation18 [shape = 's32[1]{0}', space=sflag, size = 0x4, scoped, tag = 'scoped memory for tpu_custom_call.1']
    #allocation19 [shape = 'u8[512]{0}', space=vmem, size = 0x400, scoped, tag = 'input window, operand 10, single buffered']
    #allocation20 [shape = 'u8[16384]{0}', space=vmem, size = 0x4000, scoped, tag = 'input window, operand 11, single buffered']
    #allocation21 [shape = 's32[1]{0}', space=sflag, size = 0x4, scoped, tag = 'scoped memory for tpu_custom_call.1']
    #allocation22 [shape = 'u8[512]{0}', space=vmem, size = 0x400, scoped, tag = 'input window, operand 12, single buffered']
    #allocation23 [shape = 'u8[16384]{0}', space=vmem, size = 0x4000, scoped, tag = 'input window, operand 13, single buffered']
    #allocation24 [shape = 's32[1]{0}', space=sflag, size = 0x4, scoped, tag = 'scoped memory for tpu_custom_call.1']
    #allocation25 [shape = 'u8[512]{0}', space=vmem, size = 0x400, scoped, tag = 'input window, operand 14, single buffered']
    #allocation26 [shape = 'u8[16384]{0}', space=vmem, size = 0x4000, scoped, tag = 'input window, operand 15, single buffered']
    #allocation27 [shape = 's32[1]{0}', space=sflag, size = 0x4, scoped, tag = 'scoped memory for tpu_custom_call.1']
    #allocation28 [shape = 'u8[512]{0}', space=vmem, size = 0x400, scoped, tag = 'input window, operand 16, single buffered']
    #allocation29 [shape = 'u8[512]{0}', space=vmem, size = 0x400, scoped, tag = 'input window, operand 17, single buffered']
    #allocation30 [shape = 's32[1]{0}', space=sflag, size = 0x4, scoped, tag = 'scoped memory for tpu_custom_call.1']
    #allocation31 [shape = 'u8[512]{0}', space=vmem, size = 0x400, scoped, tag = 'input window, operand 18, single buffered']
    #allocation32 [shape = 'u8[16384]{0}', space=vmem, size = 0x4000, scoped, tag = 'input window, operand 19, single buffered']
    #allocation33 [shape = 's32[1]{0}', space=sflag, size = 0x4, scoped, tag = 'scoped memory for tpu_custom_call.1']
    #allocation34 [shape = 'u8[32768]{0}', space=vmem, size = 0x8000, scoped, tag = 'input window, operand 20, single buffered']
    #allocation35 [shape = 'u8[16384]{0}', space=vmem, size = 0x4000, scoped, tag = 'input window, operand 21, single buffered']
    #allocation36 [shape = 's32[1]{0}', space=sflag, size = 0x4, scoped, tag = 'scoped memory for tpu_custom_call.1']
    #allocation37 [shape = 'u8[4096]{0}', space=vmem, size = 0x1000, scoped, tag = 'input window, operand 22, single buffered']
    #allocation38 [shape = 'u8[4096]{0}', space=vmem, size = 0x1000, scoped, tag = 'input window, operand 23, single buffered']
    #allocation39 [shape = 's32[1]{0}', space=sflag, size = 0x4, scoped, tag = 'scoped memory for tpu_custom_call.1']
    #allocation40 [shape = 'u8[8192]{0}', space=vmem, size = 0x2000, scoped, tag = 'output window, operand 0, single buffered']
    %29 = vsyncpa [#allocation3], 0
    %30 = vsyncpa [#allocation6], 0
    %31 = vsyncpa [#allocation9], 0
    %32 = vsyncpa [#allocation12], 0
    %33 = vsyncpa [#allocation15], 0
    %34 = vsyncpa [#allocation18], 0
    %35 = vsyncpa [#allocation21], 0
    %36 = vsyncpa [#allocation24], 0
    %37 = vsyncpa [#allocation27], 0
    %38 = vsyncpa [#allocation30], 0
    %39 = vsyncpa [#allocation33], 0
    %40 = vsyncpa [#allocation36], 0
    %41 = vsyncpa [#allocation39], 0
    %42 = vsyncpa [#allocation4], 0
    // Predicated region
    $region2: #{tpu_custom_call.1} parent=1 // pred_check
      _
    $region3: #{tpu_custom_call.1} parent=1 // pred_check_branch
      %44 = sbr.rel (0) target = $region5
    $region4: #{tpu_custom_call.1} parent=1 // pred_region
      %s46 = ssub.s32 256, 256
      %47 = vsyncadd [#allocation3], %s46
      %s48 = sshll.u32 [#allocation2], 4
      %s49 = int_to_ptr.vmem [resolvable:$true] %s48
      %54 = dma.hbm_to_vmem [thread:$0]  %s0, 256, %s49, [#allocation3], 128, 128, 8
    $region5: #{tpu_custom_call.1} parent=1 // pred_fallthru
      _
    // Predicated region
    $region6: #{tpu_custom_call.1} parent=1 // pred_check
      _
    $region7: #{tpu_custom_call.1} parent=1 // pred_check_branch
      %56 = sbr.rel (0) target = $region9
    $region8: #{tpu_custom_call.1} parent=1 // pred_region
      %s58 = ssub.s32 256, 256
      %59 = vsyncadd [#allocation6], %s58
      %s60 = sshll.u32 [#allocation5], 4
      %s61 = int_to_ptr.vmem [resolvable:$true] %s60
      %66 = dma.hbm_to_vmem [thread:$0]  %s1, 256, %s61, [#allocation6], 128, 128, 8
    $region9: #{tpu_custom_call.1} parent=1 // pred_fallthru
      _
    // Predicated region
    $region10: #{tpu_custom_call.1} parent=1 // pred_check
      _
    $region11: #{tpu_custom_call.1} parent=1 // pred_check_branch
      %68 = sbr.rel (0) target = $region13
    $region12: #{tpu_custom_call.1} parent=1 // pred_region
      %s70 = ssub.s32 128, 128
      %71 = vsyncadd [#allocation6], %s70
      %s73 = sshll.u32 [#allocation7], 4
      %s74 = int_to_ptr.vmem [resolvable:$true] %s73
      %76 = dma.hbm_to_vmem [thread:$0]  %s2, 128, %s74, [#allocation6]
    $region13: #{tpu_custom_call.1} parent=1 // pred_fallthru
      _
    // Predicated region
    $region14: #{tpu_custom_call.1} parent=1 // pred_check
      _
    $region15: #{tpu_custom_call.1} parent=1 // pred_check_branch
      %78 = sbr.rel (0) target = $region17
    $region16: #{tpu_custom_call.1} parent=1 // pred_region
      %s80 = ssub.s32 512, 512
      %81 = vsyncadd [#allocation9], %s80
      %s82 = sshll.u32 [#allocation8], 4
      %s83 = int_to_ptr.vmem [resolvable:$true] %s82
      %88 = dma.hbm_to_vmem [thread:$0]  %s3, 512, %s83, [#allocation9], 128, 128, 8
    $region17: #{tpu_custom_call.1} parent=1 // pred_fallthru
      _
    // Predicated region
    $region18: #{tpu_custom_call.1} parent=1 // pred_check
      _
    $region19: #{tpu_custom_call.1} parent=1 // pred_check_branch
      %90 = sbr.rel (0) target = $region21
    $region20: #{tpu_custom_call.1} parent=1 // pred_region
      %s92 = ssub.s32 512, 512
      %93 = vsyncadd [#allocation9], %s92
      %s94 = sshll.u32 [#allocation10], 4
      %s95 = int_to_ptr.vmem [resolvable:$true] %s94
      %100 = dma.hbm_to_vmem [thread:$0]  %s4, 512, %s95, [#allocation9], 128, 128, 8
    $region21: #{tpu_custom_call.1} parent=1 // pred_fallthru
      _
    // Predicated region
    $region22: #{tpu_custom_call.1} parent=1 // pred_check
      _
    $region23: #{tpu_custom_call.1} parent=1 // pred_check_branch
      %102 = sbr.rel (0) target = $region25
    $region24: #{tpu_custom_call.1} parent=1 // pred_region
      %s104 = ssub.s32 16, 16
      %105 = vsyncadd [#allocation12], %s104
      %s107 = sshll.u32 [#allocation11], 4
      %s108 = int_to_ptr.vmem [resolvable:$true] %s107
      %110 = dma.hbm_to_vmem [thread:$0]  %s5, 16, %s108, [#allocation12]
    $region25: #{tpu_custom_call.1} parent=1 // pred_fallthru
      _
    // Predicated region
    $region26: #{tpu_custom_call.1} parent=1 // pred_check
      _
    $region27: #{tpu_custom_call.1} parent=1 // pred_check_branch
      %112 = sbr.rel (0) target = $region29
    $region28: #{tpu_custom_call.1} parent=1 // pred_region
      %s114 = ssub.s32 512, 512
      %115 = vsyncadd [#allocation12], %s114
      %s116 = sshll.u32 [#allocation13], 4
      %s117 = int_to_ptr.vmem [resolvable:$true] %s116
      %122 = dma.hbm_to_vmem [thread:$0]  %s6, 512, %s117, [#allocation12], 128, 128, 8
    $region29: #{tpu_custom_call.1} parent=1 // pred_fallthru
      _
    // Predicated region
    $region30: #{tpu_custom_call.1} parent=1 // pred_check
      _
    $region31: #{tpu_custom_call.1} parent=1 // pred_check_branch
      %124 = sbr.rel (0) target = $region33
    $region32: #{tpu_custom_call.1} parent=1 // pred_region
      %s126 = ssub.s32 512, 512
      %127 = vsyncadd [#allocation15], %s126
      %s128 = sshll.u32 [#allocation14], 4
      %s129 = int_to_ptr.vmem [resolvable:$true] %s128
      %134 = dma.hbm_to_vmem [thread:$0]  %s7, 512, %s129, [#allocation15], 128, 128, 8
    $region33: #{tpu_custom_call.1} parent=1 // pred_fallthru
      _
    // Predicated region
    $region34: #{tpu_custom_call.1} parent=1 // pred_check
      _
    $region35: #{tpu_custom_call.1} parent=1 // pred_check_branch
      %136 = sbr.rel (0) target = $region37
    $region36: #{tpu_custom_call.1} parent=1 // pred_region
      %s138 = ssub.s32 16, 16
      %139 = vsyncadd [#allocation15], %s138
      %s141 = sshll.u32 [#allocation16], 4
      %s142 = int_to_ptr.vmem [resolvable:$true] %s141
      %144 = dma.hbm_to_vmem [thread:$0]  %s8, 16, %s142, [#allocation15]
    $region37: #{tpu_custom_call.1} parent=1 // pred_fallthru
      _
    // Predicated region
    $region38: #{tpu_custom_call.1} parent=1 // pred_check
      _
    $region39: #{tpu_custom_call.1} parent=1 // pred_check_branch
      %146 = sbr.rel (0) target = $region41
    $region40: #{tpu_custom_call.1} parent=1 // pred_region
      %s148 = ssub.s32 512, 512
      %149 = vsyncadd [#allocation18], %s148
      %s150 = sshll.u32 [#allocation17], 4
      %s151 = int_to_ptr.vmem [resolvable:$true] %s150
      %156 = dma.hbm_to_vmem [thread:$0]  %s9, 512, %s151, [#allocation18], 128, 128, 8
    $region41: #{tpu_custom_call.1} parent=1 // pred_fallthru
      _
    // Predicated region
    $region42: #{tpu_custom_call.1} parent=1 // pred_check
      _
    $region43: #{tpu_custom_call.1} parent=1 // pred_check_branch
      %158 = sbr.rel (0) target = $region45
    $region44: #{tpu_custom_call.1} parent=1 // pred_region
      %s160 = ssub.s32 16, 16
      %161 = vsyncadd [#allocation18], %s160
      %s163 = sshll.u32 [#allocation19], 4
      %s164 = int_to_ptr.vmem [resolvable:$true] %s163
      %166 = dma.hbm_to_vmem [thread:$0]  %s10, 16, %s164, [#allocation18]
    $region45: #{tpu_custom_call.1} parent=1 // pred_fallthru
      _
    // Predicated region
    $region46: #{tpu_custom_call.1} parent=1 // pred_check
      _
    $region47: #{tpu_custom_call.1} parent=1 // pred_check_branch
      %168 = sbr.rel (0) target = $region49
    $region48: #{tpu_custom_call.1} parent=1 // pred_region
      %s170 = ssub.s32 512, 512
      %171 = vsyncadd [#allocation21], %s170
      %s172 = sshll.u32 [#allocation20], 4
      %s173 = int_to_ptr.vmem [resolvable:$true] %s172
      %178 = dma.hbm_to_vmem [thread:$0]  %s11, 512, %s173, [#allocation21], 128, 128, 8
    $region49: #{tpu_custom_call.1} parent=1 // pred_fallthru
      _
    // Predicated region
    $region50: #{tpu_custom_call.1} parent=1 // pred_check
      _
    $region51: #{tpu_custom_call.1} parent=1 // pred_check_branch
      %180 = sbr.rel (0) target = $region53
    $region52: #{tpu_custom_call.1} parent=1 // pred_region
      %s182 = ssub.s32 16, 16
      %183 = vsyncadd [#allocation21], %s182
      %s185 = sshll.u32 [#allocation22], 4
      %s186 = int_to_ptr.vmem [resolvable:$true] %s185
      %188 = dma.hbm_to_vmem [thread:$0]  %s12, 16, %s186, [#allocation21]
    $region53: #{tpu_custom_call.1} parent=1 // pred_fallthru
      _
    // Predicated region
    $region54: #{tpu_custom_call.1} parent=1 // pred_check
      _
    $region55: #{tpu_custom_call.1} parent=1 // pred_check_branch
      %190 = sbr.rel (0) target = $region57
    $region56: #{tpu_custom_call.1} parent=1 // pred_region
      %s192 = ssub.s32 512, 512
      %193 = vsyncadd [#allocation24], %s192
      %s194 = sshll.u32 [#allocation23], 4
      %s195 = int_to_ptr.vmem [resolvable:$true] %s194
      %200 = dma.hbm_to_vmem [thread:$0]  %s13, 512, %s195, [#allocation24], 128, 128, 8
    $region57: #{tpu_custom_call.1} parent=1 // pred_fallthru
      _
    // Predicated region
    $region58: #{tpu_custom_call.1} parent=1 // pred_check
      _
    $region59: #{tpu_custom_call.1} parent=1 // pred_check_branch
      %202 = sbr.rel (0) target = $region61
    $region60: #{tpu_custom_call.1} parent=1 // pred_region
      %s204 = ssub.s32 16, 16
      %205 = vsyncadd [#allocation24], %s204
      %s207 = sshll.u32 [#allocation25], 4
      %s208 = int_to_ptr.vmem [resolvable:$true] %s207
      %210 = dma.hbm_to_vmem [thread:$0]  %s14, 16, %s208, [#allocation24]
    $region61: #{tpu_custom_call.1} parent=1 // pred_fallthru
      _
    // Predicated region
    $region62: #{tpu_custom_call.1} parent=1 // pred_check
      _
    $region63: #{tpu_custom_call.1} parent=1 // pred_check_branch
      %212 = sbr.rel (0) target = $region65
    $region64: #{tpu_custom_call.1} parent=1 // pred_region
      %s214 = ssub.s32 512, 512
      %215 = vsyncadd [#allocation27], %s214
      %s216 = sshll.u32 [#allocation26], 4
      %s217 = int_to_ptr.vmem [resolvable:$true] %s216
      %222 = dma.hbm_to_vmem [thread:$0]  %s15, 512, %s217, [#allocation27], 128, 128, 8
    $region65: #{tpu_custom_call.1} parent=1 // pred_fallthru
      _
    // Predicated region
    $region66: #{tpu_custom_call.1} parent=1 // pred_check
      _
    $region67: #{tpu_custom_call.1} parent=1 // pred_check_branch
      %224 = sbr.rel (0) target = $region69
    $region68: #{tpu_custom_call.1} parent=1 // pred_region
      %s226 = ssub.s32 16, 16
      %227 = vsyncadd [#allocation27], %s226
      %s229 = sshll.u32 [#allocation28], 4
      %s230 = int_to_ptr.vmem [resolvable:$true] %s229
      %232 = dma.hbm_to_vmem [thread:$0]  %s16, 16, %s230, [#allocation27]
    $region69: #{tpu_custom_call.1} parent=1 // pred_fallthru
      _
    // Predicated region
    $region70: #{tpu_custom_call.1} parent=1 // pred_check
      _
    $region71: #{tpu_custom_call.1} parent=1 // pred_check_branch
      %234 = sbr.rel (0) target = $region73
    $region72: #{tpu_custom_call.1} parent=1 // pred_region
      %s236 = ssub.s32 16, 16
      %237 = vsyncadd [#allocation30], %s236
      %s239 = sshll.u32 [#allocation29], 4
      %s240 = int_to_ptr.vmem [resolvable:$true] %s239
      %242 = dma.hbm_to_vmem [thread:$0]  %s17, 16, %s240, [#allocation30]
    $region73: #{tpu_custom_call.1} parent=1 // pred_fallthru
      _
    // Predicated region
    $region74: #{tpu_custom_call.1} parent=1 // pred_check
      _
    $region75: #{tpu_custom_call.1} parent=1 // pred_check_branch
      %244 = sbr.rel (0) target = $region77
    $region76: #{tpu_custom_call.1} parent=1 // pred_region
      %s246 = ssub.s32 16, 16
      %247 = vsyncadd [#allocation30], %s246
      %s249 = sshll.u32 [#allocation31], 4
      %s250 = int_to_ptr.vmem [resolvable:$true] %s249
      %252 = dma.hbm_to_vmem [thread:$0]  %s18, 16, %s250, [#allocation30]
    $region77: #{tpu_custom_call.1} parent=1 // pred_fallthru
      _
    // Predicated region
    $region78: #{tpu_custom_call.1} parent=1 // pred_check
      _
    $region79: #{tpu_custom_call.1} parent=1 // pred_check_branch
      %254 = sbr.rel (0) target = $region81
    $region80: #{tpu_custom_call.1} parent=1 // pred_region
      %s256 = ssub.s32 512, 512
      %257 = vsyncadd [#allocation33], %s256
      %s258 = sshll.u32 [#allocation32], 4
      %s259 = int_to_ptr.vmem [resolvable:$true] %s258
      %264 = dma.hbm_to_vmem [thread:$0]  %s19, 512, %s259, [#allocation33], 128, 128, 8
    $region81: #{tpu_custom_call.1} parent=1 // pred_fallthru
      _
    // Predicated region
    $region82: #{tpu_custom_call.1} parent=1 // pred_check
      _
    $region83: #{tpu_custom_call.1} parent=1 // pred_check_branch
      %266 = sbr.rel (0) target = $region85
    $region84: #{tpu_custom_call.1} parent=1 // pred_region
      %s268 = ssub.s32 1024, 1024
      %269 = vsyncadd [#allocation33], %s268
      %s270 = sshll.u32 [#allocation34], 4
      %s271 = int_to_ptr.vmem [resolvable:$true] %s270
      %276 = dma.hbm_to_vmem [thread:$0]  %s20, 1024, %s271, [#allocation33], 128, 128, 8
    $region85: #{tpu_custom_call.1} parent=1 // pred_fallthru
      _
    // Predicated region
    $region86: #{tpu_custom_call.1} parent=1 // pred_check
      _
    $region87: #{tpu_custom_call.1} parent=1 // pred_check_branch
      %278 = sbr.rel (0) target = $region89
    $region88: #{tpu_custom_call.1} parent=1 // pred_region
      %s280 = ssub.s32 512, 512
      %281 = vsyncadd [#allocation36], %s280
      %s282 = sshll.u32 [#allocation35], 4
      %s283 = int_to_ptr.vmem [resolvable:$true] %s282
      %288 = dma.hbm_to_vmem [thread:$0]  %s21, 512, %s283, [#allocation36], 128, 128, 8
    $region89: #{tpu_custom_call.1} parent=1 // pred_fallthru
      _
    // Predicated region
    $region90: #{tpu_custom_call.1} parent=1 // pred_check
      _
    $region91: #{tpu_custom_call.1} parent=1 // pred_check_branch
      %290 = sbr.rel (0) target = $region93
    $region92: #{tpu_custom_call.1} parent=1 // pred_region
      %s292 = ssub.s32 128, 128
      %293 = vsyncadd [#allocation36], %s292
      %s295 = sshll.u32 [#allocation37], 4
      %s296 = int_to_ptr.vmem [resolvable:$true] %s295
      %298 = dma.hbm_to_vmem [thread:$0]  %s22, 128, %s296, [#allocation36]
    $region93: #{tpu_custom_call.1} parent=1 // pred_fallthru
      _
    // Predicated region
    $region94: #{tpu_custom_call.1} parent=1 // pred_check
      _
    $region95: #{tpu_custom_call.1} parent=1 // pred_check_branch
      %300 = sbr.rel (0) target = $region97
    $region96: #{tpu_custom_call.1} parent=1 // pred_region
      %s302 = ssub.s32 128, 128
      %303 = vsyncadd [#allocation39], %s302
      %s305 = sshll.u32 [#allocation38], 4
      %s306 = int_to_ptr.vmem [resolvable:$true] %s305
      %308 = dma.hbm_to_vmem [thread:$0]  %s23, 128, %s306, [#allocation39]
    $region97: #{tpu_custom_call.1} parent=1 // pred_fallthru
      _
    // Predicated region
    $region98: #{tpu_custom_call.1} parent=1 // pred_check
      _
    $region99: #{tpu_custom_call.1} parent=1 // pred_check_branch
      %310 = sbr.rel (0) target = $region101
    $region100: #{tpu_custom_call.1} parent=1 // pred_region
      %311 = dma.done [#allocation3], 256
    $region101: #{tpu_custom_call.1} parent=1 // pred_fallthru
      _
    // Predicated region
    $region102: #{tpu_custom_call.1} parent=1 // pred_check
      _
    $region103: #{tpu_custom_call.1} parent=1 // pred_check_branch
      %313 = sbr.rel (0) target = $region105
    $region104: #{tpu_custom_call.1} parent=1 // pred_region
      %314 = dma.done [#allocation6], 256
    $region105: #{tpu_custom_call.1} parent=1 // pred_fallthru
      _
    // Predicated region
    $region106: #{tpu_custom_call.1} parent=1 // pred_check
      _
    $region107: #{tpu_custom_call.1} parent=1 // pred_check_branch
      %316 = sbr.rel (0) target = $region109
    $region108: #{tpu_custom_call.1} parent=1 // pred_region
      %317 = dma.done [#allocation6], 128
    $region109: #{tpu_custom_call.1} parent=1 // pred_fallthru
      _
    // Predicated region
    $region110: #{tpu_custom_call.1} parent=1 // pred_check
      _
    $region111: #{tpu_custom_call.1} parent=1 // pred_check_branch
      %319 = sbr.rel (0) target = $region113
    $region112: #{tpu_custom_call.1} parent=1 // pred_region
      %320 = dma.done [#allocation9], 512
    $region113: #{tpu_custom_call.1} parent=1 // pred_fallthru
      _
    // Predicated region
    $region114: #{tpu_custom_call.1} parent=1 // pred_check
      _
    $region115: #{tpu_custom_call.1} parent=1 // pred_check_branch
      %322 = sbr.rel (0) target = $region117
    $region116: #{tpu_custom_call.1} parent=1 // pred_region
      %323 = dma.done [#allocation9], 512
    $region117: #{tpu_custom_call.1} parent=1 // pred_fallthru
      _
    // Predicated region
    $region118: #{tpu_custom_call.1} parent=1 // pred_check
      _
    $region119: #{tpu_custom_call.1} parent=1 // pred_check_branch
      %325 = sbr.rel (0) target = $region121
    $region120: #{tpu_custom_call.1} parent=1 // pred_region
      %326 = dma.done [#allocation12], 16
    $region121: #{tpu_custom_call.1} parent=1 // pred_fallthru
      _
    // Predicated region
    $region122: #{tpu_custom_call.1} parent=1 // pred_check
      _
    $region123: #{tpu_custom_call.1} parent=1 // pred_check_branch
      %328 = sbr.rel (0) target = $region125
    $region124: #{tpu_custom_call.1} parent=1 // pred_region
      %329 = dma.done [#allocation12], 512
    $region125: #{tpu_custom_call.1} parent=1 // pred_fallthru
      _
    // Predicated region
    $region126: #{tpu_custom_call.1} parent=1 // pred_check
      _
    $region127: #{tpu_custom_call.1} parent=1 // pred_check_branch
      %331 = sbr.rel (0) target = $region129
    $region128: #{tpu_custom_call.1} parent=1 // pred_region
      %332 = dma.done [#allocation15], 512
    $region129: #{tpu_custom_call.1} parent=1 // pred_fallthru
      _
    // Predicated region
    $region130: #{tpu_custom_call.1} parent=1 // pred_check
      _
    $region131: #{tpu_custom_call.1} parent=1 // pred_check_branch
      %334 = sbr.rel (0) target = $region133
    $region132: #{tpu_custom_call.1} parent=1 // pred_region
      %335 = dma.done [#allocation15], 16
    $region133: #{tpu_custom_call.1} parent=1 // pred_fallthru
      _
    // Predicated region
    $region134: #{tpu_custom_call.1} parent=1 // pred_check
      _
    $region135: #{tpu_custom_call.1} parent=1 // pred_check_branch
      %337 = sbr.rel (0) target = $region137
    $region136: #{tpu_custom_call.1} parent=1 // pred_region
      %338 = dma.done [#allocation18], 512
    $region137: #{tpu_custom_call.1} parent=1 // pred_fallthru
      _
    // Predicated region
    $region138: #{tpu_custom_call.1} parent=1 // pred_check
      _
    $region139: #{tpu_custom_call.1} parent=1 // pred_check_branch
      %340 = sbr.rel (0) target = $region141
    $region140: #{tpu_custom_call.1} parent=1 // pred_region
      %341 = dma.done [#allocation18], 16
    $region141: #{tpu_custom_call.1} parent=1 // pred_fallthru
      _
    // Predicated region
    $region142: #{tpu_custom_call.1} parent=1 // pred_check
      _
    $region143: #{tpu_custom_call.1} parent=1 // pred_check_branch
      %343 = sbr.rel (0) target = $region145
    $region144: #{tpu_custom_call.1} parent=1 // pred_region
      %344 = dma.done [#allocation21], 512
    $region145: #{tpu_custom_call.1} parent=1 // pred_fallthru
      _
    // Predicated region
    $region146: #{tpu_custom_call.1} parent=1 // pred_check
      _
    $region147: #{tpu_custom_call.1} parent=1 // pred_check_branch
      %346 = sbr.rel (0) target = $region149
    $region148: #{tpu_custom_call.1} parent=1 // pred_region
      %347 = dma.done [#allocation21], 16
    $region149: #{tpu_custom_call.1} parent=1 // pred_fallthru
      _
    // Predicated region
    $region150: #{tpu_custom_call.1} parent=1 // pred_check
      _
    $region151: #{tpu_custom_call.1} parent=1 // pred_check_branch
      %349 = sbr.rel (0) target = $region153
    $region152: #{tpu_custom_call.1} parent=1 // pred_region
      %350 = dma.done [#allocation24], 512
    $region153: #{tpu_custom_call.1} parent=1 // pred_fallthru
      _
    // Predicated region
    $region154: #{tpu_custom_call.1} parent=1 // pred_check
      _
    $region155: #{tpu_custom_call.1} parent=1 // pred_check_branch
      %352 = sbr.rel (0) target = $region157
    $region156: #{tpu_custom_call.1} parent=1 // pred_region
      %353 = dma.done [#allocation24], 16
    $region157: #{tpu_custom_call.1} parent=1 // pred_fallthru
      _
    // Predicated region
    $region158: #{tpu_custom_call.1} parent=1 // pred_check
      _
    $region159: #{tpu_custom_call.1} parent=1 // pred_check_branch
      %355 = sbr.rel (0) target = $region161
    $region160: #{tpu_custom_call.1} parent=1 // pred_region
      %356 = dma.done [#allocation27], 512
    $region161: #{tpu_custom_call.1} parent=1 // pred_fallthru
      _
    // Predicated region
    $region162: #{tpu_custom_call.1} parent=1 // pred_check
      _
    $region163: #{tpu_custom_call.1} parent=1 // pred_check_branch
      %358 = sbr.rel (0) target = $region165
    $region164: #{tpu_custom_call.1} parent=1 // pred_region
      %359 = dma.done [#allocation27], 16
    $region165: #{tpu_custom_call.1} parent=1 // pred_fallthru
      _
    // Predicated region
    $region166: #{tpu_custom_call.1} parent=1 // pred_check
      _
    $region167: #{tpu_custom_call.1} parent=1 // pred_check_branch
      %361 = sbr.rel (0) target = $region169
    $region168: #{tpu_custom_call.1} parent=1 // pred_region
      %362 = dma.done [#allocation30], 16
    $region169: #{tpu_custom_call.1} parent=1 // pred_fallthru
      _
    // Predicated region
    $region170: #{tpu_custom_call.1} parent=1 // pred_check
      _
    $region171: #{tpu_custom_call.1} parent=1 // pred_check_branch
      %364 = sbr.rel (0) target = $region173
    $region172: #{tpu_custom_call.1} parent=1 // pred_region
      %365 = dma.done [#allocation30], 16
    $region173: #{tpu_custom_call.1} parent=1 // pred_fallthru
      _
    // Predicated region
    $region174: #{tpu_custom_call.1} parent=1 // pred_check
      _
    $region175: #{tpu_custom_call.1} parent=1 // pred_check_branch
      %367 = sbr.rel (0) target = $region177
    $region176: #{tpu_custom_call.1} parent=1 // pred_region
      %368 = dma.done [#allocation33], 512
    $region177: #{tpu_custom_call.1} parent=1 // pred_fallthru
      _
    // Predicated region
    $region178: #{tpu_custom_call.1} parent=1 // pred_check
      _
    $region179: #{tpu_custom_call.1} parent=1 // pred_check_branch
      %370 = sbr.rel (0) target = $region181
    $region180: #{tpu_custom_call.1} parent=1 // pred_region
      %371 = dma.done [#allocation33], 1024
    $region181: #{tpu_custom_call.1} parent=1 // pred_fallthru
      _
    // Predicated region
    $region182: #{tpu_custom_call.1} parent=1 // pred_check
      _
    $region183: #{tpu_custom_call.1} parent=1 // pred_check_branch
      %373 = sbr.rel (0) target = $region185
    $region184: #{tpu_custom_call.1} parent=1 // pred_region
      %374 = dma.done [#allocation36], 512
    $region185: #{tpu_custom_call.1} parent=1 // pred_fallthru
      _
    // Predicated region
    $region186: #{tpu_custom_call.1} parent=1 // pred_check
      _
    $region187: #{tpu_custom_call.1} parent=1 // pred_check_branch
      %376 = sbr.rel (0) target = $region189
    $region188: #{tpu_custom_call.1} parent=1 // pred_region
      %377 = dma.done [#allocation36], 128
    $region189: #{tpu_custom_call.1} parent=1 // pred_fallthru
      _
    // Predicated region
    $region190: #{tpu_custom_call.1} parent=1 // pred_check
      _
    $region191: #{tpu_custom_call.1} parent=1 // pred_check_branch
      %379 = sbr.rel (0) target = $region193
    $region192: #{tpu_custom_call.1} parent=1 // pred_region
      %380 = dma.done [#allocation39], 128
    $region193: #{tpu_custom_call.1} parent=1 // pred_fallthru
      _
    %v381 = vld [vmem:[#allocation2] sm:$0xff]
    %v382 = vld [vmem:[#allocation2 + $0x8] sm:$0xff]
    %v383 = vld [vmem:[#allocation5] sm:$0xff]
    %v384 = vld [vmem:[#allocation5 + $0x8] sm:$0xff]
    %v385 = vld [vmem:[#allocation8] sm:$0xff]
    %v386 = vld [vmem:[#allocation8 + $0x8] sm:$0xff]
    %v387 = vld [vmem:[#allocation8 + $0x10] sm:$0xff]
    %v388 = vld [vmem:[#allocation8 + $0x18] sm:$0xff]
    %v389 = vld [vmem:[#allocation10] sm:$0xff]
    %v390 = vld [vmem:[#allocation10 + $0x8] sm:$0xff]
    %v391 = vld [vmem:[#allocation10 + $0x10] sm:$0xff]
    %v392 = vld [vmem:[#allocation10 + $0x18] sm:$0xff]
    %v393 = vld [vmem:[#allocation11] sm:$0x1]
    %vm394 = vcmask 130048
    %v396 = vsel %vm394, %v381, 0
    %v399 = vsel %vm394, %v382, 0
    %401 = vmatprep.subr.mxu0 0.0
    %402 = vmatpush1.msra.mxu0 %v383
    %403 = vmatprep.subr.mxu0 0.0
    %404 = vmatpush1.msra.mxu0 %v384
    %405 = vmatprep.subr.mxu0 0.0
    %406 = vmatpush1.msra.mxu0 0.0
    %407 = vmatprep.subr.mxu0 0.0
    %408 = vmatpush1.msra.mxu0 0.0
    %409 = vmatprep.subr.mxu0 0.0
    %410 = vmatpush1.msra.mxu0 0.0
    %411 = vmatprep.subr.mxu0 0.0
    %412 = vmatpush1.msra.mxu0 0.0
    %413 = vmatprep.subr.mxu0 0.0
    %414 = vmatpush1.msra.mxu0 0.0
    %415 = vmatprep.subr.mxu0 0.0
    %416 = vmatpush1.msra.mxu0 0.0
    %417 = vmatprep.subr.mxu0 0.0
    %418 = vmatpush1.msra.mxu0 0.0
    %419 = vmatprep.subr.mxu0 0.0
    %420 = vmatpush1.msra.mxu0 0.0
    %421 = vmatprep.subr.mxu0 0.0
    %422 = vmatpush1.msra.mxu0 0.0
    %423 = vmatprep.subr.mxu0 0.0
    %424 = vmatpush1.msra.mxu0 0.0
    %425 = vmatprep.subr.mxu0 0.0
    %426 = vmatpush1.msra.mxu0 0.0
    %427 = vmatprep.subr.mxu0 0.0
    %428 = vmatpush1.msra.mxu0 0.0
    %429 = vmatprep.subr.mxu0 0.0
    %430 = vmatpush1.msra.mxu0 0.0
    %431 = vmatprep.subr.mxu0 0.0
    %432 = vmatpush1.msra.mxu0 0.0
    %433 = vmatprep.subr.mxu0 0.0
    %434 = vmatpush1.msra.mxu0 0.0
    %435 = vmatprep.subr.mxu0 0.0
    %436 = vmatpush1.msra.mxu0 0.0
    %437 = vmatprep.subr.mxu0 0.0
    %438 = vmatpush1.msra.mxu0 0.0
    %439 = vmatprep.subr.mxu0 0.0
    %440 = vmatpush1.msra.mxu0 0.0
    %441 = vmatprep.subr.mxu0 0.0
    %442 = vmatpush1.msra.mxu0 0.0
    %443 = vmatprep.subr.mxu0 0.0
    %444 = vmatpush1.msra.mxu0 0.0
    %445 = vmatprep.subr.mxu0 0.0
    %446 = vmatpush1.msra.mxu0 0.0
    %447 = vmatprep.subr.mxu0 0.0
    %448 = vmatpush1.msra.mxu0 0.0
    %449 = vmatprep.subr.mxu0 0.0
    %450 = vmatpush1.msra.mxu0 0.0
    %451 = vmatprep.subr.mxu0 0.0
    %452 = vmatpush1.msra.mxu0 0.0
    %453 = vmatprep.subr.mxu0 0.0
    %454 = vmatpush1.msra.mxu0 0.0
    %455 = vmatprep.subr.mxu0 0.0
    %456 = vmatpush1.msra.mxu0 0.0
    %457 = vmatprep.subr.mxu0 0.0
    %458 = vmatpush1.msra.mxu0 0.0
    %459 = vmatprep.subr.mxu0 0.0
    %460 = vmatpush1.msra.mxu0 0.0
    %461 = vmatprep.subr.mxu0 0.0
    %462 = vmatpush1.msra.mxu0 0.0
    %463 = vmatprep.subr.mxu0 0.0
    %464 = vmatpush1.msra.mxu0 0.0
    %465 = vmatprep.mubr.f32.mxu0 0.0
    %466 = vmatmul.mubr.f32.gmra.mrb[0].mxu0 %v396
    %v467 = vpop.f32.mrb[0].mxu0
    %v468 = vadd.f32 0.0, %v467
    %v469 = vpop.f32.mrb[0].mxu0
    %470 = vmatprep.mubr.f32.mxu0 0.0
    %471 = vmatmul.mubr.f32.gmra.mrb[0].mxu0 %v399
    %v472 = vpop.f32.mrb[0].mxu0
    %v473 = vadd.f32 0.0, %v472
    %v474 = vpop.f32.mrb[0].mxu0
    %475 = vdwg.mxu0
    %vm476 = vcmask 261120
    %v478 = vsel %vm476, %v383, 0
    %v481 = vsel %vm476, %v384, 0
    %483 = vmatprep.subr.mxu0 0.0
    %484 = vmatpush1.msra.mxu0 %v389
    %485 = vmatprep.subr.mxu0 0.0
    %486 = vmatpush1.msra.mxu0 %v390
    %487 = vmatprep.subr.mxu0 0.0
    %488 = vmatpush1.msra.mxu0 %v391
    %489 = vmatprep.subr.mxu0 0.0
    %490 = vmatpush1.msra.mxu0 %v392
    %491 = vmatprep.subr.mxu0 0.0
    %492 = vmatpush1.msra.mxu0 0.0
    %493 = vmatprep.subr.mxu0 0.0
    %494 = vmatpush1.msra.mxu0 0.0
    %495 = vmatprep.subr.mxu0 0.0
    %496 = vmatpush1.msra.mxu0 0.0
    %497 = vmatprep.subr.mxu0 0.0
    %498 = vmatpush1.msra.mxu0 0.0
    %499 = vmatprep.subr.mxu0 0.0
    %500 = vmatpush1.msra.mxu0 0.0
    %501 = vmatprep.subr.mxu0 0.0
    %502 = vmatpush1.msra.mxu0 0.0
    %503 = vmatprep.subr.mxu0 0.0
    %504 = vmatpush1.msra.mxu0 0.0
    %505 = vmatprep.subr.mxu0 0.0
    %506 = vmatpush1.msra.mxu0 0.0
    %507 = vmatprep.subr.mxu0 0.0
    %508 = vmatpush1.msra.mxu0 0.0
    %509 = vmatprep.subr.mxu0 0.0
    %510 = vmatpush1.msra.mxu0 0.0
    %511 = vmatprep.subr.mxu0 0.0
    %512 = vmatpush1.msra.mxu0 0.0
    %513 = vmatprep.subr.mxu0 0.0
    %514 = vmatpush1.msra.mxu0 0.0
    %515 = vmatprep.subr.mxu0 0.0
    %516 = vmatpush1.msra.mxu0 0.0
    %517 = vmatprep.subr.mxu0 0.0
    %518 = vmatpush1.msra.mxu0 0.0
    %519 = vmatprep.subr.mxu0 0.0
    %520 = vmatpush1.msra.mxu0 0.0
    %521 = vmatprep.subr.mxu0 0.0
    %522 = vmatpush1.msra.mxu0 0.0
    %523 = vmatprep.subr.mxu0 0.0
    %524 = vmatpush1.msra.mxu0 0.0
    %525 = vmatprep.subr.mxu0 0.0
    %526 = vmatpush1.msra.mxu0 0.0
    %527 = vmatprep.subr.mxu0 0.0
    %528 = vmatpush1.msra.mxu0 0.0
    %529 = vmatprep.subr.mxu0 0.0
    %530 = vmatpush1.msra.mxu0 0.0
    %531 = vmatprep.subr.mxu0 0.0
    %532 = vmatpush1.msra.mxu0 0.0
    %533 = vmatprep.subr.mxu0 0.0
    %534 = vmatpush1.msra.mxu0 0.0
    %535 = vmatprep.subr.mxu0 0.0
    %536 = vmatpush1.msra.mxu0 0.0
    %537 = vmatprep.subr.mxu0 0.0
    %538 = vmatpush1.msra.mxu0 0.0
    %539 = vmatprep.subr.mxu0 0.0
    %540 = vmatpush1.msra.mxu0 0.0
    %541 = vmatprep.subr.mxu0 0.0
    %542 = vmatpush1.msra.mxu0 0.0
    %543 = vmatprep.subr.mxu0 0.0
    %544 = vmatpush1.msra.mxu0 0.0
    %545 = vmatprep.subr.mxu0 0.0
    %546 = vmatpush1.msra.mxu0 0.0
    %547 = vmatprep.mubr.f32.mxu0 0.0
    %548 = vmatmul.mubr.f32.gmra.mrb[0].mxu0 %v478
    %v549 = vpop.f32.mrb[0].mxu0
    %v550 = vadd.f32 0.0, %v549
    %v551 = vpop.f32.mrb[0].mxu0
    %552 = vmatprep.mubr.f32.mxu0 0.0
    %553 = vmatmul.mubr.f32.gmra.mrb[0].mxu0 %v481
    %v554 = vpop.f32.mrb[0].mxu0
    %v555 = vadd.f32 0.0, %v554
    %v556 = vpop.f32.mrb[0].mxu0
    %557 = vdwg.mxu0
    %v559 = vsel %vm476, %v468, 0
    %v562 = vsel %vm476, %v473, 0
    %564 = vmatprep.subr.mxu0 0.0
    %565 = vmatpush1.msra.mxu0 %v385
    %566 = vmatprep.subr.mxu0 0.0
    %567 = vmatpush1.msra.mxu0 %v386
    %568 = vmatprep.subr.mxu0 0.0
    %569 = vmatpush1.msra.mxu0 %v387
    %570 = vmatprep.subr.mxu0 0.0
    %571 = vmatpush1.msra.mxu0 %v388
    %572 = vmatprep.subr.mxu0 0.0
    %573 = vmatpush1.msra.mxu0 0.0
    %574 = vmatprep.subr.mxu0 0.0
    %575 = vmatpush1.msra.mxu0 0.0
    %576 = vmatprep.subr.mxu0 0.0
    %577 = vmatpush1.msra.mxu0 0.0
    %578 = vmatprep.subr.mxu0 0.0
    %579 = vmatpush1.msra.mxu0 0.0
    %580 = vmatprep.subr.mxu0 0.0
    %581 = vmatpush1.msra.mxu0 0.0
    %582 = vmatprep.subr.mxu0 0.0
    %583 = vmatpush1.msra.mxu0 0.0
    %584 = vmatprep.subr.mxu0 0.0
    %585 = vmatpush1.msra.mxu0 0.0
    %586 = vmatprep.subr.mxu0 0.0
    %587 = vmatpush1.msra.mxu0 0.0
    %588 = vmatprep.subr.mxu0 0.0
    %589 = vmatpush1.msra.mxu0 0.0
    %590 = vmatprep.subr.mxu0 0.0
    %591 = vmatpush1.msra.mxu0 0.0
    %592 = vmatprep.subr.mxu0 0.0
    %593 = vmatpush1.msra.mxu0 0.0
    %594 = vmatprep.subr.mxu0 0.0
    %595 = vmatpush1.msra.mxu0 0.0
    %596 = vmatprep.subr.mxu0 0.0
    %597 = vmatpush1.msra.mxu0 0.0
    %598 = vmatprep.subr.mxu0 0.0
    %599 = vmatpush1.msra.mxu0 0.0
    %600 = vmatprep.subr.mxu0 0.0
    %601 = vmatpush1.msra.mxu0 0.0
    %602 = vmatprep.subr.mxu0 0.0
    %603 = vmatpush1.msra.mxu0 0.0
    %604 = vmatprep.subr.mxu0 0.0
    %605 = vmatpush1.msra.mxu0 0.0
    %606 = vmatprep.subr.mxu0 0.0
    %607 = vmatpush1.msra.mxu0 0.0
    %608 = vmatprep.subr.mxu0 0.0
    %609 = vmatpush1.msra.mxu0 0.0
    %610 = vmatprep.subr.mxu0 0.0
    %611 = vmatpush1.msra.mxu0 0.0
    %612 = vmatprep.subr.mxu0 0.0
    %613 = vmatpush1.msra.mxu0 0.0
    %614 = vmatprep.subr.mxu0 0.0
    %615 = vmatpush1.msra.mxu0 0.0
    %616 = vmatprep.subr.mxu0 0.0
    %617 = vmatpush1.msra.mxu0 0.0
    %618 = vmatprep.subr.mxu0 0.0
    %619 = vmatpush1.msra.mxu0 0.0
    %620 = vmatprep.subr.mxu0 0.0
    %621 = vmatpush1.msra.mxu0 0.0
    %622 = vmatprep.subr.mxu0 0.0
    %623 = vmatpush1.msra.mxu0 0.0
    %624 = vmatprep.subr.mxu0 0.0
    %625 = vmatpush1.msra.mxu0 0.0
    %626 = vmatprep.subr.mxu0 0.0
    %627 = vmatpush1.msra.mxu0 0.0
    %628 = vmatprep.mubr.f32.mxu0 0.0
    %629 = vmatmul.mubr.f32.gmra.mrb[0].mxu0 %v559
    %v630 = vpop.f32.mrb[0].mxu0
    %v631 = vadd.f32 %v550, %v630
    %v632 = vpop.f32.mrb[0].mxu0
    %633 = vmatprep.mubr.f32.mxu0 0.0
    %634 = vmatmul.mubr.f32.gmra.mrb[0].mxu0 %v562
    %v635 = vpop.f32.mrb[0].mxu0
    %v636 = vadd.f32 %v555, %v635
    %v637 = vpop.f32.mrb[0].mxu0
    %638 = vdwg.mxu0
    %v640 = vlaneseq
    %v641 = vshrl.u32 %v640, 7
    %v642 = vsub.s32 0, %v641
    %v643 = vrot.slane %v393, %v642
    %v645 = vadd.f32 %v631, %v643
    %v646 = vadd.f32 %v636, %v643
    %v647 = vld [vmem:[#allocation13] sm:$0xff]
    %v648 = vld [vmem:[#allocation13 + $0x8] sm:$0xff]
    %v649 = vld [vmem:[#allocation13 + $0x10] sm:$0xff]
    %v650 = vld [vmem:[#allocation13 + $0x18] sm:$0xff]
    %v651 = vld [vmem:[#allocation14] sm:$0xff]
    %v652 = vld [vmem:[#allocation14 + $0x8] sm:$0xff]
    %v653 = vld [vmem:[#allocation14 + $0x10] sm:$0xff]
    %v654 = vld [vmem:[#allocation14 + $0x18] sm:$0xff]
    %v655 = vld [vmem:[#allocation16] sm:$0x1]
    %656 = vmatprep.subr.mxu0 0.0
    %657 = vmatpush1.msra.mxu0 %v645
    %658 = vmatprep.subr.mxu0 0.0
    %659 = vmatpush1.msra.mxu0 %v646
    %660 = vmatprep.subr.mxu0 0.0
    %661 = vmatpush1.msra.mxu0 0.0
    %662 = vmatprep.subr.mxu0 0.0
    %663 = vmatpush1.msra.mxu0 0.0
    %664 = vmatprep.subr.mxu0 0.0
    %665 = vmatpush1.msra.mxu0 0.0
    %666 = vmatprep.subr.mxu0 0.0
    %667 = vmatpush1.msra.mxu0 0.0
    %668 = vmatprep.subr.mxu0 0.0
    %669 = vmatpush1.msra.mxu0 0.0
    %670 = vmatprep.subr.mxu0 0.0
    %671 = vmatpush1.msra.mxu0 0.0
    %672 = vmatprep.subr.mxu0 0.0
    %673 = vmatpush1.msra.mxu0 0.0
    %674 = vmatprep.subr.mxu0 0.0
    %675 = vmatpush1.msra.mxu0 0.0
    %676 = vmatprep.subr.mxu0 0.0
    %677 = vmatpush1.msra.mxu0 0.0
    %678 = vmatprep.subr.mxu0 0.0
    %679 = vmatpush1.msra.mxu0 0.0
    %680 = vmatprep.subr.mxu0 0.0
    %681 = vmatpush1.msra.mxu0 0.0
    %682 = vmatprep.subr.mxu0 0.0
    %683 = vmatpush1.msra.mxu0 0.0
    %684 = vmatprep.subr.mxu0 0.0
    %685 = vmatpush1.msra.mxu0 0.0
    %686 = vmatprep.subr.mxu0 0.0
    %687 = vmatpush1.msra.mxu0 0.0
    %688 = vmatprep.subr.mxu0 0.0
    %689 = vmatpush1.msra.mxu0 0.0
    %690 = vmatprep.subr.mxu0 0.0
    %691 = vmatpush1.msra.mxu0 0.0
    %692 = vmatprep.subr.mxu0 0.0
    %693 = vmatpush1.msra.mxu0 0.0
    %694 = vmatprep.subr.mxu0 0.0
    %695 = vmatpush1.msra.mxu0 0.0
    %696 = vmatprep.subr.mxu0 0.0
    %697 = vmatpush1.msra.mxu0 0.0
    %698 = vmatprep.subr.mxu0 0.0
    %699 = vmatpush1.msra.mxu0 0.0
    %700 = vmatprep.subr.mxu0 0.0
    %701 = vmatpush1.msra.mxu0 0.0
    %702 = vmatprep.subr.mxu0 0.0
    %703 = vmatpush1.msra.mxu0 0.0
    %704 = vmatprep.subr.mxu0 0.0
    %705 = vmatpush1.msra.mxu0 0.0
    %706 = vmatprep.subr.mxu0 0.0
    %707 = vmatpush1.msra.mxu0 0.0
    %708 = vmatprep.subr.mxu0 0.0
    %709 = vmatpush1.msra.mxu0 0.0
    %710 = vmatprep.subr.mxu0 0.0
    %711 = vmatpush1.msra.mxu0 0.0
    %712 = vmatprep.subr.mxu0 0.0
    %713 = vmatpush1.msra.mxu0 0.0
    %714 = vmatprep.subr.mxu0 0.0
    %715 = vmatpush1.msra.mxu0 0.0
    %716 = vmatprep.subr.mxu0 0.0
    %717 = vmatpush1.msra.mxu0 0.0
    %718 = vmatprep.subr.mxu0 0.0
    %719 = vmatpush1.msra.mxu0 0.0
    %720 = vmatprep.mubr.f32.mxu0 0.0
    %721 = vmatmul.mubr.f32.gmra.mrb[0].mxu0 %v396
    %v722 = vpop.f32.mrb[0].mxu0
    %v723 = vadd.f32 0.0, %v722
    %v724 = vpop.f32.mrb[0].mxu0
    %725 = vmatprep.mubr.f32.mxu0 0.0
    %726 = vmatmul.mubr.f32.gmra.mrb[0].mxu0 %v399
    %v727 = vpop.f32.mrb[0].mxu0
    %v728 = vadd.f32 0.0, %v727
    %v729 = vpop.f32.mrb[0].mxu0
    %730 = vdwg.mxu0
    %v732 = vsel %vm476, %v645, 0
    %v735 = vsel %vm476, %v646, 0
    %737 = vmatprep.subr.mxu0 0.0
    %738 = vmatpush1.msra.mxu0 %v651
    %739 = vmatprep.subr.mxu0 0.0
    %740 = vmatpush1.msra.mxu0 %v652
    %741 = vmatprep.subr.mxu0 0.0
    %742 = vmatpush1.msra.mxu0 %v653
    %743 = vmatprep.subr.mxu0 0.0
    %744 = vmatpush1.msra.mxu0 %v654
    %745 = vmatprep.subr.mxu0 0.0
    %746 = vmatpush1.msra.mxu0 0.0
    %747 = vmatprep.subr.mxu0 0.0
    %748 = vmatpush1.msra.mxu0 0.0
    %749 = vmatprep.subr.mxu0 0.0
    %750 = vmatpush1.msra.mxu0 0.0
    %751 = vmatprep.subr.mxu0 0.0
    %752 = vmatpush1.msra.mxu0 0.0
    %753 = vmatprep.subr.mxu0 0.0
    %754 = vmatpush1.msra.mxu0 0.0
    %755 = vmatprep.subr.mxu0 0.0
    %756 = vmatpush1.msra.mxu0 0.0
    %757 = vmatprep.subr.mxu0 0.0
    %758 = vmatpush1.msra.mxu0 0.0
    %759 = vmatprep.subr.mxu0 0.0
    %760 = vmatpush1.msra.mxu0 0.0
    %761 = vmatprep.subr.mxu0 0.0
    %762 = vmatpush1.msra.mxu0 0.0
    %763 = vmatprep.subr.mxu0 0.0
    %764 = vmatpush1.msra.mxu0 0.0
    %765 = vmatprep.subr.mxu0 0.0
    %766 = vmatpush1.msra.mxu0 0.0
    %767 = vmatprep.subr.mxu0 0.0
    %768 = vmatpush1.msra.mxu0 0.0
    %769 = vmatprep.subr.mxu0 0.0
    %770 = vmatpush1.msra.mxu0 0.0
    %771 = vmatprep.subr.mxu0 0.0
    %772 = vmatpush1.msra.mxu0 0.0
    %773 = vmatprep.subr.mxu0 0.0
    %774 = vmatpush1.msra.mxu0 0.0
    %775 = vmatprep.subr.mxu0 0.0
    %776 = vmatpush1.msra.mxu0 0.0
    %777 = vmatprep.subr.mxu0 0.0
    %778 = vmatpush1.msra.mxu0 0.0
    %779 = vmatprep.subr.mxu0 0.0
    %780 = vmatpush1.msra.mxu0 0.0
    %781 = vmatprep.subr.mxu0 0.0
    %782 = vmatpush1.msra.mxu0 0.0
    %783 = vmatprep.subr.mxu0 0.0
    %784 = vmatpush1.msra.mxu0 0.0
    %785 = vmatprep.subr.mxu0 0.0
    %786 = vmatpush1.msra.mxu0 0.0
    %787 = vmatprep.subr.mxu0 0.0
    %788 = vmatpush1.msra.mxu0 0.0
    %789 = vmatprep.subr.mxu0 0.0
    %790 = vmatpush1.msra.mxu0 0.0
    %791 = vmatprep.subr.mxu0 0.0
    %792 = vmatpush1.msra.mxu0 0.0
    %793 = vmatprep.subr.mxu0 0.0
    %794 = vmatpush1.msra.mxu0 0.0
    %795 = vmatprep.subr.mxu0 0.0
    %796 = vmatpush1.msra.mxu0 0.0
    %797 = vmatprep.subr.mxu0 0.0
    %798 = vmatpush1.msra.mxu0 0.0
    %799 = vmatprep.subr.mxu0 0.0
    %800 = vmatpush1.msra.mxu0 0.0
    %801 = vmatprep.mubr.f32.mxu0 0.0
    %802 = vmatmul.mubr.f32.gmra.mrb[0].mxu0 %v732
    %v803 = vpop.f32.mrb[0].mxu0
    %v804 = vadd.f32 0.0, %v803
    %v805 = vpop.f32.mrb[0].mxu0
    %806 = vmatprep.mubr.f32.mxu0 0.0
    %807 = vmatmul.mubr.f32.gmra.mrb[0].mxu0 %v735
    %v808 = vpop.f32.mrb[0].mxu0
    %v809 = vadd.f32 0.0, %v808
    %v810 = vpop.f32.mrb[0].mxu0
    %811 = vdwg.mxu0
    %v813 = vsel %vm476, %v723, 0
    %v816 = vsel %vm476, %v728, 0
    %818 = vmatprep.subr.mxu0 0.0
    %819 = vmatpush1.msra.mxu0 %v647
    %820 = vmatprep.subr.mxu0 0.0
    %821 = vmatpush1.msra.mxu0 %v648
    %822 = vmatprep.subr.mxu0 0.0
    %823 = vmatpush1.msra.mxu0 %v649
    %824 = vmatprep.subr.mxu0 0.0
    %825 = vmatpush1.msra.mxu0 %v650
    %826 = vmatprep.subr.mxu0 0.0
    %827 = vmatpush1.msra.mxu0 0.0
    %828 = vmatprep.subr.mxu0 0.0
    %829 = vmatpush1.msra.mxu0 0.0
    %830 = vmatprep.subr.mxu0 0.0
    %831 = vmatpush1.msra.mxu0 0.0
    %832 = vmatprep.subr.mxu0 0.0
    %833 = vmatpush1.msra.mxu0 0.0
    %834 = vmatprep.subr.mxu0 0.0
    %835 = vmatpush1.msra.mxu0 0.0
    %836 = vmatprep.subr.mxu0 0.0
    %837 = vmatpush1.msra.mxu0 0.0
    %838 = vmatprep.subr.mxu0 0.0
    %839 = vmatpush1.msra.mxu0 0.0
    %840 = vmatprep.subr.mxu0 0.0
    %841 = vmatpush1.msra.mxu0 0.0
    %842 = vmatprep.subr.mxu0 0.0
    %843 = vmatpush1.msra.mxu0 0.0
    %844 = vmatprep.subr.mxu0 0.0
    %845 = vmatpush1.msra.mxu0 0.0
    %846 = vmatprep.subr.mxu0 0.0
    %847 = vmatpush1.msra.mxu0 0.0
    %848 = vmatprep.subr.mxu0 0.0
    %849 = vmatpush1.msra.mxu0 0.0
    %850 = vmatprep.subr.mxu0 0.0
    %851 = vmatpush1.msra.mxu0 0.0
    %852 = vmatprep.subr.mxu0 0.0
    %853 = vmatpush1.msra.mxu0 0.0
    %854 = vmatprep.subr.mxu0 0.0
    %855 = vmatpush1.msra.mxu0 0.0
    %856 = vmatprep.subr.mxu0 0.0
    %857 = vmatpush1.msra.mxu0 0.0
    %858 = vmatprep.subr.mxu0 0.0
    %859 = vmatpush1.msra.mxu0 0.0
    %860 = vmatprep.subr.mxu0 0.0
    %861 = vmatpush1.msra.mxu0 0.0
    %862 = vmatprep.subr.mxu0 0.0
    %863 = vmatpush1.msra.mxu0 0.0
    %864 = vmatprep.subr.mxu0 0.0
    %865 = vmatpush1.msra.mxu0 0.0
    %866 = vmatprep.subr.mxu0 0.0
    %867 = vmatpush1.msra.mxu0 0.0
    %868 = vmatprep.subr.mxu0 0.0
    %869 = vmatpush1.msra.mxu0 0.0
    %870 = vmatprep.subr.mxu0 0.0
    %871 = vmatpush1.msra.mxu0 0.0
    %872 = vmatprep.subr.mxu0 0.0
    %873 = vmatpush1.msra.mxu0 0.0
    %874 = vmatprep.subr.mxu0 0.0
    %875 = vmatpush1.msra.mxu0 0.0
    %876 = vmatprep.subr.mxu0 0.0
    %877 = vmatpush1.msra.mxu0 0.0
    %878 = vmatprep.subr.mxu0 0.0
    %879 = vmatpush1.msra.mxu0 0.0
    %880 = vmatprep.subr.mxu0 0.0
    %881 = vmatpush1.msra.mxu0 0.0
    %882 = vmatprep.mubr.f32.mxu0 0.0
    %883 = vmatmul.mubr.f32.gmra.mrb[0].mxu0 %v813
    %v884 = vpop.f32.mrb[0].mxu0
    %v885 = vadd.f32 %v804, %v884
    %v886 = vpop.f32.mrb[0].mxu0
    %887 = vmatprep.mubr.f32.mxu0 0.0
    %888 = vmatmul.mubr.f32.gmra.mrb[0].mxu0 %v816
    %v889 = vpop.f32.mrb[0].mxu0
    %v890 = vadd.f32 %v809, %v889
    %v891 = vpop.f32.mrb[0].mxu0
    %892 = vdwg.mxu0
    %v894 = vlaneseq
    %v895 = vshrl.u32 %v894, 7
    %v896 = vsub.s32 0, %v895
    %v897 = vrot.slane %v655, %v896
    %v899 = vadd.f32 %v885, %v897
    %v900 = vadd.f32 %v890, %v897
    %v901 = vld [vmem:[#allocation7] sm:$0xff]
    %v902 = vld [vmem:[#allocation17] sm:$0xff]
    %v903 = vld [vmem:[#allocation17 + $0x8] sm:$0xff]
    %v904 = vld [vmem:[#allocation17 + $0x10] sm:$0xff]
    %v905 = vld [vmem:[#allocation17 + $0x18] sm:$0xff]
    %v906 = vld [vmem:[#allocation19] sm:$0x1]
    %v908 = vlaneseq
    %v909 = vshrl.u32 %v908, 7
    %v910 = vsub.s32 0, %v909
    %v911 = vrot.slane %v906, %v910
    %v914 = vsel %vm476, %v899, 0
    %v917 = vsel %vm476, %v900, 0
    %919 = vmatprep.subr.mxu0 0.0
    %920 = vmatpush1.msra.mxu0 %v902
    %921 = vmatprep.subr.mxu0 0.0
    %922 = vmatpush1.msra.mxu0 %v903
    %923 = vmatprep.subr.mxu0 0.0
    %924 = vmatpush1.msra.mxu0 %v904
    %925 = vmatprep.subr.mxu0 0.0
    %926 = vmatpush1.msra.mxu0 %v905
    %927 = vmatprep.subr.mxu0 0.0
    %928 = vmatpush1.msra.mxu0 0.0
    %929 = vmatprep.subr.mxu0 0.0
    %930 = vmatpush1.msra.mxu0 0.0
    %931 = vmatprep.subr.mxu0 0.0
    %932 = vmatpush1.msra.mxu0 0.0
    %933 = vmatprep.subr.mxu0 0.0
    %934 = vmatpush1.msra.mxu0 0.0
    %935 = vmatprep.subr.mxu0 0.0
    %936 = vmatpush1.msra.mxu0 0.0
    %937 = vmatprep.subr.mxu0 0.0
    %938 = vmatpush1.msra.mxu0 0.0
    %939 = vmatprep.subr.mxu0 0.0
    %940 = vmatpush1.msra.mxu0 0.0
    %941 = vmatprep.subr.mxu0 0.0
    %942 = vmatpush1.msra.mxu0 0.0
    %943 = vmatprep.subr.mxu0 0.0
    %944 = vmatpush1.msra.mxu0 0.0
    %945 = vmatprep.subr.mxu0 0.0
    %946 = vmatpush1.msra.mxu0 0.0
    %947 = vmatprep.subr.mxu0 0.0
    %948 = vmatpush1.msra.mxu0 0.0
    %949 = vmatprep.subr.mxu0 0.0
    %950 = vmatpush1.msra.mxu0 0.0
    %951 = vmatprep.subr.mxu0 0.0
    %952 = vmatpush1.msra.mxu0 0.0
    %953 = vmatprep.subr.mxu0 0.0
    %954 = vmatpush1.msra.mxu0 0.0
    %955 = vmatprep.subr.mxu0 0.0
    %956 = vmatpush1.msra.mxu0 0.0
    %957 = vmatprep.subr.mxu0 0.0
    %958 = vmatpush1.msra.mxu0 0.0
    %959 = vmatprep.subr.mxu0 0.0
    %960 = vmatpush1.msra.mxu0 0.0
    %961 = vmatprep.subr.mxu0 0.0
    %962 = vmatpush1.msra.mxu0 0.0
    %963 = vmatprep.subr.mxu0 0.0
    %964 = vmatpush1.msra.mxu0 0.0
    %965 = vmatprep.subr.mxu0 0.0
    %966 = vmatpush1.msra.mxu0 0.0
    %967 = vmatprep.subr.mxu0 0.0
    %968 = vmatpush1.msra.mxu0 0.0
    %969 = vmatprep.subr.mxu0 0.0
    %970 = vmatpush1.msra.mxu0 0.0
    %971 = vmatprep.subr.mxu0 0.0
    %972 = vmatpush1.msra.mxu0 0.0
    %973 = vmatprep.subr.mxu0 0.0
    %974 = vmatpush1.msra.mxu0 0.0
    %975 = vmatprep.subr.mxu0 0.0
    %976 = vmatpush1.msra.mxu0 0.0
    %977 = vmatprep.subr.mxu0 0.0
    %978 = vmatpush1.msra.mxu0 0.0
    %979 = vmatprep.subr.mxu0 0.0
    %980 = vmatpush1.msra.mxu0 0.0
    %981 = vmatprep.subr.mxu0 0.0
    %982 = vmatpush1.msra.mxu0 0.0
    %983 = vmatprep.mubr.f32.mxu0 0.0
    %984 = vmatmul.mubr.f32.gmra.mrb[0].mxu0 %v914
    %v985 = vpop.f32.mrb[0].mxu0
    %v986 = vadd.f32 %v911, %v985
    %v987 = vpop.f32.mrb[0].mxu0
    %988 = vmatprep.mubr.f32.mxu0 0.0
    %989 = vmatmul.mubr.f32.gmra.mrb[0].mxu0 %v917
    %v990 = vpop.f32.mrb[0].mxu0
    %v991 = vadd.f32 %v911, %v990
    %v992 = vpop.f32.mrb[0].mxu0
    %993 = vdwg.mxu0
    %v994 = vld [vmem:[#allocation20] sm:$0xff]
    %v995 = vld [vmem:[#allocation20 + $0x8] sm:$0xff]
    %v996 = vld [vmem:[#allocation20 + $0x10] sm:$0xff]
    %v997 = vld [vmem:[#allocation20 + $0x18] sm:$0xff]
    %v998 = vld [vmem:[#allocation22] sm:$0x1]
    %v1000 = vlaneseq
    %v1001 = vshrl.u32 %v1000, 7
    %v1002 = vsub.s32 0, %v1001
    %v1003 = vrot.slane %v998, %v1002
    %v1006 = vsel %vm476, %v901, 0
    %1008 = vmatprep.subr.mxu0 0.0
    %1009 = vmatpush1.msra.mxu0 %v994
    %1010 = vmatprep.subr.mxu0 0.0
    %1011 = vmatpush1.msra.mxu0 %v995
    %1012 = vmatprep.subr.mxu0 0.0
    %1013 = vmatpush1.msra.mxu0 %v996
    %1014 = vmatprep.subr.mxu0 0.0
    %1015 = vmatpush1.msra.mxu0 %v997
    %1016 = vmatprep.subr.mxu0 0.0
    %1017 = vmatpush1.msra.mxu0 0.0
    %1018 = vmatprep.subr.mxu0 0.0
    %1019 = vmatpush1.msra.mxu0 0.0
    %1020 = vmatprep.subr.mxu0 0.0
    %1021 = vmatpush1.msra.mxu0 0.0
    %1022 = vmatprep.subr.mxu0 0.0
    %1023 = vmatpush1.msra.mxu0 0.0
    %1024 = vmatprep.subr.mxu0 0.0
    %1025 = vmatpush1.msra.mxu0 0.0
    %1026 = vmatprep.subr.mxu0 0.0
    %1027 = vmatpush1.msra.mxu0 0.0
    %1028 = vmatprep.subr.mxu0 0.0
    %1029 = vmatpush1.msra.mxu0 0.0
    %1030 = vmatprep.subr.mxu0 0.0
    %1031 = vmatpush1.msra.mxu0 0.0
    %1032 = vmatprep.subr.mxu0 0.0
    %1033 = vmatpush1.msra.mxu0 0.0
    %1034 = vmatprep.subr.mxu0 0.0
    %1035 = vmatpush1.msra.mxu0 0.0
    %1036 = vmatprep.subr.mxu0 0.0
    %1037 = vmatpush1.msra.mxu0 0.0
    %1038 = vmatprep.subr.mxu0 0.0
    %1039 = vmatpush1.msra.mxu0 0.0
    %1040 = vmatprep.subr.mxu0 0.0
    %1041 = vmatpush1.msra.mxu0 0.0
    %1042 = vmatprep.subr.mxu0 0.0
    %1043 = vmatpush1.msra.mxu0 0.0
    %1044 = vmatprep.subr.mxu0 0.0
    %1045 = vmatpush1.msra.mxu0 0.0
    %1046 = vmatprep.subr.mxu0 0.0
    %1047 = vmatpush1.msra.mxu0 0.0
    %1048 = vmatprep.subr.mxu0 0.0
    %1049 = vmatpush1.msra.mxu0 0.0
    %1050 = vmatprep.subr.mxu0 0.0
    %1051 = vmatpush1.msra.mxu0 0.0
    %1052 = vmatprep.subr.mxu0 0.0
    %1053 = vmatpush1.msra.mxu0 0.0
    %1054 = vmatprep.subr.mxu0 0.0
    %1055 = vmatpush1.msra.mxu0 0.0
    %1056 = vmatprep.subr.mxu0 0.0
    %1057 = vmatpush1.msra.mxu0 0.0
    %1058 = vmatprep.subr.mxu0 0.0
    %1059 = vmatpush1.msra.mxu0 0.0
    %1060 = vmatprep.subr.mxu0 0.0
    %1061 = vmatpush1.msra.mxu0 0.0
    %1062 = vmatprep.subr.mxu0 0.0
    %1063 = vmatpush1.msra.mxu0 0.0
    %1064 = vmatprep.subr.mxu0 0.0
    %1065 = vmatpush1.msra.mxu0 0.0
    %1066 = vmatprep.subr.mxu0 0.0
    %1067 = vmatpush1.msra.mxu0 0.0
    %1068 = vmatprep.subr.mxu0 0.0
    %1069 = vmatpush1.msra.mxu0 0.0
    %1070 = vmatprep.subr.mxu0 0.0
    %1071 = vmatpush1.msra.mxu0 0.0
    %1072 = vmatprep.mubr.f32.mxu0 0.0
    %1073 = vmatmul.mubr.f32.gmra.mrb[0].mxu0 %v1006
    %v1074 = vpop.f32.mrb[0].mxu0
    %v1075 = vadd.f32 %v1003, %v1074
    %v1076 = vpop.f32.mrb[0].mxu0
    %1077 = vdwg.mxu0
    %v1078 = vld [vmem:[#allocation23] sm:$0xff]
    %v1079 = vld [vmem:[#allocation23 + $0x8] sm:$0xff]
    %v1080 = vld [vmem:[#allocation23 + $0x10] sm:$0xff]
    %v1081 = vld [vmem:[#allocation23 + $0x18] sm:$0xff]
    %v1082 = vld [vmem:[#allocation25] sm:$0x1]
    %v1084 = vlaneseq
    %v1085 = vshrl.u32 %v1084, 7
    %v1086 = vsub.s32 0, %v1085
    %v1087 = vrot.slane %v1082, %v1086
    %1089 = vmatprep.subr.mxu0 0.0
    %1090 = vmatpush1.msra.mxu0 %v1078
    %1091 = vmatprep.subr.mxu0 0.0
    %1092 = vmatpush1.msra.mxu0 %v1079
    %1093 = vmatprep.subr.mxu0 0.0
    %1094 = vmatpush1.msra.mxu0 %v1080
    %1095 = vmatprep.subr.mxu0 0.0
    %1096 = vmatpush1.msra.mxu0 %v1081
    %1097 = vmatprep.subr.mxu0 0.0
    %1098 = vmatpush1.msra.mxu0 0.0
    %1099 = vmatprep.subr.mxu0 0.0
    %1100 = vmatpush1.msra.mxu0 0.0
    %1101 = vmatprep.subr.mxu0 0.0
    %1102 = vmatpush1.msra.mxu0 0.0
    %1103 = vmatprep.subr.mxu0 0.0
    %1104 = vmatpush1.msra.mxu0 0.0
    %1105 = vmatprep.subr.mxu0 0.0
    %1106 = vmatpush1.msra.mxu0 0.0
    %1107 = vmatprep.subr.mxu0 0.0
    %1108 = vmatpush1.msra.mxu0 0.0
    %1109 = vmatprep.subr.mxu0 0.0
    %1110 = vmatpush1.msra.mxu0 0.0
    %1111 = vmatprep.subr.mxu0 0.0
    %1112 = vmatpush1.msra.mxu0 0.0
    %1113 = vmatprep.subr.mxu0 0.0
    %1114 = vmatpush1.msra.mxu0 0.0
    %1115 = vmatprep.subr.mxu0 0.0
    %1116 = vmatpush1.msra.mxu0 0.0
    %1117 = vmatprep.subr.mxu0 0.0
    %1118 = vmatpush1.msra.mxu0 0.0
    %1119 = vmatprep.subr.mxu0 0.0
    %1120 = vmatpush1.msra.mxu0 0.0
    %1121 = vmatprep.subr.mxu0 0.0
    %1122 = vmatpush1.msra.mxu0 0.0
    %1123 = vmatprep.subr.mxu0 0.0
    %1124 = vmatpush1.msra.mxu0 0.0
    %1125 = vmatprep.subr.mxu0 0.0
    %1126 = vmatpush1.msra.mxu0 0.0
    %1127 = vmatprep.subr.mxu0 0.0
    %1128 = vmatpush1.msra.mxu0 0.0
    %1129 = vmatprep.subr.mxu0 0.0
    %1130 = vmatpush1.msra.mxu0 0.0
    %1131 = vmatprep.subr.mxu0 0.0
    %1132 = vmatpush1.msra.mxu0 0.0
    %1133 = vmatprep.subr.mxu0 0.0
    %1134 = vmatpush1.msra.mxu0 0.0
    %1135 = vmatprep.subr.mxu0 0.0
    %1136 = vmatpush1.msra.mxu0 0.0
    %1137 = vmatprep.subr.mxu0 0.0
    %1138 = vmatpush1.msra.mxu0 0.0
    %1139 = vmatprep.subr.mxu0 0.0
    %1140 = vmatpush1.msra.mxu0 0.0
    %1141 = vmatprep.subr.mxu0 0.0
    %1142 = vmatpush1.msra.mxu0 0.0
    %1143 = vmatprep.subr.mxu0 0.0
    %1144 = vmatpush1.msra.mxu0 0.0
    %1145 = vmatprep.subr.mxu0 0.0
    %1146 = vmatpush1.msra.mxu0 0.0
    %1147 = vmatprep.subr.mxu0 0.0
    %1148 = vmatpush1.msra.mxu0 0.0
    %1149 = vmatprep.subr.mxu0 0.0
    %1150 = vmatpush1.msra.mxu0 0.0
    %1151 = vmatprep.subr.mxu0 0.0
    %1152 = vmatpush1.msra.mxu0 0.0
    %1153 = vmatprep.mubr.f32.mxu0 0.0
    %1154 = vmatmul.mubr.f32.gmra.mrb[0].mxu0 %v1006
    %v1155 = vpop.f32.mrb[0].mxu0
    %v1156 = vadd.f32 %v1087, %v1155
    %v1157 = vpop.f32.mrb[0].mxu0
    %1158 = vdwg.mxu0
    %v1159 = vlaneseq
    %v1160 = vand.u32 %v1159, 127
    %vm1161 = vcmp.ge.s32.totalorder %v1160, 0
    %vm1162 = vcmp.lt.s32.totalorder %v1160, 8
    %vm1163 = vmand %vm1161, %vm1162
    %v1164 = vsel %vm1163, 1, 0
    %v1165 = vcvt.s32.f32 %v1164
    %v1166 = vmul.f32 %v986, %v1165
    %v1167 = vmul.f32 %v991, %v1165
    %v1169 = vsel %vm476, %v1166, 0
    %v1172 = vsel %vm476, %v1167, 0
    %v1175 = vsel %vm476, %v1075, 0
    %1177 = vmatprep.subr.mxu0 0.0
    %1178 = vmatpush1.xpose.msra.mxu0 %v1175
    %1179 = vmatprep.subr.mxu0 0.0
    %1180 = vmatpush1.xpose.msra.mxu0 0.0
    %1181 = vmatprep.subr.mxu0 0.0
    %1182 = vmatpush1.xpose.msra.mxu0 0.0
    %1183 = vmatprep.subr.mxu0 0.0
    %1184 = vmatpush1.xpose.msra.mxu0 0.0
    %1185 = vmatprep.subr.mxu0 0.0
    %1186 = vmatpush1.xpose.msra.mxu0 0.0
    %1187 = vmatprep.subr.mxu0 0.0
    %1188 = vmatpush1.xpose.msra.mxu0 0.0
    %1189 = vmatprep.subr.mxu0 0.0
    %1190 = vmatpush1.xpose.msra.mxu0 0.0
    %1191 = vmatprep.subr.mxu0 0.0
    %1192 = vmatpush1.xpose.msra.mxu0 0.0
    %1193 = vmatprep.subr.mxu0 0.0
    %1194 = vmatpush1.xpose.msra.mxu0 0.0
    %1195 = vmatprep.subr.mxu0 0.0
    %1196 = vmatpush1.xpose.msra.mxu0 0.0
    %1197 = vmatprep.subr.mxu0 0.0
    %1198 = vmatpush1.xpose.msra.mxu0 0.0
    %1199 = vmatprep.subr.mxu0 0.0
    %1200 = vmatpush1.xpose.msra.mxu0 0.0
    %1201 = vmatprep.subr.mxu0 0.0
    %1202 = vmatpush1.xpose.msra.mxu0 0.0
    %1203 = vmatprep.subr.mxu0 0.0
    %1204 = vmatpush1.xpose.msra.mxu0 0.0
    %1205 = vmatprep.subr.mxu0 0.0
    %1206 = vmatpush1.xpose.msra.mxu0 0.0
    %1207 = vmatprep.subr.mxu0 0.0
    %1208 = vmatpush1.xpose.msra.mxu0 0.0
    %1209 = vmatprep.subr.mxu0 0.0
    %1210 = vmatpush1.xpose.msra.mxu0 0.0
    %1211 = vmatprep.subr.mxu0 0.0
    %1212 = vmatpush1.xpose.msra.mxu0 0.0
    %1213 = vmatprep.subr.mxu0 0.0
    %1214 = vmatpush1.xpose.msra.mxu0 0.0
    %1215 = vmatprep.subr.mxu0 0.0
    %1216 = vmatpush1.xpose.msra.mxu0 0.0
    %1217 = vmatprep.subr.mxu0 0.0
    %1218 = vmatpush1.xpose.msra.mxu0 0.0
    %1219 = vmatprep.subr.mxu0 0.0
    %1220 = vmatpush1.xpose.msra.mxu0 0.0
    %1221 = vmatprep.subr.mxu0 0.0
    %1222 = vmatpush1.xpose.msra.mxu0 0.0
    %1223 = vmatprep.subr.mxu0 0.0
    %1224 = vmatpush1.xpose.msra.mxu0 0.0
    %1225 = vmatprep.subr.mxu0 0.0
    %1226 = vmatpush1.xpose.msra.mxu0 0.0
    %1227 = vmatprep.subr.mxu0 0.0
    %1228 = vmatpush1.xpose.msra.mxu0 0.0
    %1229 = vmatprep.subr.mxu0 0.0
    %1230 = vmatpush1.xpose.msra.mxu0 0.0
    %1231 = vmatprep.subr.mxu0 0.0
    %1232 = vmatpush1.xpose.msra.mxu0 0.0
    %1233 = vmatprep.subr.mxu0 0.0
    %1234 = vmatpush1.xpose.msra.mxu0 0.0
    %1235 = vmatprep.subr.mxu0 0.0
    %1236 = vmatpush1.xpose.msra.mxu0 0.0
    %1237 = vmatprep.subr.mxu0 0.0
    %1238 = vmatpush1.xpose.msra.mxu0 0.0
    %1239 = vmatprep.subr.mxu0 0.0
    %1240 = vmatpush1.xpose.msra.mxu0 0.0
    %1241 = vmatprep.mubr.f32.mxu0 0.0
    %1242 = vmatmul.mubr.f32.gmra.mrb[0].mxu0 %v1169
    %v1243 = vpop.f32.mrb[0].mxu0
    %v1244 = vadd.f32 0.0, %v1243
    %v1245 = vpop.f32.mrb[0].mxu0
    %1246 = vmatprep.mubr.f32.mxu0 0.0
    %1247 = vmatmul.mubr.f32.gmra.mrb[0].mxu0 %v1172
    %v1248 = vpop.f32.mrb[0].mxu0
    %v1249 = vadd.f32 0.0, %v1248
    %v1250 = vpop.f32.mrb[0].mxu0
    %1251 = vdwg.mxu0
    %v1252 = vmul.f32 %v1244, 0.35355338
    %v1253 = vmul.f32 %v1249, 0.35355338
    %vm1254 = vcmask 64512
    %v1255 = vsel %vm1254, %v1252, -inf
    %1256 = vmax.xlane.f32.xlu0 %v1255
    %v1257 = vpop.xlane.xlu0 %1256
    %v1258 = vsel %vm1254, %v1253, -inf
    %1259 = vmax.xlane.f32.xlu0 %v1258
    %v1260 = vpop.xlane.xlu0 %1259
    %v1261 = vsub.f32 %v1252, %v1257
    %v1262 = vsub.f32 %v1253, %v1260
    %v1263 = vmul.f32 %v1261, 1.442695
    %v1264 = vpow.pop %v1263
    %v1265 = vmul.f32 %v1262, 1.442695
    %v1266 = vpow.pop %v1265
    %v1267 = vsel %vm1254, %v1264, 0.0
    %1268 = vadd.xlane.f32.xlu0 %v1267
    %v1269 = vpop.xlane.xlu0 %1268
    %v1270 = vsel %vm1254, %v1266, 0.0
    %1271 = vadd.xlane.f32.xlu0 %v1270
    %v1272 = vpop.xlane.xlu0 %1271
    %v1273 = vrcp.pop %v1269
    %v1274 = vrcp.pop %v1272
    %v1275 = vmul.f32 %v1264, %v1273
    %v1276 = vmul.f32 %v1266, %v1274
    %v1277 = vadd.f32 %v1275, 0.0
    %v1278 = vadd.f32 %v1276, 0.0
    %v1279 = vmul.f32 %v1156, %v1165
    %vm1280 = vcmp.ge.s32.totalorder %v1160, 8
    %vm1281 = vcmp.lt.s32.totalorder %v1160, 16
    %vm1282 = vmand %vm1280, %vm1281
    %v1283 = vsel %vm1282, 1, 0
    %v1284 = vcvt.s32.f32 %v1283
    %v1285 = vmul.f32 %v986, %v1284
    %v1286 = vmul.f32 %v991, %v1284
    %v1288 = vsel %vm476, %v1285, 0
    %v1291 = vsel %vm476, %v1286, 0
    %1293 = vmatprep.subr.mxu0 0.0
    %1294 = vmatpush1.xpose.msra.mxu0 %v1175
    %1295 = vmatprep.subr.mxu0 0.0
    %1296 = vmatpush1.xpose.msra.mxu0 0.0
    %1297 = vmatprep.subr.mxu0 0.0
    %1298 = vmatpush1.xpose.msra.mxu0 0.0
    %1299 = vmatprep.subr.mxu0 0.0
    %1300 = vmatpush1.xpose.msra.mxu0 0.0
    %1301 = vmatprep.subr.mxu0 0.0
    %1302 = vmatpush1.xpose.msra.mxu0 0.0
    %1303 = vmatprep.subr.mxu0 0.0
    %1304 = vmatpush1.xpose.msra.mxu0 0.0
    %1305 = vmatprep.subr.mxu0 0.0
    %1306 = vmatpush1.xpose.msra.mxu0 0.0
    %1307 = vmatprep.subr.mxu0 0.0
    %1308 = vmatpush1.xpose.msra.mxu0 0.0
    %1309 = vmatprep.subr.mxu0 0.0
    %1310 = vmatpush1.xpose.msra.mxu0 0.0
    %1311 = vmatprep.subr.mxu0 0.0
    %1312 = vmatpush1.xpose.msra.mxu0 0.0
    %1313 = vmatprep.subr.mxu0 0.0
    %1314 = vmatpush1.xpose.msra.mxu0 0.0
    %1315 = vmatprep.subr.mxu0 0.0
    %1316 = vmatpush1.xpose.msra.mxu0 0.0
    %1317 = vmatprep.subr.mxu0 0.0
    %1318 = vmatpush1.xpose.msra.mxu0 0.0
    %1319 = vmatprep.subr.mxu0 0.0
    %1320 = vmatpush1.xpose.msra.mxu0 0.0
    %1321 = vmatprep.subr.mxu0 0.0
    %1322 = vmatpush1.xpose.msra.mxu0 0.0
    %1323 = vmatprep.subr.mxu0 0.0
    %1324 = vmatpush1.xpose.msra.mxu0 0.0
    %1325 = vmatprep.subr.mxu0 0.0
    %1326 = vmatpush1.xpose.msra.mxu0 0.0
    %1327 = vmatprep.subr.mxu0 0.0
    %1328 = vmatpush1.xpose.msra.mxu0 0.0
    %1329 = vmatprep.subr.mxu0 0.0
    %1330 = vmatpush1.xpose.msra.mxu0 0.0
    %1331 = vmatprep.subr.mxu0 0.0
    %1332 = vmatpush1.xpose.msra.mxu0 0.0
    %1333 = vmatprep.subr.mxu0 0.0
    %1334 = vmatpush1.xpose.msra.mxu0 0.0
    %1335 = vmatprep.subr.mxu0 0.0
    %1336 = vmatpush1.xpose.msra.mxu0 0.0
    %1337 = vmatprep.subr.mxu0 0.0
    %1338 = vmatpush1.xpose.msra.mxu0 0.0
    %1339 = vmatprep.subr.mxu0 0.0
    %1340 = vmatpush1.xpose.msra.mxu0 0.0
    %1341 = vmatprep.subr.mxu0 0.0
    %1342 = vmatpush1.xpose.msra.mxu0 0.0
    %1343 = vmatprep.subr.mxu0 0.0
    %1344 = vmatpush1.xpose.msra.mxu0 0.0
    %1345 = vmatprep.subr.mxu0 0.0
    %1346 = vmatpush1.xpose.msra.mxu0 0.0
    %1347 = vmatprep.subr.mxu0 0.0
    %1348 = vmatpush1.xpose.msra.mxu0 0.0
    %1349 = vmatprep.subr.mxu0 0.0
    %1350 = vmatpush1.xpose.msra.mxu0 0.0
    %1351 = vmatprep.subr.mxu0 0.0
    %1352 = vmatpush1.xpose.msra.mxu0 0.0
    %1353 = vmatprep.subr.mxu0 0.0
    %1354 = vmatpush1.xpose.msra.mxu0 0.0
    %1355 = vmatprep.subr.mxu0 0.0
    %1356 = vmatpush1.xpose.msra.mxu0 0.0
    %1357 = vmatprep.mubr.f32.mxu0 0.0
    %1358 = vmatmul.mubr.f32.gmra.mrb[0].mxu0 %v1288
    %v1359 = vpop.f32.mrb[0].mxu0
    %v1360 = vadd.f32 0.0, %v1359
    %v1361 = vpop.f32.mrb[0].mxu0
    %1362 = vmatprep.mubr.f32.mxu0 0.0
    %1363 = vmatmul.mubr.f32.gmra.mrb[0].mxu0 %v1291
    %v1364 = vpop.f32.mrb[0].mxu0
    %v1365 = vadd.f32 0.0, %v1364
    %v1366 = vpop.f32.mrb[0].mxu0
    %1367 = vdwg.mxu0
    %v1368 = vmul.f32 %v1360, 0.35355338
    %v1369 = vmul.f32 %v1365, 0.35355338
    %v1370 = vsel %vm1254, %v1368, -inf
    %1371 = vmax.xlane.f32.xlu0 %v1370
    %v1372 = vpop.xlane.xlu0 %1371
    %v1373 = vsel %vm1254, %v1369, -inf
    %1374 = vmax.xlane.f32.xlu0 %v1373
    %v1375 = vpop.xlane.xlu0 %1374
    %v1376 = vsub.f32 %v1368, %v1372
    %v1377 = vsub.f32 %v1369, %v1375
    %v1378 = vmul.f32 %v1376, 1.442695
    %v1379 = vpow.pop %v1378
    %v1380 = vmul.f32 %v1377, 1.442695
    %v1381 = vpow.pop %v1380
    %v1382 = vsel %vm1254, %v1379, 0.0
    %1383 = vadd.xlane.f32.xlu0 %v1382
    %v1384 = vpop.xlane.xlu0 %1383
    %v1385 = vsel %vm1254, %v1381, 0.0
    %1386 = vadd.xlane.f32.xlu0 %v1385
    %v1387 = vpop.xlane.xlu0 %1386
    %v1388 = vrcp.pop %v1384
    %v1389 = vrcp.pop %v1387
    %v1390 = vmul.f32 %v1379, %v1388
    %v1391 = vmul.f32 %v1381, %v1389
    %v1392 = vadd.f32 %v1277, %v1390
    %v1393 = vadd.f32 %v1278, %v1391
    %v1394 = vmul.f32 %v1156, %v1284
    %v1396 = vsel %vm1254, %v1390, 0
    %v1399 = vsel %vm1254, %v1391, 0
    %1401 = vmatprep.subr.mxu0 0.0
    %1402 = vmatpush1.msra.mxu0 %v1394
    %1403 = vmatprep.subr.mxu0 0.0
    %1404 = vmatpush1.msra.mxu0 0.0
    %1405 = vmatprep.subr.mxu0 0.0
    %1406 = vmatpush1.msra.mxu0 0.0
    %1407 = vmatprep.subr.mxu0 0.0
    %1408 = vmatpush1.msra.mxu0 0.0
    %1409 = vmatprep.subr.mxu0 0.0
    %1410 = vmatpush1.msra.mxu0 0.0
    %1411 = vmatprep.subr.mxu0 0.0
    %1412 = vmatpush1.msra.mxu0 0.0
    %1413 = vmatprep.subr.mxu0 0.0
    %1414 = vmatpush1.msra.mxu0 0.0
    %1415 = vmatprep.subr.mxu0 0.0
    %1416 = vmatpush1.msra.mxu0 0.0
    %1417 = vmatprep.subr.mxu0 0.0
    %1418 = vmatpush1.msra.mxu0 0.0
    %1419 = vmatprep.subr.mxu0 0.0
    %1420 = vmatpush1.msra.mxu0 0.0
    %1421 = vmatprep.subr.mxu0 0.0
    %1422 = vmatpush1.msra.mxu0 0.0
    %1423 = vmatprep.subr.mxu0 0.0
    %1424 = vmatpush1.msra.mxu0 0.0
    %1425 = vmatprep.subr.mxu0 0.0
    %1426 = vmatpush1.msra.mxu0 0.0
    %1427 = vmatprep.subr.mxu0 0.0
    %1428 = vmatpush1.msra.mxu0 0.0
    %1429 = vmatprep.subr.mxu0 0.0
    %1430 = vmatpush1.msra.mxu0 0.0
    %1431 = vmatprep.subr.mxu0 0.0
    %1432 = vmatpush1.msra.mxu0 0.0
    %1433 = vmatprep.subr.mxu0 0.0
    %1434 = vmatpush1.msra.mxu0 0.0
    %1435 = vmatprep.subr.mxu0 0.0
    %1436 = vmatpush1.msra.mxu0 0.0
    %1437 = vmatprep.subr.mxu0 0.0
    %1438 = vmatpush1.msra.mxu0 0.0
    %1439 = vmatprep.subr.mxu0 0.0
    %1440 = vmatpush1.msra.mxu0 0.0
    %1441 = vmatprep.subr.mxu0 0.0
    %1442 = vmatpush1.msra.mxu0 0.0
    %1443 = vmatprep.subr.mxu0 0.0
    %1444 = vmatpush1.msra.mxu0 0.0
    %1445 = vmatprep.subr.mxu0 0.0
    %1446 = vmatpush1.msra.mxu0 0.0
    %1447 = vmatprep.subr.mxu0 0.0
    %1448 = vmatpush1.msra.mxu0 0.0
    %1449 = vmatprep.subr.mxu0 0.0
    %1450 = vmatpush1.msra.mxu0 0.0
    %1451 = vmatprep.subr.mxu0 0.0
    %1452 = vmatpush1.msra.mxu0 0.0
    %1453 = vmatprep.subr.mxu0 0.0
    %1454 = vmatpush1.msra.mxu0 0.0
    %1455 = vmatprep.subr.mxu0 0.0
    %1456 = vmatpush1.msra.mxu0 0.0
    %1457 = vmatprep.subr.mxu0 0.0
    %1458 = vmatpush1.msra.mxu0 0.0
    %1459 = vmatprep.subr.mxu0 0.0
    %1460 = vmatpush1.msra.mxu0 0.0
    %1461 = vmatprep.subr.mxu0 0.0
    %1462 = vmatpush1.msra.mxu0 0.0
    %1463 = vmatprep.subr.mxu0 0.0
    %1464 = vmatpush1.msra.mxu0 0.0
    %1465 = vmatprep.mubr.f32.mxu0 0.0
    %1466 = vmatmul.mubr.f32.gmra.mrb[0].mxu0 %v1396
    %v1467 = vpop.f32.mrb[0].mxu0
    %v1468 = vadd.f32 0.0, %v1467
    %v1469 = vpop.f32.mrb[0].mxu0
    %1470 = vmatprep.mubr.f32.mxu0 0.0
    %1471 = vmatmul.mubr.f32.gmra.mrb[0].mxu0 %v1399
    %v1472 = vpop.f32.mrb[0].mxu0
    %v1473 = vadd.f32 0.0, %v1472
    %v1474 = vpop.f32.mrb[0].mxu0
    %1475 = vdwg.mxu0
    %v1477 = vsel %vm1254, %v1275, 0
    %v1480 = vsel %vm1254, %v1276, 0
    %1482 = vmatprep.subr.mxu0 0.0
    %1483 = vmatpush1.msra.mxu0 %v1279
    %1484 = vmatprep.subr.mxu0 0.0
    %1485 = vmatpush1.msra.mxu0 0.0
    %1486 = vmatprep.subr.mxu0 0.0
    %1487 = vmatpush1.msra.mxu0 0.0
    %1488 = vmatprep.subr.mxu0 0.0
    %1489 = vmatpush1.msra.mxu0 0.0
    %1490 = vmatprep.subr.mxu0 0.0
    %1491 = vmatpush1.msra.mxu0 0.0
    %1492 = vmatprep.subr.mxu0 0.0
    %1493 = vmatpush1.msra.mxu0 0.0
    %1494 = vmatprep.subr.mxu0 0.0
    %1495 = vmatpush1.msra.mxu0 0.0
    %1496 = vmatprep.subr.mxu0 0.0
    %1497 = vmatpush1.msra.mxu0 0.0
    %1498 = vmatprep.subr.mxu0 0.0
    %1499 = vmatpush1.msra.mxu0 0.0
    %1500 = vmatprep.subr.mxu0 0.0
    %1501 = vmatpush1.msra.mxu0 0.0
    %1502 = vmatprep.subr.mxu0 0.0
    %1503 = vmatpush1.msra.mxu0 0.0
    %1504 = vmatprep.subr.mxu0 0.0
    %1505 = vmatpush1.msra.mxu0 0.0
    %1506 = vmatprep.subr.mxu0 0.0
    %1507 = vmatpush1.msra.mxu0 0.0
    %1508 = vmatprep.subr.mxu0 0.0
    %1509 = vmatpush1.msra.mxu0 0.0
    %1510 = vmatprep.subr.mxu0 0.0
    %1511 = vmatpush1.msra.mxu0 0.0
    %1512 = vmatprep.subr.mxu0 0.0
    %1513 = vmatpush1.msra.mxu0 0.0
    %1514 = vmatprep.subr.mxu0 0.0
    %1515 = vmatpush1.msra.mxu0 0.0
    %1516 = vmatprep.subr.mxu0 0.0
    %1517 = vmatpush1.msra.mxu0 0.0
    %1518 = vmatprep.subr.mxu0 0.0
    %1519 = vmatpush1.msra.mxu0 0.0
    %1520 = vmatprep.subr.mxu0 0.0
    %1521 = vmatpush1.msra.mxu0 0.0
    %1522 = vmatprep.subr.mxu0 0.0
    %1523 = vmatpush1.msra.mxu0 0.0
    %1524 = vmatprep.subr.mxu0 0.0
    %1525 = vmatpush1.msra.mxu0 0.0
    %1526 = vmatprep.subr.mxu0 0.0
    %1527 = vmatpush1.msra.mxu0 0.0
    %1528 = vmatprep.subr.mxu0 0.0
    %1529 = vmatpush1.msra.mxu0 0.0
    %1530 = vmatprep.subr.mxu0 0.0
    %1531 = vmatpush1.msra.mxu0 0.0
    %1532 = vmatprep.subr.mxu0 0.0
    %1533 = vmatpush1.msra.mxu0 0.0
    %1534 = vmatprep.subr.mxu0 0.0
    %1535 = vmatpush1.msra.mxu0 0.0
    %1536 = vmatprep.subr.mxu0 0.0
    %1537 = vmatpush1.msra.mxu0 0.0
    %1538 = vmatprep.subr.mxu0 0.0
    %1539 = vmatpush1.msra.mxu0 0.0
    %1540 = vmatprep.subr.mxu0 0.0
    %1541 = vmatpush1.msra.mxu0 0.0
    %1542 = vmatprep.subr.mxu0 0.0
    %1543 = vmatpush1.msra.mxu0 0.0
    %1544 = vmatprep.subr.mxu0 0.0
    %1545 = vmatpush1.msra.mxu0 0.0
    %1546 = vmatprep.mubr.f32.mxu0 0.0
    %1547 = vmatmul.mubr.f32.gmra.mrb[0].mxu0 %v1477
    %v1548 = vpop.f32.mrb[0].mxu0
    %v1549 = vadd.f32 %v1468, %v1548
    %v1550 = vpop.f32.mrb[0].mxu0
    %1551 = vmatprep.mubr.f32.mxu0 0.0
    %1552 = vmatmul.mubr.f32.gmra.mrb[0].mxu0 %v1480
    %v1553 = vpop.f32.mrb[0].mxu0
    %v1554 = vadd.f32 %v1473, %v1553
    %v1555 = vpop.f32.mrb[0].mxu0
    %1556 = vdwg.mxu0
    %vm1557 = vcmp.ge.s32.totalorder %v1160, 16
    %vm1558 = vcmp.lt.s32.totalorder %v1160, 24
    %vm1559 = vmand %vm1557, %vm1558
    %v1560 = vsel %vm1559, 1, 0
    %v1561 = vcvt.s32.f32 %v1560
    %v1562 = vmul.f32 %v986, %v1561
    %v1563 = vmul.f32 %v991, %v1561
    %v1565 = vsel %vm476, %v1562, 0
    %v1568 = vsel %vm476, %v1563, 0
    %1570 = vmatprep.subr.mxu0 0.0
    %1571 = vmatpush1.xpose.msra.mxu0 %v1175
    %1572 = vmatprep.subr.mxu0 0.0
    %1573 = vmatpush1.xpose.msra.mxu0 0.0
    %1574 = vmatprep.subr.mxu0 0.0
    %1575 = vmatpush1.xpose.msra.mxu0 0.0
    %1576 = vmatprep.subr.mxu0 0.0
    %1577 = vmatpush1.xpose.msra.mxu0 0.0
    %1578 = vmatprep.subr.mxu0 0.0
    %1579 = vmatpush1.xpose.msra.mxu0 0.0
    %1580 = vmatprep.subr.mxu0 0.0
    %1581 = vmatpush1.xpose.msra.mxu0 0.0
    %1582 = vmatprep.subr.mxu0 0.0
    %1583 = vmatpush1.xpose.msra.mxu0 0.0
    %1584 = vmatprep.subr.mxu0 0.0
    %1585 = vmatpush1.xpose.msra.mxu0 0.0
    %1586 = vmatprep.subr.mxu0 0.0
    %1587 = vmatpush1.xpose.msra.mxu0 0.0
    %1588 = vmatprep.subr.mxu0 0.0
    %1589 = vmatpush1.xpose.msra.mxu0 0.0
    %1590 = vmatprep.subr.mxu0 0.0
    %1591 = vmatpush1.xpose.msra.mxu0 0.0
    %1592 = vmatprep.subr.mxu0 0.0
    %1593 = vmatpush1.xpose.msra.mxu0 0.0
    %1594 = vmatprep.subr.mxu0 0.0
    %1595 = vmatpush1.xpose.msra.mxu0 0.0
    %1596 = vmatprep.subr.mxu0 0.0
    %1597 = vmatpush1.xpose.msra.mxu0 0.0
    %1598 = vmatprep.subr.mxu0 0.0
    %1599 = vmatpush1.xpose.msra.mxu0 0.0
    %1600 = vmatprep.subr.mxu0 0.0
    %1601 = vmatpush1.xpose.msra.mxu0 0.0
    %1602 = vmatprep.subr.mxu0 0.0
    %1603 = vmatpush1.xpose.msra.mxu0 0.0
    %1604 = vmatprep.subr.mxu0 0.0
    %1605 = vmatpush1.xpose.msra.mxu0 0.0
    %1606 = vmatprep.subr.mxu0 0.0
    %1607 = vmatpush1.xpose.msra.mxu0 0.0
    %1608 = vmatprep.subr.mxu0 0.0
    %1609 = vmatpush1.xpose.msra.mxu0 0.0
    %1610 = vmatprep.subr.mxu0 0.0
    %1611 = vmatpush1.xpose.msra.mxu0 0.0
    %1612 = vmatprep.subr.mxu0 0.0
    %1613 = vmatpush1.xpose.msra.mxu0 0.0
    %1614 = vmatprep.subr.mxu0 0.0
    %1615 = vmatpush1.xpose.msra.mxu0 0.0
    %1616 = vmatprep.subr.mxu0 0.0
    %1617 = vmatpush1.xpose.msra.mxu0 0.0
    %1618 = vmatprep.subr.mxu0 0.0
    %1619 = vmatpush1.xpose.msra.mxu0 0.0
    %1620 = vmatprep.subr.mxu0 0.0
    %1621 = vmatpush1.xpose.msra.mxu0 0.0
    %1622 = vmatprep.subr.mxu0 0.0
    %1623 = vmatpush1.xpose.msra.mxu0 0.0
    %1624 = vmatprep.subr.mxu0 0.0
    %1625 = vmatpush1.xpose.msra.mxu0 0.0
    %1626 = vmatprep.subr.mxu0 0.0
    %1627 = vmatpush1.xpose.msra.mxu0 0.0
    %1628 = vmatprep.subr.mxu0 0.0
    %1629 = vmatpush1.xpose.msra.mxu0 0.0
    %1630 = vmatprep.subr.mxu0 0.0
    %1631 = vmatpush1.xpose.msra.mxu0 0.0
    %1632 = vmatprep.subr.mxu0 0.0
    %1633 = vmatpush1.xpose.msra.mxu0 0.0
    %1634 = vmatprep.mubr.f32.mxu0 0.0
    %1635 = vmatmul.mubr.f32.gmra.mrb[0].mxu0 %v1565
    %v1636 = vpop.f32.mrb[0].mxu0
    %v1637 = vadd.f32 0.0, %v1636
    %v1638 = vpop.f32.mrb[0].mxu0
    %1639 = vmatprep.mubr.f32.mxu0 0.0
    %1640 = vmatmul.mubr.f32.gmra.mrb[0].mxu0 %v1568
    %v1641 = vpop.f32.mrb[0].mxu0
    %v1642 = vadd.f32 0.0, %v1641
    %v1643 = vpop.f32.mrb[0].mxu0
    %1644 = vdwg.mxu0
    %v1645 = vmul.f32 %v1637, 0.35355338
    %v1646 = vmul.f32 %v1642, 0.35355338
    %v1647 = vsel %vm1254, %v1645, -inf
    %1648 = vmax.xlane.f32.xlu0 %v1647
    %v1649 = vpop.xlane.xlu0 %1648
    %v1650 = vsel %vm1254, %v1646, -inf
    %1651 = vmax.xlane.f32.xlu0 %v1650
    %v1652 = vpop.xlane.xlu0 %1651
    %v1653 = vsub.f32 %v1645, %v1649
    %v1654 = vsub.f32 %v1646, %v1652
    %v1655 = vmul.f32 %v1653, 1.442695
    %v1656 = vpow.pop %v1655
    %v1657 = vmul.f32 %v1654, 1.442695
    %v1658 = vpow.pop %v1657
    %v1659 = vsel %vm1254, %v1656, 0.0
    %1660 = vadd.xlane.f32.xlu0 %v1659
    %v1661 = vpop.xlane.xlu0 %1660
    %v1662 = vsel %vm1254, %v1658, 0.0
    %1663 = vadd.xlane.f32.xlu0 %v1662
    %v1664 = vpop.xlane.xlu0 %1663
    %v1665 = vrcp.pop %v1661
    %v1666 = vrcp.pop %v1664
    %v1667 = vmul.f32 %v1656, %v1665
    %v1668 = vmul.f32 %v1658, %v1666
    %v1669 = vadd.f32 %v1392, %v1667
    %v1670 = vadd.f32 %v1393, %v1668
    %v1671 = vmul.f32 %v1156, %v1561
    %v1673 = vsel %vm1254, %v1667, 0
    %v1676 = vsel %vm1254, %v1668, 0
    %1678 = vmatprep.subr.mxu0 0.0
    %1679 = vmatpush1.msra.mxu0 %v1671
    %1680 = vmatprep.subr.mxu0 0.0
    %1681 = vmatpush1.msra.mxu0 0.0
    %1682 = vmatprep.subr.mxu0 0.0
    %1683 = vmatpush1.msra.mxu0 0.0
    %1684 = vmatprep.subr.mxu0 0.0
    %1685 = vmatpush1.msra.mxu0 0.0
    %1686 = vmatprep.subr.mxu0 0.0
    %1687 = vmatpush1.msra.mxu0 0.0
    %1688 = vmatprep.subr.mxu0 0.0
    %1689 = vmatpush1.msra.mxu0 0.0
    %1690 = vmatprep.subr.mxu0 0.0
    %1691 = vmatpush1.msra.mxu0 0.0
    %1692 = vmatprep.subr.mxu0 0.0
    %1693 = vmatpush1.msra.mxu0 0.0
    %1694 = vmatprep.subr.mxu0 0.0
    %1695 = vmatpush1.msra.mxu0 0.0
    %1696 = vmatprep.subr.mxu0 0.0
    %1697 = vmatpush1.msra.mxu0 0.0
    %1698 = vmatprep.subr.mxu0 0.0
    %1699 = vmatpush1.msra.mxu0 0.0
    %1700 = vmatprep.subr.mxu0 0.0
    %1701 = vmatpush1.msra.mxu0 0.0
    %1702 = vmatprep.subr.mxu0 0.0
    %1703 = vmatpush1.msra.mxu0 0.0
    %1704 = vmatprep.subr.mxu0 0.0
    %1705 = vmatpush1.msra.mxu0 0.0
    %1706 = vmatprep.subr.mxu0 0.0
    %1707 = vmatpush1.msra.mxu0 0.0
    %1708 = vmatprep.subr.mxu0 0.0
    %1709 = vmatpush1.msra.mxu0 0.0
    %1710 = vmatprep.subr.mxu0 0.0
    %1711 = vmatpush1.msra.mxu0 0.0
    %1712 = vmatprep.subr.mxu0 0.0
    %1713 = vmatpush1.msra.mxu0 0.0
    %1714 = vmatprep.subr.mxu0 0.0
    %1715 = vmatpush1.msra.mxu0 0.0
    %1716 = vmatprep.subr.mxu0 0.0
    %1717 = vmatpush1.msra.mxu0 0.0
    %1718 = vmatprep.subr.mxu0 0.0
    %1719 = vmatpush1.msra.mxu0 0.0
    %1720 = vmatprep.subr.mxu0 0.0
    %1721 = vmatpush1.msra.mxu0 0.0
    %1722 = vmatprep.subr.mxu0 0.0
    %1723 = vmatpush1.msra.mxu0 0.0
    %1724 = vmatprep.subr.mxu0 0.0
    %1725 = vmatpush1.msra.mxu0 0.0
    %1726 = vmatprep.subr.mxu0 0.0
    %1727 = vmatpush1.msra.mxu0 0.0
    %1728 = vmatprep.subr.mxu0 0.0
    %1729 = vmatpush1.msra.mxu0 0.0
    %1730 = vmatprep.subr.mxu0 0.0
    %1731 = vmatpush1.msra.mxu0 0.0
    %1732 = vmatprep.subr.mxu0 0.0
    %1733 = vmatpush1.msra.mxu0 0.0
    %1734 = vmatprep.subr.mxu0 0.0
    %1735 = vmatpush1.msra.mxu0 0.0
    %1736 = vmatprep.subr.mxu0 0.0
    %1737 = vmatpush1.msra.mxu0 0.0
    %1738 = vmatprep.subr.mxu0 0.0
    %1739 = vmatpush1.msra.mxu0 0.0
    %1740 = vmatprep.subr.mxu0 0.0
    %1741 = vmatpush1.msra.mxu0 0.0
    %1742 = vmatprep.mubr.f32.mxu0 0.0
    %1743 = vmatmul.mubr.f32.gmra.mrb[0].mxu0 %v1673
    %v1744 = vpop.f32.mrb[0].mxu0
    %v1745 = vadd.f32 0.0, %v1744
    %v1746 = vpop.f32.mrb[0].mxu0
    %1747 = vmatprep.mubr.f32.mxu0 0.0
    %1748 = vmatmul.mubr.f32.gmra.mrb[0].mxu0 %v1676
    %v1749 = vpop.f32.mrb[0].mxu0
    %v1750 = vadd.f32 0.0, %v1749
    %v1751 = vpop.f32.mrb[0].mxu0
    %1752 = vdwg.mxu0
    %v1753 = vadd.f32 %v1549, %v1745
    %v1754 = vadd.f32 %v1554, %v1750
    %vm1755 = vcmp.ge.s32.totalorder %v1160, 24
    %vm1756 = vcmp.lt.s32.totalorder %v1160, 32
    %vm1757 = vmand %vm1755, %vm1756
    %v1758 = vsel %vm1757, 1, 0
    %v1759 = vcvt.s32.f32 %v1758
    %v1760 = vmul.f32 %v986, %v1759
    %v1761 = vmul.f32 %v991, %v1759
    %v1763 = vsel %vm476, %v1760, 0
    %v1766 = vsel %vm476, %v1761, 0
    %1768 = vmatprep.subr.mxu0 0.0
    %1769 = vmatpush1.xpose.msra.mxu0 %v1175
    %1770 = vmatprep.subr.mxu0 0.0
    %1771 = vmatpush1.xpose.msra.mxu0 0.0
    %1772 = vmatprep.subr.mxu0 0.0
    %1773 = vmatpush1.xpose.msra.mxu0 0.0
    %1774 = vmatprep.subr.mxu0 0.0
    %1775 = vmatpush1.xpose.msra.mxu0 0.0
    %1776 = vmatprep.subr.mxu0 0.0
    %1777 = vmatpush1.xpose.msra.mxu0 0.0
    %1778 = vmatprep.subr.mxu0 0.0
    %1779 = vmatpush1.xpose.msra.mxu0 0.0
    %1780 = vmatprep.subr.mxu0 0.0
    %1781 = vmatpush1.xpose.msra.mxu0 0.0
    %1782 = vmatprep.subr.mxu0 0.0
    %1783 = vmatpush1.xpose.msra.mxu0 0.0
    %1784 = vmatprep.subr.mxu0 0.0
    %1785 = vmatpush1.xpose.msra.mxu0 0.0
    %1786 = vmatprep.subr.mxu0 0.0
    %1787 = vmatpush1.xpose.msra.mxu0 0.0
    %1788 = vmatprep.subr.mxu0 0.0
    %1789 = vmatpush1.xpose.msra.mxu0 0.0
    %1790 = vmatprep.subr.mxu0 0.0
    %1791 = vmatpush1.xpose.msra.mxu0 0.0
    %1792 = vmatprep.subr.mxu0 0.0
    %1793 = vmatpush1.xpose.msra.mxu0 0.0
    %1794 = vmatprep.subr.mxu0 0.0
    %1795 = vmatpush1.xpose.msra.mxu0 0.0
    %1796 = vmatprep.subr.mxu0 0.0
    %1797 = vmatpush1.xpose.msra.mxu0 0.0
    %1798 = vmatprep.subr.mxu0 0.0
    %1799 = vmatpush1.xpose.msra.mxu0 0.0
    %1800 = vmatprep.subr.mxu0 0.0
    %1801 = vmatpush1.xpose.msra.mxu0 0.0
    %1802 = vmatprep.subr.mxu0 0.0
    %1803 = vmatpush1.xpose.msra.mxu0 0.0
    %1804 = vmatprep.subr.mxu0 0.0
    %1805 = vmatpush1.xpose.msra.mxu0 0.0
    %1806 = vmatprep.subr.mxu0 0.0
    %1807 = vmatpush1.xpose.msra.mxu0 0.0
    %1808 = vmatprep.subr.mxu0 0.0
    %1809 = vmatpush1.xpose.msra.mxu0 0.0
    %1810 = vmatprep.subr.mxu0 0.0
    %1811 = vmatpush1.xpose.msra.mxu0 0.0
    %1812 = vmatprep.subr.mxu0 0.0
    %1813 = vmatpush1.xpose.msra.mxu0 0.0
    %1814 = vmatprep.subr.mxu0 0.0
    %1815 = vmatpush1.xpose.msra.mxu0 0.0
    %1816 = vmatprep.subr.mxu0 0.0
    %1817 = vmatpush1.xpose.msra.mxu0 0.0
    %1818 = vmatprep.subr.mxu0 0.0
    %1819 = vmatpush1.xpose.msra.mxu0 0.0
    %1820 = vmatprep.subr.mxu0 0.0
    %1821 = vmatpush1.xpose.msra.mxu0 0.0
    %1822 = vmatprep.subr.mxu0 0.0
    %1823 = vmatpush1.xpose.msra.mxu0 0.0
    %1824 = vmatprep.subr.mxu0 0.0
    %1825 = vmatpush1.xpose.msra.mxu0 0.0
    %1826 = vmatprep.subr.mxu0 0.0
    %1827 = vmatpush1.xpose.msra.mxu0 0.0
    %1828 = vmatprep.subr.mxu0 0.0
    %1829 = vmatpush1.xpose.msra.mxu0 0.0
    %1830 = vmatprep.subr.mxu0 0.0
    %1831 = vmatpush1.xpose.msra.mxu0 0.0
    %1832 = vmatprep.mubr.f32.mxu0 0.0
    %1833 = vmatmul.mubr.f32.gmra.mrb[0].mxu0 %v1763
    %v1834 = vpop.f32.mrb[0].mxu0
    %v1835 = vadd.f32 0.0, %v1834
    %v1836 = vpop.f32.mrb[0].mxu0
    %1837 = vmatprep.mubr.f32.mxu0 0.0
    %1838 = vmatmul.mubr.f32.gmra.mrb[0].mxu0 %v1766
    %v1839 = vpop.f32.mrb[0].mxu0
    %v1840 = vadd.f32 0.0, %v1839
    %v1841 = vpop.f32.mrb[0].mxu0
    %1842 = vdwg.mxu0
    %v1843 = vmul.f32 %v1835, 0.35355338
    %v1844 = vmul.f32 %v1840, 0.35355338
    %v1845 = vsel %vm1254, %v1843, -inf
    %1846 = vmax.xlane.f32.xlu0 %v1845
    %v1847 = vpop.xlane.xlu0 %1846
    %v1848 = vsel %vm1254, %v1844, -inf
    %1849 = vmax.xlane.f32.xlu0 %v1848
    %v1850 = vpop.xlane.xlu0 %1849
    %v1851 = vsub.f32 %v1843, %v1847
    %v1852 = vsub.f32 %v1844, %v1850
    %v1853 = vmul.f32 %v1851, 1.442695
    %v1854 = vpow.pop %v1853
    %v1855 = vmul.f32 %v1852, 1.442695
    %v1856 = vpow.pop %v1855
    %v1857 = vsel %vm1254, %v1854, 0.0
    %1858 = vadd.xlane.f32.xlu0 %v1857
    %v1859 = vpop.xlane.xlu0 %1858
    %v1860 = vsel %vm1254, %v1856, 0.0
    %1861 = vadd.xlane.f32.xlu0 %v1860
    %v1862 = vpop.xlane.xlu0 %1861
    %v1863 = vrcp.pop %v1859
    %v1864 = vrcp.pop %v1862
    %v1865 = vmul.f32 %v1854, %v1863
    %v1866 = vmul.f32 %v1856, %v1864
    %v1867 = vadd.f32 %v1669, %v1865
    %v1868 = vadd.f32 %v1670, %v1866
    %v1869 = vmul.f32 %v1156, %v1759
    %v1871 = vsel %vm1254, %v1865, 0
    %v1874 = vsel %vm1254, %v1866, 0
    %1876 = vmatprep.subr.mxu0 0.0
    %1877 = vmatpush1.msra.mxu0 %v1869
    %1878 = vmatprep.subr.mxu0 0.0
    %1879 = vmatpush1.msra.mxu0 0.0
    %1880 = vmatprep.subr.mxu0 0.0
    %1881 = vmatpush1.msra.mxu0 0.0
    %1882 = vmatprep.subr.mxu0 0.0
    %1883 = vmatpush1.msra.mxu0 0.0
    %1884 = vmatprep.subr.mxu0 0.0
    %1885 = vmatpush1.msra.mxu0 0.0
    %1886 = vmatprep.subr.mxu0 0.0
    %1887 = vmatpush1.msra.mxu0 0.0
    %1888 = vmatprep.subr.mxu0 0.0
    %1889 = vmatpush1.msra.mxu0 0.0
    %1890 = vmatprep.subr.mxu0 0.0
    %1891 = vmatpush1.msra.mxu0 0.0
    %1892 = vmatprep.subr.mxu0 0.0
    %1893 = vmatpush1.msra.mxu0 0.0
    %1894 = vmatprep.subr.mxu0 0.0
    %1895 = vmatpush1.msra.mxu0 0.0
    %1896 = vmatprep.subr.mxu0 0.0
    %1897 = vmatpush1.msra.mxu0 0.0
    %1898 = vmatprep.subr.mxu0 0.0
    %1899 = vmatpush1.msra.mxu0 0.0
    %1900 = vmatprep.subr.mxu0 0.0
    %1901 = vmatpush1.msra.mxu0 0.0
    %1902 = vmatprep.subr.mxu0 0.0
    %1903 = vmatpush1.msra.mxu0 0.0
    %1904 = vmatprep.subr.mxu0 0.0
    %1905 = vmatpush1.msra.mxu0 0.0
    %1906 = vmatprep.subr.mxu0 0.0
    %1907 = vmatpush1.msra.mxu0 0.0
    %1908 = vmatprep.subr.mxu0 0.0
    %1909 = vmatpush1.msra.mxu0 0.0
    %1910 = vmatprep.subr.mxu0 0.0
    %1911 = vmatpush1.msra.mxu0 0.0
    %1912 = vmatprep.subr.mxu0 0.0
    %1913 = vmatpush1.msra.mxu0 0.0
    %1914 = vmatprep.subr.mxu0 0.0
    %1915 = vmatpush1.msra.mxu0 0.0
    %1916 = vmatprep.subr.mxu0 0.0
    %1917 = vmatpush1.msra.mxu0 0.0
    %1918 = vmatprep.subr.mxu0 0.0
    %1919 = vmatpush1.msra.mxu0 0.0
    %1920 = vmatprep.subr.mxu0 0.0
    %1921 = vmatpush1.msra.mxu0 0.0
    %1922 = vmatprep.subr.mxu0 0.0
    %1923 = vmatpush1.msra.mxu0 0.0
    %1924 = vmatprep.subr.mxu0 0.0
    %1925 = vmatpush1.msra.mxu0 0.0
    %1926 = vmatprep.subr.mxu0 0.0
    %1927 = vmatpush1.msra.mxu0 0.0
    %1928 = vmatprep.subr.mxu0 0.0
    %1929 = vmatpush1.msra.mxu0 0.0
    %1930 = vmatprep.subr.mxu0 0.0
    %1931 = vmatpush1.msra.mxu0 0.0
    %1932 = vmatprep.subr.mxu0 0.0
    %1933 = vmatpush1.msra.mxu0 0.0
    %1934 = vmatprep.subr.mxu0 0.0
    %1935 = vmatpush1.msra.mxu0 0.0
    %1936 = vmatprep.subr.mxu0 0.0
    %1937 = vmatpush1.msra.mxu0 0.0
    %1938 = vmatprep.subr.mxu0 0.0
    %1939 = vmatpush1.msra.mxu0 0.0
    %1940 = vmatprep.mubr.f32.mxu0 0.0
    %1941 = vmatmul.mubr.f32.gmra.mrb[0].mxu0 %v1871
    %v1942 = vpop.f32.mrb[0].mxu0
    %v1943 = vadd.f32 0.0, %v1942
    %v1944 = vpop.f32.mrb[0].mxu0
    %1945 = vmatprep.mubr.f32.mxu0 0.0
    %1946 = vmatmul.mubr.f32.gmra.mrb[0].mxu0 %v1874
    %v1947 = vpop.f32.mrb[0].mxu0
    %v1948 = vadd.f32 0.0, %v1947
    %v1949 = vpop.f32.mrb[0].mxu0
    %1950 = vdwg.mxu0
    %v1951 = vadd.f32 %v1753, %v1943
    %v1952 = vadd.f32 %v1754, %v1948
    %v1953 = vld [vmem:[#allocation26] sm:$0xff]
    %v1954 = vld [vmem:[#allocation26 + $0x8] sm:$0xff]
    %v1955 = vld [vmem:[#allocation26 + $0x10] sm:$0xff]
    %v1956 = vld [vmem:[#allocation26 + $0x18] sm:$0xff]
    %v1957 = vld [vmem:[#allocation28] sm:$0x1]
    %v1959 = vlaneseq
    %v1960 = vshrl.u32 %v1959, 7
    %v1961 = vsub.s32 0, %v1960
    %v1962 = vrot.slane %v1957, %v1961
    %v1965 = vsel %vm476, %v1951, 0
    %v1968 = vsel %vm476, %v1952, 0
    %1970 = vmatprep.subr.mxu0 0.0
    %1971 = vmatpush1.msra.mxu0 %v1953
    %1972 = vmatprep.subr.mxu0 0.0
    %1973 = vmatpush1.msra.mxu0 %v1954
    %1974 = vmatprep.subr.mxu0 0.0
    %1975 = vmatpush1.msra.mxu0 %v1955
    %1976 = vmatprep.subr.mxu0 0.0
    %1977 = vmatpush1.msra.mxu0 %v1956
    %1978 = vmatprep.subr.mxu0 0.0
    %1979 = vmatpush1.msra.mxu0 0.0
    %1980 = vmatprep.subr.mxu0 0.0
    %1981 = vmatpush1.msra.mxu0 0.0
    %1982 = vmatprep.subr.mxu0 0.0
    %1983 = vmatpush1.msra.mxu0 0.0
    %1984 = vmatprep.subr.mxu0 0.0
    %1985 = vmatpush1.msra.mxu0 0.0
    %1986 = vmatprep.subr.mxu0 0.0
    %1987 = vmatpush1.msra.mxu0 0.0
    %1988 = vmatprep.subr.mxu0 0.0
    %1989 = vmatpush1.msra.mxu0 0.0
    %1990 = vmatprep.subr.mxu0 0.0
    %1991 = vmatpush1.msra.mxu0 0.0
    %1992 = vmatprep.subr.mxu0 0.0
    %1993 = vmatpush1.msra.mxu0 0.0
    %1994 = vmatprep.subr.mxu0 0.0
    %1995 = vmatpush1.msra.mxu0 0.0
    %1996 = vmatprep.subr.mxu0 0.0
    %1997 = vmatpush1.msra.mxu0 0.0
    %1998 = vmatprep.subr.mxu0 0.0
    %1999 = vmatpush1.msra.mxu0 0.0
    %2000 = vmatprep.subr.mxu0 0.0
    %2001 = vmatpush1.msra.mxu0 0.0
    %2002 = vmatprep.subr.mxu0 0.0
    %2003 = vmatpush1.msra.mxu0 0.0
    %2004 = vmatprep.subr.mxu0 0.0
    %2005 = vmatpush1.msra.mxu0 0.0
    %2006 = vmatprep.subr.mxu0 0.0
    %2007 = vmatpush1.msra.mxu0 0.0
    %2008 = vmatprep.subr.mxu0 0.0
    %2009 = vmatpush1.msra.mxu0 0.0
    %2010 = vmatprep.subr.mxu0 0.0
    %2011 = vmatpush1.msra.mxu0 0.0
    %2012 = vmatprep.subr.mxu0 0.0
    %2013 = vmatpush1.msra.mxu0 0.0
    %2014 = vmatprep.subr.mxu0 0.0
    %2015 = vmatpush1.msra.mxu0 0.0
    %2016 = vmatprep.subr.mxu0 0.0
    %2017 = vmatpush1.msra.mxu0 0.0
    %2018 = vmatprep.subr.mxu0 0.0
    %2019 = vmatpush1.msra.mxu0 0.0
    %2020 = vmatprep.subr.mxu0 0.0
    %2021 = vmatpush1.msra.mxu0 0.0
    %2022 = vmatprep.subr.mxu0 0.0
    %2023 = vmatpush1.msra.mxu0 0.0
    %2024 = vmatprep.subr.mxu0 0.0
    %2025 = vmatpush1.msra.mxu0 0.0
    %2026 = vmatprep.subr.mxu0 0.0
    %2027 = vmatpush1.msra.mxu0 0.0
    %2028 = vmatprep.subr.mxu0 0.0
    %2029 = vmatpush1.msra.mxu0 0.0
    %2030 = vmatprep.subr.mxu0 0.0
    %2031 = vmatpush1.msra.mxu0 0.0
    %2032 = vmatprep.subr.mxu0 0.0
    %2033 = vmatpush1.msra.mxu0 0.0
    %2034 = vmatprep.mubr.f32.mxu0 0.0
    %2035 = vmatmul.mubr.f32.gmra.mrb[0].mxu0 %v1965
    %v2036 = vpop.f32.mrb[0].mxu0
    %v2037 = vadd.f32 %v1962, %v2036
    %v2038 = vpop.f32.mrb[0].mxu0
    %2039 = vmatprep.mubr.f32.mxu0 0.0
    %2040 = vmatmul.mubr.f32.gmra.mrb[0].mxu0 %v1968
    %v2041 = vpop.f32.mrb[0].mxu0
    %v2042 = vadd.f32 %v1962, %v2041
    %v2043 = vpop.f32.mrb[0].mxu0
    %2044 = vdwg.mxu0
    %v2045 = vmul.f32 %v1867, 0.25
    %v2046 = vmul.f32 %v1868, 0.25
    %v2047 = vadd.f32 %v2037, %v899
    %v2048 = vadd.f32 %v2042, %v900
    %v2049 = vsel %vm476, %v2047, 0.0
    %2050 = vadd.xlane.f32.xlu0 %v2049
    %v2051 = vpop.xlane.xlu0 %2050
    %v2052 = vsel %vm476, %v2048, 0.0
    %2053 = vadd.xlane.f32.xlu0 %v2052
    %v2054 = vpop.xlane.xlu0 %2053
    %v2055 = vrcp.pop 32.0
    %v2056 = vmul.f32 %v2051, %v2055
    %v2057 = vmul.f32 %v2054, %v2055
    %v2058 = vsub.f32 %v2047, %v2056
    %v2059 = vsub.f32 %v2048, %v2057
    %v2060 = vmul.f32 %v2058, %v2058
    %v2061 = vmul.f32 %v2059, %v2059
    %v2062 = vsel %vm476, %v2060, 0.0
    %2063 = vadd.xlane.f32.xlu0 %v2062
    %v2064 = vpop.xlane.xlu0 %2063
    %v2065 = vsel %vm476, %v2061, 0.0
    %2066 = vadd.xlane.f32.xlu0 %v2065
    %v2067 = vpop.xlane.xlu0 %2066
    %v2068 = vmul.f32 %v2064, %v2055
    %v2069 = vmul.f32 %v2067, %v2055
    %v2070 = vadd.f32 %v2068, 1e-05
    %v2071 = vadd.f32 %v2069, 1e-05
    %v2072 = vrsqrt.pop %v2070
    %v2073 = vrsqrt.pop %v2071
    %v2074 = vmul.f32 %v2058, %v2072
    %v2075 = vmul.f32 %v2059, %v2073
    %v2076 = vld [vmem:[#allocation29] sm:$0x1]
    %v2078 = vlaneseq
    %v2079 = vshrl.u32 %v2078, 7
    %v2080 = vsub.s32 0, %v2079
    %v2081 = vrot.slane %v2076, %v2080
    %v2083 = vmul.f32 %v2074, %v2081
    %v2084 = vmul.f32 %v2075, %v2081
    %v2085 = vld [vmem:[#allocation31] sm:$0x1]
    %v2087 = vlaneseq
    %v2088 = vshrl.u32 %v2087, 7
    %v2089 = vsub.s32 0, %v2088
    %v2090 = vrot.slane %v2085, %v2089
    %v2092 = vadd.f32 %v2083, %v2090
    %v2093 = vadd.f32 %v2084, %v2090
    %v2094 = vmul.f32 %v2092, %v2092
    %v2095 = vmul.f32 %v2093, %v2093
    %v2096 = vsel %vm476, %v2094, 0.0
    %2097 = vadd.xlane.f32.xlu0 %v2096
    %v2098 = vpop.xlane.xlu0 %2097
    %v2099 = vsel %vm476, %v2095, 0.0
    %2100 = vadd.xlane.f32.xlu0 %v2099
    %v2101 = vpop.xlane.xlu0 %2100
    %v2102 = vrsqrt.pop %v2098
    %v2103 = vmul.f32 %v2098, %v2102
    %vm2104 = vcmp.eq.f32.partialorder %v2098, inf
    %v2105 = vsel %vm2104, %v2098, %v2103
    %vm2106 = vcmp.eq.f32.partialorder %v2098, 0.0
    %v2107 = vand.u32 %v2098, 2147483648
    %v2108 = vsel %vm2106, %v2107, %v2105
    %v2109 = vrsqrt.pop %v2101
    %v2110 = vmul.f32 %v2101, %v2109
    %vm2111 = vcmp.eq.f32.partialorder %v2101, inf
    %v2112 = vsel %vm2111, %v2101, %v2110
    %vm2113 = vcmp.eq.f32.partialorder %v2101, 0.0
    %v2114 = vand.u32 %v2101, 2147483648
    %v2115 = vsel %vm2113, %v2114, %v2112
    %v2116 = vmax.f32 %v2108, 1e-12
    %v2117 = vmax.f32 %v2115, 1e-12
    %v2118 = vrcp.pop %v2116
    %v2119 = vrcp.pop %v2117
    %v2120 = vmul.f32 %v2092, %v2118
    %v2121 = vmul.f32 %v2093, %v2119
    %v2122 = vld [vmem:[#allocation32] sm:$0xff]
    %v2123 = vld [vmem:[#allocation32 + $0x8] sm:$0xff]
    %v2124 = vld [vmem:[#allocation32 + $0x10] sm:$0xff]
    %v2125 = vld [vmem:[#allocation32 + $0x18] sm:$0xff]
    %v2127 = vsel %vm476, %v2120, 0
    %v2130 = vsel %vm476, %v2121, 0
    %2132 = vmatprep.subr.mxu0 0.0
    %2133 = vmatpush1.msra.mxu0 %v2122
    %2134 = vmatprep.subr.mxu0 0.0
    %2135 = vmatpush1.msra.mxu0 %v2123
    %2136 = vmatprep.subr.mxu0 0.0
    %2137 = vmatpush1.msra.mxu0 %v2124
    %2138 = vmatprep.subr.mxu0 0.0
    %2139 = vmatpush1.msra.mxu0 %v2125
    %2140 = vmatprep.subr.mxu0 0.0
    %2141 = vmatpush1.msra.mxu0 0.0
    %2142 = vmatprep.subr.mxu0 0.0
    %2143 = vmatpush1.msra.mxu0 0.0
    %2144 = vmatprep.subr.mxu0 0.0
    %2145 = vmatpush1.msra.mxu0 0.0
    %2146 = vmatprep.subr.mxu0 0.0
    %2147 = vmatpush1.msra.mxu0 0.0
    %2148 = vmatprep.subr.mxu0 0.0
    %2149 = vmatpush1.msra.mxu0 0.0
    %2150 = vmatprep.subr.mxu0 0.0
    %2151 = vmatpush1.msra.mxu0 0.0
    %2152 = vmatprep.subr.mxu0 0.0
    %2153 = vmatpush1.msra.mxu0 0.0
    %2154 = vmatprep.subr.mxu0 0.0
    %2155 = vmatpush1.msra.mxu0 0.0
    %2156 = vmatprep.subr.mxu0 0.0
    %2157 = vmatpush1.msra.mxu0 0.0
    %2158 = vmatprep.subr.mxu0 0.0
    %2159 = vmatpush1.msra.mxu0 0.0
    %2160 = vmatprep.subr.mxu0 0.0
    %2161 = vmatpush1.msra.mxu0 0.0
    %2162 = vmatprep.subr.mxu0 0.0
    %2163 = vmatpush1.msra.mxu0 0.0
    %2164 = vmatprep.subr.mxu0 0.0
    %2165 = vmatpush1.msra.mxu0 0.0
    %2166 = vmatprep.subr.mxu0 0.0
    %2167 = vmatpush1.msra.mxu0 0.0
    %2168 = vmatprep.subr.mxu0 0.0
    %2169 = vmatpush1.msra.mxu0 0.0
    %2170 = vmatprep.subr.mxu0 0.0
    %2171 = vmatpush1.msra.mxu0 0.0
    %2172 = vmatprep.subr.mxu0 0.0
    %2173 = vmatpush1.msra.mxu0 0.0
    %2174 = vmatprep.subr.mxu0 0.0
    %2175 = vmatpush1.msra.mxu0 0.0
    %2176 = vmatprep.subr.mxu0 0.0
    %2177 = vmatpush1.msra.mxu0 0.0
    %2178 = vmatprep.subr.mxu0 0.0
    %2179 = vmatpush1.msra.mxu0 0.0
    %2180 = vmatprep.subr.mxu0 0.0
    %2181 = vmatpush1.msra.mxu0 0.0
    %2182 = vmatprep.subr.mxu0 0.0
    %2183 = vmatpush1.msra.mxu0 0.0
    %2184 = vmatprep.subr.mxu0 0.0
    %2185 = vmatpush1.msra.mxu0 0.0
    %2186 = vmatprep.subr.mxu0 0.0
    %2187 = vmatpush1.msra.mxu0 0.0
    %2188 = vmatprep.subr.mxu0 0.0
    %2189 = vmatpush1.msra.mxu0 0.0
    %2190 = vmatprep.subr.mxu0 0.0
    %2191 = vmatpush1.msra.mxu0 0.0
    %2192 = vmatprep.subr.mxu0 0.0
    %2193 = vmatpush1.msra.mxu0 0.0
    %2194 = vmatprep.subr.mxu0 0.0
    %2195 = vmatpush1.msra.mxu0 0.0
    %2196 = vmatprep.mubr.f32.mxu0 0.0
    %2197 = vmatmul.mubr.f32.gmra.mrb[0].mxu0 %v2127
    %v2198 = vpop.f32.mrb[0].mxu0
    %v2199 = vadd.f32 0.0, %v2198
    %v2200 = vpop.f32.mrb[0].mxu0
    %2201 = vmatprep.mubr.f32.mxu0 0.0
    %2202 = vmatmul.mubr.f32.gmra.mrb[0].mxu0 %v2130
    %v2203 = vpop.f32.mrb[0].mxu0
    %v2204 = vadd.f32 0.0, %v2203
    %v2205 = vpop.f32.mrb[0].mxu0
    %2206 = vdwg.mxu0
    %v2207 = vmax.f32 %v2199, 0.0
    %v2208 = vmax.f32 %v2204, 0.0
    %v2209 = vld [vmem:[#allocation34] sm:$0xff]
    %v2210 = vld [vmem:[#allocation34 + $0x8] sm:$0xff]
    %v2211 = vld [vmem:[#allocation34 + $0x10] sm:$0xff]
    %v2212 = vld [vmem:[#allocation34 + $0x18] sm:$0xff]
    %v2213 = vld [vmem:[#allocation34 + $0x20] sm:$0xff]
    %v2214 = vld [vmem:[#allocation34 + $0x28] sm:$0xff]
    %v2215 = vld [vmem:[#allocation34 + $0x30] sm:$0xff]
    %v2216 = vld [vmem:[#allocation34 + $0x38] sm:$0xff]
    %vm2217 = vcmask 523264
    %v2219 = vsel %vm2217, %v2207, 0
    %v2222 = vsel %vm2217, %v2208, 0
    %2224 = vmatprep.subr.mxu0 0.0
    %2225 = vmatpush1.msra.mxu0 %v2209
    %2226 = vmatprep.subr.mxu0 0.0
    %2227 = vmatpush1.msra.mxu0 %v2210
    %2228 = vmatprep.subr.mxu0 0.0
    %2229 = vmatpush1.msra.mxu0 %v2211
    %2230 = vmatprep.subr.mxu0 0.0
    %2231 = vmatpush1.msra.mxu0 %v2212
    %2232 = vmatprep.subr.mxu0 0.0
    %2233 = vmatpush1.msra.mxu0 %v2213
    %2234 = vmatprep.subr.mxu0 0.0
    %2235 = vmatpush1.msra.mxu0 %v2214
    %2236 = vmatprep.subr.mxu0 0.0
    %2237 = vmatpush1.msra.mxu0 %v2215
    %2238 = vmatprep.subr.mxu0 0.0
    %2239 = vmatpush1.msra.mxu0 %v2216
    %2240 = vmatprep.subr.mxu0 0.0
    %2241 = vmatpush1.msra.mxu0 0.0
    %2242 = vmatprep.subr.mxu0 0.0
    %2243 = vmatpush1.msra.mxu0 0.0
    %2244 = vmatprep.subr.mxu0 0.0
    %2245 = vmatpush1.msra.mxu0 0.0
    %2246 = vmatprep.subr.mxu0 0.0
    %2247 = vmatpush1.msra.mxu0 0.0
    %2248 = vmatprep.subr.mxu0 0.0
    %2249 = vmatpush1.msra.mxu0 0.0
    %2250 = vmatprep.subr.mxu0 0.0
    %2251 = vmatpush1.msra.mxu0 0.0
    %2252 = vmatprep.subr.mxu0 0.0
    %2253 = vmatpush1.msra.mxu0 0.0
    %2254 = vmatprep.subr.mxu0 0.0
    %2255 = vmatpush1.msra.mxu0 0.0
    %2256 = vmatprep.subr.mxu0 0.0
    %2257 = vmatpush1.msra.mxu0 0.0
    %2258 = vmatprep.subr.mxu0 0.0
    %2259 = vmatpush1.msra.mxu0 0.0
    %2260 = vmatprep.subr.mxu0 0.0
    %2261 = vmatpush1.msra.mxu0 0.0
    %2262 = vmatprep.subr.mxu0 0.0
    %2263 = vmatpush1.msra.mxu0 0.0
    %2264 = vmatprep.subr.mxu0 0.0
    %2265 = vmatpush1.msra.mxu0 0.0
    %2266 = vmatprep.subr.mxu0 0.0
    %2267 = vmatpush1.msra.mxu0 0.0
    %2268 = vmatprep.subr.mxu0 0.0
    %2269 = vmatpush1.msra.mxu0 0.0
    %2270 = vmatprep.subr.mxu0 0.0
    %2271 = vmatpush1.msra.mxu0 0.0
    %2272 = vmatprep.subr.mxu0 0.0
    %2273 = vmatpush1.msra.mxu0 0.0
    %2274 = vmatprep.subr.mxu0 0.0
    %2275 = vmatpush1.msra.mxu0 0.0
    %2276 = vmatprep.subr.mxu0 0.0
    %2277 = vmatpush1.msra.mxu0 0.0
    %2278 = vmatprep.subr.mxu0 0.0
    %2279 = vmatpush1.msra.mxu0 0.0
    %2280 = vmatprep.subr.mxu0 0.0
    %2281 = vmatpush1.msra.mxu0 0.0
    %2282 = vmatprep.subr.mxu0 0.0
    %2283 = vmatpush1.msra.mxu0 0.0
    %2284 = vmatprep.subr.mxu0 0.0
    %2285 = vmatpush1.msra.mxu0 0.0
    %2286 = vmatprep.subr.mxu0 0.0
    %2287 = vmatpush1.msra.mxu0 0.0
    %2288 = vmatprep.mubr.f32.mxu0 0.0
    %2289 = vmatmul.mubr.f32.gmra.mrb[0].mxu0 %v2219
    %v2290 = vpop.f32.mrb[0].mxu0
    %v2291 = vadd.f32 0.0, %v2290
    %v2292 = vpop.f32.mrb[0].mxu0
    %2293 = vmatprep.mubr.f32.mxu0 0.0
    %2294 = vmatmul.mubr.f32.gmra.mrb[0].mxu0 %v2222
    %v2295 = vpop.f32.mrb[0].mxu0
    %v2296 = vadd.f32 0.0, %v2295
    %v2297 = vpop.f32.mrb[0].mxu0
    %2298 = vdwg.mxu0
    %v2299 = vxor.u32 %v2291, 2147483648
    %v2300 = vxor.u32 %v2296, 2147483648
    %v2301 = vmul.f32 %v2299, 1.442695
    %v2302 = vpow.pop %v2301
    %v2303 = vmul.f32 %v2300, 1.442695
    %v2304 = vpow.pop %v2303
    %v2305 = vadd.f32 %v2302, 1.0
    %v2306 = vadd.f32 %v2304, 1.0
    %v2307 = vrcp.pop %v2305
    %v2308 = vmul.f32 1.0, %v2307
    %v2309 = vrcp.pop %v2306
    %v2310 = vmul.f32 1.0, %v2309
    %v2311 = vld [vmem:[#allocation35] sm:$0xff]
    %v2312 = vld [vmem:[#allocation35 + $0x8] sm:$0xff]
    %v2313 = vld [vmem:[#allocation35 + $0x10] sm:$0xff]
    %v2314 = vld [vmem:[#allocation35 + $0x18] sm:$0xff]
    %v2315 = vld [vmem:[#allocation37] sm:$0xff]
    %v2317 = vsel %vm1254, %v2045, 0
    %v2320 = vsel %vm1254, %v2046, 0
    %2322 = vmatprep.subr.mxu0 0.0
    %2323 = vmatpush1.msra.mxu0 %v2315
    %2324 = vmatprep.subr.mxu0 0.0
    %2325 = vmatpush1.msra.mxu0 0.0
    %2326 = vmatprep.subr.mxu0 0.0
    %2327 = vmatpush1.msra.mxu0 0.0
    %2328 = vmatprep.subr.mxu0 0.0
    %2329 = vmatpush1.msra.mxu0 0.0
    %2330 = vmatprep.subr.mxu0 0.0
    %2331 = vmatpush1.msra.mxu0 0.0
    %2332 = vmatprep.subr.mxu0 0.0
    %2333 = vmatpush1.msra.mxu0 0.0
    %2334 = vmatprep.subr.mxu0 0.0
    %2335 = vmatpush1.msra.mxu0 0.0
    %2336 = vmatprep.subr.mxu0 0.0
    %2337 = vmatpush1.msra.mxu0 0.0
    %2338 = vmatprep.subr.mxu0 0.0
    %2339 = vmatpush1.msra.mxu0 0.0
    %2340 = vmatprep.subr.mxu0 0.0
    %2341 = vmatpush1.msra.mxu0 0.0
    %2342 = vmatprep.subr.mxu0 0.0
    %2343 = vmatpush1.msra.mxu0 0.0
    %2344 = vmatprep.subr.mxu0 0.0
    %2345 = vmatpush1.msra.mxu0 0.0
    %2346 = vmatprep.subr.mxu0 0.0
    %2347 = vmatpush1.msra.mxu0 0.0
    %2348 = vmatprep.subr.mxu0 0.0
    %2349 = vmatpush1.msra.mxu0 0.0
    %2350 = vmatprep.subr.mxu0 0.0
    %2351 = vmatpush1.msra.mxu0 0.0
    %2352 = vmatprep.subr.mxu0 0.0
    %2353 = vmatpush1.msra.mxu0 0.0
    %2354 = vmatprep.subr.mxu0 0.0
    %2355 = vmatpush1.msra.mxu0 0.0
    %2356 = vmatprep.subr.mxu0 0.0
    %2357 = vmatpush1.msra.mxu0 0.0
    %2358 = vmatprep.subr.mxu0 0.0
    %2359 = vmatpush1.msra.mxu0 0.0
    %2360 = vmatprep.subr.mxu0 0.0
    %2361 = vmatpush1.msra.mxu0 0.0
    %2362 = vmatprep.subr.mxu0 0.0
    %2363 = vmatpush1.msra.mxu0 0.0
    %2364 = vmatprep.subr.mxu0 0.0
    %2365 = vmatpush1.msra.mxu0 0.0
    %2366 = vmatprep.subr.mxu0 0.0
    %2367 = vmatpush1.msra.mxu0 0.0
    %2368 = vmatprep.subr.mxu0 0.0
    %2369 = vmatpush1.msra.mxu0 0.0
    %2370 = vmatprep.subr.mxu0 0.0
    %2371 = vmatpush1.msra.mxu0 0.0
    %2372 = vmatprep.subr.mxu0 0.0
    %2373 = vmatpush1.msra.mxu0 0.0
    %2374 = vmatprep.subr.mxu0 0.0
    %2375 = vmatpush1.msra.mxu0 0.0
    %2376 = vmatprep.subr.mxu0 0.0
    %2377 = vmatpush1.msra.mxu0 0.0
    %2378 = vmatprep.subr.mxu0 0.0
    %2379 = vmatpush1.msra.mxu0 0.0
    %2380 = vmatprep.subr.mxu0 0.0
    %2381 = vmatpush1.msra.mxu0 0.0
    %2382 = vmatprep.subr.mxu0 0.0
    %2383 = vmatpush1.msra.mxu0 0.0
    %2384 = vmatprep.subr.mxu0 0.0
    %2385 = vmatpush1.msra.mxu0 0.0
    %2386 = vmatprep.mubr.f32.mxu0 0.0
    %2387 = vmatmul.mubr.f32.gmra.mrb[0].mxu0 %v2317
    %v2388 = vpop.f32.mrb[0].mxu0
    %v2389 = vadd.f32 0.0, %v2388
    %v2390 = vpop.f32.mrb[0].mxu0
    %2391 = vmatprep.mubr.f32.mxu0 0.0
    %2392 = vmatmul.mubr.f32.gmra.mrb[0].mxu0 %v2320
    %v2393 = vpop.f32.mrb[0].mxu0
    %v2394 = vadd.f32 0.0, %v2393
    %v2395 = vpop.f32.mrb[0].mxu0
    %2396 = vdwg.mxu0
    %2397 = vmatprep.subr.mxu0 0.0
    %2398 = vmatpush1.msra.mxu0 %v2311
    %2399 = vmatprep.subr.mxu0 0.0
    %2400 = vmatpush1.msra.mxu0 %v2312
    %2401 = vmatprep.subr.mxu0 0.0
    %2402 = vmatpush1.msra.mxu0 %v2313
    %2403 = vmatprep.subr.mxu0 0.0
    %2404 = vmatpush1.msra.mxu0 %v2314
    %2405 = vmatprep.subr.mxu0 0.0
    %2406 = vmatpush1.msra.mxu0 0.0
    %2407 = vmatprep.subr.mxu0 0.0
    %2408 = vmatpush1.msra.mxu0 0.0
    %2409 = vmatprep.subr.mxu0 0.0
    %2410 = vmatpush1.msra.mxu0 0.0
    %2411 = vmatprep.subr.mxu0 0.0
    %2412 = vmatpush1.msra.mxu0 0.0
    %2413 = vmatprep.subr.mxu0 0.0
    %2414 = vmatpush1.msra.mxu0 0.0
    %2415 = vmatprep.subr.mxu0 0.0
    %2416 = vmatpush1.msra.mxu0 0.0
    %2417 = vmatprep.subr.mxu0 0.0
    %2418 = vmatpush1.msra.mxu0 0.0
    %2419 = vmatprep.subr.mxu0 0.0
    %2420 = vmatpush1.msra.mxu0 0.0
    %2421 = vmatprep.subr.mxu0 0.0
    %2422 = vmatpush1.msra.mxu0 0.0
    %2423 = vmatprep.subr.mxu0 0.0
    %2424 = vmatpush1.msra.mxu0 0.0
    %2425 = vmatprep.subr.mxu0 0.0
    %2426 = vmatpush1.msra.mxu0 0.0
    %2427 = vmatprep.subr.mxu0 0.0
    %2428 = vmatpush1.msra.mxu0 0.0
    %2429 = vmatprep.subr.mxu0 0.0
    %2430 = vmatpush1.msra.mxu0 0.0
    %2431 = vmatprep.subr.mxu0 0.0
    %2432 = vmatpush1.msra.mxu0 0.0
    %2433 = vmatprep.subr.mxu0 0.0
    %2434 = vmatpush1.msra.mxu0 0.0
    %2435 = vmatprep.subr.mxu0 0.0
    %2436 = vmatpush1.msra.mxu0 0.0
    %2437 = vmatprep.subr.mxu0 0.0
    %2438 = vmatpush1.msra.mxu0 0.0
    %2439 = vmatprep.subr.mxu0 0.0
    %2440 = vmatpush1.msra.mxu0 0.0
    %2441 = vmatprep.subr.mxu0 0.0
    %2442 = vmatpush1.msra.mxu0 0.0
    %2443 = vmatprep.subr.mxu0 0.0
    %2444 = vmatpush1.msra.mxu0 0.0
    %2445 = vmatprep.subr.mxu0 0.0
    %2446 = vmatpush1.msra.mxu0 0.0
    %2447 = vmatprep.subr.mxu0 0.0
    %2448 = vmatpush1.msra.mxu0 0.0
    %2449 = vmatprep.subr.mxu0 0.0
    %2450 = vmatpush1.msra.mxu0 0.0
    %2451 = vmatprep.subr.mxu0 0.0
    %2452 = vmatpush1.msra.mxu0 0.0
    %2453 = vmatprep.subr.mxu0 0.0
    %2454 = vmatpush1.msra.mxu0 0.0
    %2455 = vmatprep.subr.mxu0 0.0
    %2456 = vmatpush1.msra.mxu0 0.0
    %2457 = vmatprep.subr.mxu0 0.0
    %2458 = vmatpush1.msra.mxu0 0.0
    %2459 = vmatprep.subr.mxu0 0.0
    %2460 = vmatpush1.msra.mxu0 0.0
    %2461 = vmatprep.mubr.f32.mxu0 0.0
    %2462 = vmatmul.mubr.f32.gmra.mrb[0].mxu0 %v2127
    %v2463 = vpop.f32.mrb[0].mxu0
    %v2464 = vadd.f32 %v2389, %v2463
    %v2465 = vpop.f32.mrb[0].mxu0
    %2466 = vmatprep.mubr.f32.mxu0 0.0
    %2467 = vmatmul.mubr.f32.gmra.mrb[0].mxu0 %v2130
    %v2468 = vpop.f32.mrb[0].mxu0
    %v2469 = vadd.f32 %v2394, %v2468
    %v2470 = vpop.f32.mrb[0].mxu0
    %2471 = vdwg.mxu0
    %v2472 = vld [vmem:[#allocation38] sm:$0xff]
    %v2474 = vsel %vm1254, %v2308, 0
    %v2477 = vsel %vm1254, %v2310, 0
    %2479 = vmatprep.subr.mxu0 0.0
    %2480 = vmatpush1.msra.mxu0 %v2472
    %2481 = vmatprep.subr.mxu0 0.0
    %2482 = vmatpush1.msra.mxu0 0.0
    %2483 = vmatprep.subr.mxu0 0.0
    %2484 = vmatpush1.msra.mxu0 0.0
    %2485 = vmatprep.subr.mxu0 0.0
    %2486 = vmatpush1.msra.mxu0 0.0
    %2487 = vmatprep.subr.mxu0 0.0
    %2488 = vmatpush1.msra.mxu0 0.0
    %2489 = vmatprep.subr.mxu0 0.0
    %2490 = vmatpush1.msra.mxu0 0.0
    %2491 = vmatprep.subr.mxu0 0.0
    %2492 = vmatpush1.msra.mxu0 0.0
    %2493 = vmatprep.subr.mxu0 0.0
    %2494 = vmatpush1.msra.mxu0 0.0
    %2495 = vmatprep.subr.mxu0 0.0
    %2496 = vmatpush1.msra.mxu0 0.0
    %2497 = vmatprep.subr.mxu0 0.0
    %2498 = vmatpush1.msra.mxu0 0.0
    %2499 = vmatprep.subr.mxu0 0.0
    %2500 = vmatpush1.msra.mxu0 0.0
    %2501 = vmatprep.subr.mxu0 0.0
    %2502 = vmatpush1.msra.mxu0 0.0
    %2503 = vmatprep.subr.mxu0 0.0
    %2504 = vmatpush1.msra.mxu0 0.0
    %2505 = vmatprep.subr.mxu0 0.0
    %2506 = vmatpush1.msra.mxu0 0.0
    %2507 = vmatprep.subr.mxu0 0.0
    %2508 = vmatpush1.msra.mxu0 0.0
    %2509 = vmatprep.subr.mxu0 0.0
    %2510 = vmatpush1.msra.mxu0 0.0
    %2511 = vmatprep.subr.mxu0 0.0
    %2512 = vmatpush1.msra.mxu0 0.0
    %2513 = vmatprep.subr.mxu0 0.0
    %2514 = vmatpush1.msra.mxu0 0.0
    %2515 = vmatprep.subr.mxu0 0.0
    %2516 = vmatpush1.msra.mxu0 0.0
    %2517 = vmatprep.subr.mxu0 0.0
    %2518 = vmatpush1.msra.mxu0 0.0
    %2519 = vmatprep.subr.mxu0 0.0
    %2520 = vmatpush1.msra.mxu0 0.0
    %2521 = vmatprep.subr.mxu0 0.0
    %2522 = vmatpush1.msra.mxu0 0.0
    %2523 = vmatprep.subr.mxu0 0.0
    %2524 = vmatpush1.msra.mxu0 0.0
    %2525 = vmatprep.subr.mxu0 0.0
    %2526 = vmatpush1.msra.mxu0 0.0
    %2527 = vmatprep.subr.mxu0 0.0
    %2528 = vmatpush1.msra.mxu0 0.0
    %2529 = vmatprep.subr.mxu0 0.0
    %2530 = vmatpush1.msra.mxu0 0.0
    %2531 = vmatprep.subr.mxu0 0.0
    %2532 = vmatpush1.msra.mxu0 0.0
    %2533 = vmatprep.subr.mxu0 0.0
    %2534 = vmatpush1.msra.mxu0 0.0
    %2535 = vmatprep.subr.mxu0 0.0
    %2536 = vmatpush1.msra.mxu0 0.0
    %2537 = vmatprep.subr.mxu0 0.0
    %2538 = vmatpush1.msra.mxu0 0.0
    %2539 = vmatprep.subr.mxu0 0.0
    %2540 = vmatpush1.msra.mxu0 0.0
    %2541 = vmatprep.subr.mxu0 0.0
    %2542 = vmatpush1.msra.mxu0 0.0
    %2543 = vmatprep.mubr.f32.mxu0 0.0
    %2544 = vmatmul.mubr.f32.gmra.mrb[0].mxu0 %v2474
    %v2545 = vpop.f32.mrb[0].mxu0
    %v2546 = vadd.f32 0.0, %v2545
    %v2547 = vpop.f32.mrb[0].mxu0
    %2548 = vmatprep.mubr.f32.mxu0 0.0
    %2549 = vmatmul.mubr.f32.gmra.mrb[0].mxu0 %v2477
    %v2550 = vpop.f32.mrb[0].mxu0
    %v2551 = vadd.f32 0.0, %v2550
    %v2552 = vpop.f32.mrb[0].mxu0
    %2553 = vdwg.mxu0
    %v2554 = vadd.f32 %v2464, %v2546
    %v2555 = vadd.f32 %v2469, %v2551
    %2556 = vst [vmem:[#allocation40] sm:$0xff] %v2554
    %2557 = vst [vmem:[#allocation40 + $0x8] sm:$0xff] %v2555
    // Predicated region
    $region194: #{tpu_custom_call.1} parent=1 // pred_check
      _
    $region195: #{tpu_custom_call.1} parent=1 // pred_check_branch
      %2559 = sbr.rel (0) target = $region197
    $region196: #{tpu_custom_call.1} parent=1 // pred_region
      %s2561 = ssub.s32 256, 256
      %2562 = vsyncadd [#allocation4], %s2561
      %s2563 = sshll.u32 [#allocation40], 4
      %s2564 = int_to_ptr.vmem [resolvable:$true] %s2563
      %2569 = dma.vmem_to_hbm [thread:$0]  %s2564, 256, %s24, [#allocation4], 128, 128, 8
    $region197: #{tpu_custom_call.1} parent=1 // pred_fallthru
      _
    // Predicated region
    $region198: #{tpu_custom_call.1} parent=1 // pred_check
      _
    $region199: #{tpu_custom_call.1} parent=1 // pred_check_branch
      %2571 = sbr.rel (0) target = $region201
    $region200: #{tpu_custom_call.1} parent=1 // pred_region
      %2572 = dma.done [#allocation4], 256
    $region201: #{tpu_custom_call.1} parent=1 // pred_fallthru
      _
    %2573 = vsyncpa [#allocation3], 1
    %2574 = vsyncpa [#allocation6], 1
    %2575 = vsyncpa [#allocation9], 1
    %2576 = vsyncpa [#allocation12], 1
    %2577 = vsyncpa [#allocation15], 1
    %2578 = vsyncpa [#allocation18], 1
    %2579 = vsyncpa [#allocation21], 1
    %2580 = vsyncpa [#allocation24], 1
    %2581 = vsyncpa [#allocation27], 1
    %2582 = vsyncpa [#allocation30], 1
    %2583 = vsyncpa [#allocation33], 1
    %2584 = vsyncpa [#allocation36], 1
    %2585 = vsyncpa [#allocation39], 1
    %2586 = vsyncpa [#allocation4], 1

</llo_original>
